<compile_context>
chip_gen: v6e
topology: v6e:2x2x1
jax: 0.10.0
libtpu: 0.0.40
codegen_flags: <defaults>
</compile_context>

<pallas_src>
import functools

import numpy as np
import jax
import jax.numpy as jnp
from jax.experimental import pallas as pl
from jax.experimental.pallas import tpu as pltpu

BN_EPS = 1e-5
LANE = 128


def _round_up(x, m):
    return ((x + m - 1) // m) * m


# ------------------------------ fused Pallas kernel ---------------------------

def _snn_seq_kernel(*refs, use_bn, has_bypass, has_bias, mode):
    """One timestep: conv-matmul (+bias) + BN + bypass(+BN) + membrane + spike."""
    it = iter(refs)
    p_ref = next(it)                 # (M, Kp)  bf16 im2col patches for step t
    w_ref = next(it)                 # (Kp, Cp) bf16 conv weights
    if has_bias:
        bias_ref = next(it)          # (1, Cp)  f32 conv bias
    if has_bypass:
        byp_ref = next(it)           # (M, Cp)  bypass activations for step t
    if use_bn:
        gamma_ref = next(it)         # (1, Cp)  BN gamma (beta == 0 at init)
        if has_bypass:
            bgamma_ref = next(it)    # (1, Cp)  bypass-BN gamma
    thresh_ref = next(it)            # (1, Cp)
    decay_ref = next(it)             # (1, Cp)
    spk_ref = next(it)               # (M, Cp)  per-step spike output
    v_ref = next(it)                 # (M, Cp)  membrane state (resident over T)
    s_ref = next(it)                 # (M, Cp)  spike state    (resident over T)

    @pl.when(pl.program_id(0) == 0)  # reset_state(history=False)
    def _():
        v_ref[...] = jnp.zeros_like(v_ref)
        s_ref[...] = jnp.zeros_like(s_ref)

    # conv as MXU matmul, f32 accumulation
    y = jnp.dot(p_ref[...], w_ref[...], preferred_element_type=jnp.float32)
    if has_bias:
        y = y + bias_ref[...]

    if use_bn:  # train-mode BatchNorm2d: biased batch stats over all M rows
        mu = jnp.mean(y, axis=0, keepdims=True)
        var = jnp.mean(jnp.square(y - mu), axis=0, keepdims=True)
        y = (y - mu) * jax.lax.rsqrt(var + BN_EPS) * gamma_ref[...]

    if has_bypass:
        b = byp_ref[...].astype(jnp.float32)
        if use_bn:
            mu_b = jnp.mean(b, axis=0, keepdims=True)
            var_b = jnp.mean(jnp.square(b - mu_b), axis=0, keepdims=True)
            b = (b - mu_b) * jax.lax.rsqrt(var_b + BN_EPS) * bgamma_ref[...]
        y = y + b

    v_prev = v_ref[...]
    s_prev = s_ref[...]
    decay = decay_ref[...]
    thresh = thresh_ref[...]

    if mode == 'default':
        v = v_prev * (1.0 - s_prev) * decay + y
    elif mode == 'bursting':
        v = v_prev * decay - s_prev * thresh + y
    elif mode == 'rnn':
        v = v_prev * decay + y
    else:
        raise ValueError(mode)

    if mode == 'rnn':
        s = jnp.maximum(v - thresh, 0.0)            # nn.ReLU
    else:
        s = (v - thresh > 0.0).astype(jnp.float32)  # ActFun forward (Heaviside)

    v_ref[...] = v
    s_ref[...] = s
    spk_ref[...] = s.astype(spk_ref.dtype)


def snn_layer_seq_pallas(patches, w_mat, thresh, decay, *, use_bn, mode,
                         gamma=None, bgamma=None, bias=None, bypass=None,
                         spike_dtype=jnp.bfloat16):
    """Run T fused SNN timesteps in one pallas_call (state resident in VMEM)."""
    T, M, Kp = patches.shape
    Cp = w_mat.shape[1]
    has_bypass = bypass is not None
    has_bias = bias is not None

    vec_spec = pl.BlockSpec((1, Cp), lambda t: (0, 0))
    args = [patches, w_mat]
    in_specs = [
        pl.BlockSpec((None, M, Kp), lambda t: (t, 0, 0)),   # per-step patches
        pl.BlockSpec((Kp, Cp), lambda t: (0, 0)),           # weights (resident)
    ]
    if has_bias:
        args.append(bias)
        in_specs.append(vec_spec)
    if has_bypass:
        args.append(bypass)
        in_specs.append(pl.BlockSpec((None, M, Cp), lambda t: (t, 0, 0)))
    if use_bn:
        args.append(gamma)
        in_specs.append(vec_spec)
        if has_bypass:
            args.append(bgamma)
            in_specs.append(vec_spec)
    args += [thresh, decay]
    in_specs += [vec_spec, vec_spec]

    kernel = functools.partial(_snn_seq_kernel, use_bn=use_bn,
                               has_bypass=has_bypass, has_bias=has_bias,
                               mode=mode)
    spikes, v_fin, s_fin = pl.pallas_call(
        kernel,
        grid=(T,),
        out_shape=(jax.ShapeDtypeStruct((T, M, Cp), spike_dtype),
                   jax.ShapeDtypeStruct((M, Cp), jnp.float32),
                   jax.ShapeDtypeStruct((M, Cp), jnp.float32)),
        in_specs=in_specs,
        out_specs=(pl.BlockSpec((None, M, Cp), lambda t: (t, 0, 0)),
                   pl.BlockSpec((M, Cp), lambda t: (0, 0)),      # final v
                   pl.BlockSpec((M, Cp), lambda t: (0, 0))),     # final s
        compiler_params=pltpu.CompilerParams(
            dimension_semantics=("arbitrary",)),                 # T is sequential
    )(*args)
    return spikes, v_fin, s_fin


# ------------------------------ conv-as-matmul glue ---------------------------

def _im2col(x, kh, kw, stride, pad):
    """x: (B, H, W, C) -> (B*Ho*Wo, kh*kw*C), (Ho, Wo)."""
    B, H, W, C = x.shape
    if pad:
        x = jnp.pad(x, ((0, 0), (pad, pad), (pad, pad), (0, 0)))
    Hp, Wp = H + 2 * pad, W + 2 * pad
    Ho = (Hp - kh) // stride + 1
    Wo = (Wp - kw) // stride + 1
    cols = []
    for i in range(kh):
        for j in range(kw):
            cols.append(x[:, i:i + (Ho - 1) * stride + 1:stride,
                          j:j + (Wo - 1) * stride + 1:stride, :])
    patches = jnp.stack(cols, axis=3)            # (B, Ho, Wo, kh*kw, C)
    return patches.reshape(B * Ho * Wo, kh * kw * C), (Ho, Wo)


def _prepare(params, x_seq, bypass_seq):
    """x_seq (N,Cin,H,W,T) -> bf16 patches (T,M,Kp), bf16 weights (Kp,Cp), ..."""
    N, Cin, H, W, T = x_seq.shape
    assert Cin == params['cin'], (Cin, params['cin'])
    k, stride, pad = params['k'], params['stride'], params['pad']
    cout, cp = params['cout'], params['cp']

    # fold time into the batch axis so im2col runs once for all steps
    x = jnp.transpose(x_seq, (4, 0, 2, 3, 1)).reshape(T * N, H, W, Cin)
    patches, (Ho, Wo) = _im2col(x, k, k, stride, pad)
    K = patches.shape[-1]
    Kp = _round_up(K, LANE)
    M = N * Ho * Wo
    if Kp != K:
        patches = jnp.pad(patches, ((0, 0), (0, Kp - K)))
    patches = patches.astype(jnp.bfloat16).reshape(T, M, Kp)

    w = params['w'].reshape(K, cout)
    w_mat = jnp.pad(w, ((0, Kp - K), (0, cp - cout))).astype(jnp.bfloat16)

    bypass = None
    if bypass_seq is not None:
        bypass = jnp.transpose(bypass_seq, (4, 0, 2, 3, 1)).reshape(T, M, cout)
        bypass = jnp.pad(bypass, ((0, 0), (0, 0), (0, cp - cout)))

    return patches, w_mat, bypass, (N, Ho, Wo, T)


# -------------------------------- parameters ----------------------------------

def _pad_row(v, cp):
    v = v.reshape(1, -1)
    return jnp.pad(v, ((0, 0), (0, cp - v.shape[1])))


def make_snn_layer(key, cin, cout, k, stride, pad, *, bn=True, thresh=None,
                   decay=0.0, bypass_in=False, mode='default', bias=False):
    if thresh is None:
        thresh = 0.0 if mode == 'rnn' else 0.5
    fan_out = cout * k * k                              # kaiming_normal_, fan_out
    w = jax.random.normal(key, (k, k, cin, cout), jnp.float32) * (2.0 / fan_out) ** 0.5
    cp = _round_up(cout, LANE)

    gamma = bgamma = None
    if bn:
        g = jnp.ones((cout,), jnp.float32)
        bg = jnp.ones((cout,), jnp.float32)
        if thresh:                                      # mirrors `if bn and thresh:`
            g = jnp.full((cout,), thresh / (2 ** 0.5 if bypass_in else 1.0), jnp.float32)
            bg = jnp.full((cout,), thresh / 2 ** 0.5, jnp.float32)
        gamma = _pad_row(g, cp)
        bgamma = _pad_row(bg, cp) if bypass_in else None

    b = _pad_row(jnp.zeros((cout,), jnp.float32), cp) if bias else None

    return dict(w=w, k=k, cin=cin, cout=cout, cp=cp, stride=stride, pad=pad,
                gamma=gamma, bgamma=bgamma, bias=b,
                thresh=_pad_row(jnp.full((cout,), thresh, jnp.float32), cp),
                decay=_pad_row(jnp.full((cout,), decay, jnp.float32), cp),
                use_bn=bn, mode=mode)


# ---------------------------------- forward -----------------------------------

def snn_layer_forward(params, x_seq, bypass_seq=None):
    """Full T-step SNNLayer forward. x_seq: (N,Cin,H,W,T) -> spikes (N,Cout,Ho,Wo,T)."""
    patches, w_mat, bypass, (N, Ho, Wo, T) = _prepare(params, x_seq, bypass_seq)
    spike_dtype = jnp.float32 if params['mode'] == 'rnn' else jnp.bfloat16
    spikes, v_fin, s_fin = snn_layer_seq_pallas(
        patches, w_mat, params['thresh'], params['decay'],
        use_bn=params['use_bn'], mode=params['mode'],
        gamma=params['gamma'], bgamma=params['bgamma'],
        bias=params['bias'], bypass=bypass, spike_dtype=spike_dtype)
    cout, cp = params['cout'], params['cp']
    out = spikes.reshape(T, N, Ho, Wo, cp)[..., :cout]        # drop lane padding
    out = jnp.transpose(out, (1, 4, 2, 3, 0)).astype(jnp.float32)
    return out, (v_fin, s_fin)


def snn_layer_reference(params, x_seq, bypass_seq=None):
    """Pure-JAX reference (same bf16 matmul inputs / f32 accumulation)."""
    patches, w_mat, bypass, (N, Ho, Wo, T) = _prepare(params, x_seq, bypass_seq)
    M, Cp = patches.shape[1], w_mat.shape[1]
    v = jnp.zeros((M, Cp), jnp.float32)
    s = jnp.zeros((M, Cp), jnp.float32)
    spikes = []
    for t in range(T):
        y = jnp.dot(patches[t], w_mat, preferred_element_type=jnp.float32)
        if params['bias'] is not None:
            y = y + params['bias']
        if params['use_bn']:
            mu = jnp.mean(y, 0, keepdims=True)
            var = jnp.mean(jnp.square(y - mu), 0, keepdims=True)
            y = (y - mu) * jax.lax.rsqrt(var + BN_EPS) * params['gamma']
        if bypass is not None:
            b = bypass[t].astype(jnp.float32)
            if params['use_bn']:
                mu_b = jnp.mean(b, 0, keepdims=True)
                var_b = jnp.mean(jnp.square(b - mu_b), 0, keepdims=True)
                b = (b - mu_b) * jax.lax.rsqrt(var_b + BN_EPS) * params['bgamma']
            y = y + b
        thresh, decay = params['thresh'], params['decay']
        if params['mode'] == 'default':
            v = v * (1.0 - s) * decay + y
        elif params['mode'] == 'bursting':
            v = v * decay - s * thresh + y
        else:
            v = v * decay + y
        if params['mode'] == 'rnn':
            s = jnp.maximum(v - thresh, 0.0)
        else:
            s = (v - thresh > 0.0).astype(jnp.float32)
        spikes.append(s)
    spikes = jnp.stack(spikes)
    cout, cp = params['cout'], params['cp']
    out = spikes.reshape(T, N, Ho, Wo, cp)[..., :cout]
    return jnp.transpose(out, (1, 4, 2, 3, 0)), (v, s)


# ------------------------------------ main -------------------------------------

def _check(name, got, ref, tol, max_frac=0.01):
    got = np.asarray(got, np.float32)
    ref = np.asarray(ref, np.float32)
    frac = float(np.mean(np.abs(got - ref) > tol))
    if frac > max_frac:
        raise AssertionError(f"{name}: mismatch fraction {frac:.4f} (tol={tol})")


if __name__ == "__main__":
    key = jax.random.PRNGKey(0)
    k1, k2, k3, k4 = jax.random.split(key, 4)

    N, Cin, H, W, T = 2, 4, 16, 16, 8
    C1 = 32

    # layer A: 3x3 conv SNN layer, BN, no bypass  (update_v='default')
    layer_a = make_snn_layer(k1, Cin, C1, 3, 1, 1, bn=True, decay=0.5)
    # layer B: 1x1 conv SNN layer, BN + bypass-BN (bypass_in)
    layer_b = make_snn_layer(k2, C1, C1, 1, 1, 0, bn=True, decay=0.25,
                             bypass_in=True)

    x = jax.random.normal(k3, (N, Cin, H, W, T), jnp.float32)
    bypass = jax.random.normal(k4, (N, C1, H, W, T), jnp.float32)

    @jax.jit
    def fwd(x, bypass):
        s_a, _ = snn_layer_forward(layer_a, x)
        s_b, (v_b, _) = snn_layer_forward(layer_b, s_a, bypass_seq=bypass)
        return s_a, s_b, v_b

    s_a, s_b, v_b = jax.block_until_ready(fwd(x, bypass))
    assert s_a.shape == (N, C1, H, W, T), s_a.shape
    assert s_b.shape == (N, C1, H, W, T), s_b.shape

    # correctness vs pure-JAX reference (each layer checked on identical inputs)
    @jax.jit
    def ref(x, s_a, bypass):
        ra, _ = snn_layer_reference(layer_a, x)
        rb, (rv, _) = snn_layer_reference(layer_b, s_a, bypass_seq=bypass)
        return ra, rb, rv

    ra, rb, rv = jax.block_until_ready(ref(x, s_a, bypass))
    _check("spikes_a", s_a, ra, 1e-3)
    _check("spikes_b", s_b, rb, 1e-3)
    _check("v_b", v_b, rv, 5e-2)

    print("KERNEL_OK")
</pallas_src>

<mosaic_0001>
module attributes {stable_mosaic.version = 11 : i64} {
  func.func @_snn_seq_kernel(%arg0: i32, %arg1: memref<1x512x128xbf16, #tpu.memory_space<vmem>>, %arg2: memref<128x128xbf16, #tpu.memory_space<vmem>>, %arg3: memref<1x128xf32, #tpu.memory_space<vmem>>, %arg4: memref<1x128xf32, #tpu.memory_space<vmem>>, %arg5: memref<1x128xf32, #tpu.memory_space<vmem>>, %arg6: memref<1x512x128xbf16, #tpu.memory_space<vmem>>, %arg7: memref<512x128xf32, #tpu.memory_space<vmem>>, %arg8: memref<512x128xf32, #tpu.memory_space<vmem>>) attributes {dimension_semantics = [#tpu.dimension_semantics<arbitrary>], iteration_bounds = array<i64: 8>, scalar_prefetch = 0 : i64, scratch_operands = 0 : i64, tpu.core_type = #tpu.core_type<tc>, window_params = [{transform_indices = @transform_0, window_bounds = array<i64: 1, 512, 128>}, {pipeline_mode = #tpu.pipeline_mode<synchronous>, transform_indices = @transform_1, window_bounds = array<i64: 128, 128>}, {pipeline_mode = #tpu.pipeline_mode<synchronous>, transform_indices = @transform_2, window_bounds = array<i64: 1, 128>}, {pipeline_mode = #tpu.pipeline_mode<synchronous>, transform_indices = @transform_3, window_bounds = array<i64: 1, 128>}, {pipeline_mode = #tpu.pipeline_mode<synchronous>, transform_indices = @transform_4, window_bounds = array<i64: 1, 128>}, {transform_indices = @transform_5, window_bounds = array<i64: 1, 512, 128>}, {pipeline_mode = #tpu.pipeline_mode<synchronous>, transform_indices = @transform_6, window_bounds = array<i64: 512, 128>}, {pipeline_mode = #tpu.pipeline_mode<synchronous>, transform_indices = @transform_7, window_bounds = array<i64: 512, 128>}]} {
    %c0_i32 = arith.constant 0 : i32
    %0 = arith.cmpi eq, %arg0, %c0_i32 : i32
    %1 = arith.extui %0 : i1 to i32
    %c0_i32_0 = arith.constant 0 : i32
    %2 = arith.cmpi ne, %1, %c0_i32_0 : i32
    scf.if %2 {
      %cst_29 = arith.constant 0.000000e+00 : f32
      %50 = vector.broadcast %cst_29 : f32 to vector<512x128xf32>
      %c0_30 = arith.constant 0 : index
      %c0_31 = arith.constant 0 : index
      %51 = vector.load %arg7[%c0_30, %c0_31] : memref<512x128xf32, #tpu.memory_space<vmem>>, vector<512x128xf32>
      tpu.vector_store %arg7[%c0_30, %c0_31], %50 {strides = array<i32>} : memref<512x128xf32, #tpu.memory_space<vmem>>, vector<512x128xf32>,
      %cst_32 = arith.constant 0.000000e+00 : f32
      %52 = vector.broadcast %cst_32 : f32 to vector<512x128xf32>
      %c0_33 = arith.constant 0 : index
      %c0_34 = arith.constant 0 : index
      %53 = vector.load %arg8[%c0_33, %c0_34] : memref<512x128xf32, #tpu.memory_space<vmem>>, vector<512x128xf32>
      tpu.vector_store %arg8[%c0_33, %c0_34], %52 {strides = array<i32>} : memref<512x128xf32, #tpu.memory_space<vmem>>, vector<512x128xf32>,
    } else {
    }
    %c0 = arith.constant 0 : index
    %c0_1 = arith.constant 0 : index
    %c0_2 = arith.constant 0 : index
    %3 = vector.load %arg1[%c0, %c0_1, %c0_2] : memref<1x512x128xbf16, #tpu.memory_space<vmem>>, vector<1x512x128xbf16>
    %4 = vector.shape_cast %3 : vector<1x512x128xbf16> to vector<512x128xbf16>
    %c0_3 = arith.constant 0 : index
    %c0_4 = arith.constant 0 : index
    %5 = vector.load %arg2[%c0_3, %c0_4] : memref<128x128xbf16, #tpu.memory_space<vmem>>, vector<128x128xbf16>
    %cst = arith.constant dense<0.000000e+00> : vector<512x128xf32>
    %6 = tpu.matmul %4, %5, %cst {dimension_numbers = #tpu.dot_dimension_numbers<[1], [0], [0], [1], [0, 0, 1, 1], [], []>} : vector<512x128xbf16>, vector<128x128xbf16>, vector<512x128xf32> -> vector<512x128xf32>
    %cst_5 = arith.constant dense<0.000000e+00> : vector<128xf32>
    %7 = vector.multi_reduction <add>, %6, %cst_5 [0] : vector<512x128xf32> to vector<128xf32>
    %8 = vector.shape_cast %7 : vector<128xf32> to vector<1x128xf32>
    %cst_6 = arith.constant 5.120000e+02 : f32
    %9 = vector.broadcast %cst_6 : f32 to vector<1x128xf32>
    %10 = arith.divf %8, %9 : vector<1x128xf32>
    %11 = vector.broadcast %10 : vector<1x128xf32> to vector<512x128xf32>
    %12 = arith.subf %6, %11 : vector<512x128xf32>
    %13 = arith.mulf %12, %12 : vector<512x128xf32>
    %cst_7 = arith.constant dense<0.000000e+00> : vector<128xf32>
    %14 = vector.multi_reduction <add>, %13, %cst_7 [0] : vector<512x128xf32> to vector<128xf32>
    %15 = vector.shape_cast %14 : vector<128xf32> to vector<1x128xf32>
    %cst_8 = arith.constant 5.120000e+02 : f32
    %16 = vector.broadcast %cst_8 : f32 to vector<1x128xf32>
    %17 = arith.divf %15, %16 : vector<1x128xf32>
    %18 = vector.broadcast %10 : vector<1x128xf32> to vector<512x128xf32>
    %19 = arith.subf %6, %18 : vector<512x128xf32>
    %cst_9 = arith.constant 9.99999974E-6 : f32
    %20 = vector.broadcast %cst_9 : f32 to vector<1x128xf32>
    %21 = arith.addf %17, %20 : vector<1x128xf32>
    %22 = math.rsqrt %21 : vector<1x128xf32>
    %23 = vector.broadcast %22 : vector<1x128xf32> to vector<512x128xf32>
    %24 = arith.mulf %19, %23 : vector<512x128xf32>
    %c0_10 = arith.constant 0 : index
    %c0_11 = arith.constant 0 : index
    %25 = vector.load %arg3[%c0_10, %c0_11] : memref<1x128xf32, #tpu.memory_space<vmem>>, vector<1x128xf32>
    %26 = vector.broadcast %25 : vector<1x128xf32> to vector<512x128xf32>
    %27 = arith.mulf %24, %26 : vector<512x128xf32>
    %c0_12 = arith.constant 0 : index
    %c0_13 = arith.constant 0 : index
    %28 = vector.load %arg7[%c0_12, %c0_13] : memref<512x128xf32, #tpu.memory_space<vmem>>, vector<512x128xf32>
    %c0_14 = arith.constant 0 : index
    %c0_15 = arith.constant 0 : index
    %29 = vector.load %arg8[%c0_14, %c0_15] : memref<512x128xf32, #tpu.memory_space<vmem>>, vector<512x128xf32>
    %c0_16 = arith.constant 0 : index
    %c0_17 = arith.constant 0 : index
    %30 = vector.load %arg5[%c0_16, %c0_17] : memref<1x128xf32, #tpu.memory_space<vmem>>, vector<1x128xf32>
    %c0_18 = arith.constant 0 : index
    %c0_19 = arith.constant 0 : index
    %31 = vector.load %arg4[%c0_18, %c0_19] : memref<1x128xf32, #tpu.memory_space<vmem>>, vector<1x128xf32>
    %cst_20 = arith.constant 1.000000e+00 : f32
    %32 = vector.broadcast %cst_20 : f32 to vector<512x128xf32>
    %33 = arith.subf %32, %29 : vector<512x128xf32>
    %34 = arith.mulf %28, %33 : vector<512x128xf32>
    %35 = vector.broadcast %30 : vector<1x128xf32> to vector<512x128xf32>
    %36 = arith.mulf %34, %35 : vector<512x128xf32>
    %37 = arith.addf %36, %27 : vector<512x128xf32>
    %38 = vector.broadcast %31 : vector<1x128xf32> to vector<512x128xf32>
    %39 = arith.subf %37, %38 : vector<512x128xf32>
    %cst_21 = arith.constant 0.000000e+00 : f32
    %40 = vector.broadcast %cst_21 : f32 to vector<512x128xf32>
    %41 = arith.cmpf ogt, %39, %40 : vector<512x128xf32>
    %42 = arith.extui %41 : vector<512x128xi1> to vector<512x128xi32>
    %43 = arith.sitofp %42 : vector<512x128xi32> to vector<512x128xf32>
    %c0_22 = arith.constant 0 : index
    %c0_23 = arith.constant 0 : index
    %44 = vector.load %arg7[%c0_22, %c0_23] : memref<512x128xf32, #tpu.memory_space<vmem>>, vector<512x128xf32>
    tpu.vector_store %arg7[%c0_22, %c0_23], %37 {strides = array<i32>} : memref<512x128xf32, #tpu.memory_space<vmem>>, vector<512x128xf32>,
    %c0_24 = arith.constant 0 : index
    %c0_25 = arith.constant 0 : index
    %45 = vector.load %arg8[%c0_24, %c0_25] : memref<512x128xf32, #tpu.memory_space<vmem>>, vector<512x128xf32>
    tpu.vector_store %arg8[%c0_24, %c0_25], %43 {strides = array<i32>} : memref<512x128xf32, #tpu.memory_space<vmem>>, vector<512x128xf32>,
    %46 = arith.truncf %43 : vector<512x128xf32> to vector<512x128xbf16>
    %c0_26 = arith.constant 0 : index
    %c0_27 = arith.constant 0 : index
    %c0_28 = arith.constant 0 : index
    %47 = vector.load %arg6[%c0_26, %c0_27, %c0_28] : memref<1x512x128xbf16, #tpu.memory_space<vmem>>, vector<1x512x128xbf16>
    %48 = vector.shape_cast %47 : vector<1x512x128xbf16> to vector<512x128xbf16>
    %49 = vector.shape_cast %46 : vector<512x128xbf16> to vector<1x512x128xbf16>
    tpu.vector_store %arg6[%c0_26, %c0_27, %c0_28], %49 {strides = array<i32>} : memref<1x512x128xbf16, #tpu.memory_space<vmem>>, vector<1x512x128xbf16>,
    return
  }
  func.func @transform_0(%arg0: i32) -> (i32, i32, i32) {
    %c0_i32 = arith.constant 0 : i32
    %c0_i32_0 = arith.constant 0 : i32
    %c0_i32_1 = arith.constant 0 : i32
    return %arg0, %c0_i32, %c0_i32_0 : i32, i32, i32
  }
  func.func @transform_1(%arg0: i32) -> (i32, i32) {
    %c0_i32 = arith.constant 0 : i32
    %c0_i32_0 = arith.constant 0 : i32
    %c0_i32_1 = arith.constant 0 : i32
    return %c0_i32, %c0_i32_0 : i32, i32
  }
  func.func @transform_2(%arg0: i32) -> (i32, i32) {
    %c0_i32 = arith.constant 0 : i32
    %c0_i32_0 = arith.constant 0 : i32
    %c0_i32_1 = arith.constant 0 : i32
    return %c0_i32, %c0_i32_0 : i32, i32
  }
  func.func @transform_3(%arg0: i32) -> (i32, i32) {
    %c0_i32 = arith.constant 0 : i32
    %c0_i32_0 = arith.constant 0 : i32
    %c0_i32_1 = arith.constant 0 : i32
    return %c0_i32, %c0_i32_0 : i32, i32
  }
  func.func @transform_4(%arg0: i32) -> (i32, i32) {
    %c0_i32 = arith.constant 0 : i32
    %c0_i32_0 = arith.constant 0 : i32
    %c0_i32_1 = arith.constant 0 : i32
    return %c0_i32, %c0_i32_0 : i32, i32
  }
  func.func @transform_5(%arg0: i32) -> (i32, i32, i32) {
    %c0_i32 = arith.constant 0 : i32
    %c0_i32_0 = arith.constant 0 : i32
    %c0_i32_1 = arith.constant 0 : i32
    return %arg0, %c0_i32, %c0_i32_0 : i32, i32, i32
  }
  func.func @transform_6(%arg0: i32) -> (i32, i32) {
    %c0_i32 = arith.constant 0 : i32
    %c0_i32_0 = arith.constant 0 : i32
    %c0_i32_1 = arith.constant 0 : i32
    return %c0_i32, %c0_i32_0 : i32, i32
  }
  func.func @transform_7(%arg0: i32) -> (i32, i32) {
    %c0_i32 = arith.constant 0 : i32
    %c0_i32_0 = arith.constant 0 : i32
    %c0_i32_1 = arith.constant 0 : i32
    return %c0_i32, %c0_i32_0 : i32, i32
  }
}

module attributes {stable_mosaic.version = 11 : i64} {
  func.func @_snn_seq_kernel(%arg0: i32, %arg1: memref<1x512x128xbf16, #tpu.memory_space<vmem>>, %arg2: memref<128x128xbf16, #tpu.memory_space<vmem>>, %arg3: memref<1x512x128xf32, #tpu.memory_space<vmem>>, %arg4: memref<1x128xf32, #tpu.memory_space<vmem>>, %arg5: memref<1x128xf32, #tpu.memory_space<vmem>>, %arg6: memref<1x128xf32, #tpu.memory_space<vmem>>, %arg7: memref<1x128xf32, #tpu.memory_space<vmem>>, %arg8: memref<1x512x128xbf16, #tpu.memory_space<vmem>>, %arg9: memref<512x128xf32, #tpu.memory_space<vmem>>, %arg10: memref<512x128xf32, #tpu.memory_space<vmem>>) attributes {dimension_semantics = [#tpu.dimension_semantics<arbitrary>], iteration_bounds = array<i64: 8>, scalar_prefetch = 0 : i64, scratch_operands = 0 : i64, tpu.core_type = #tpu.core_type<tc>, window_params = [{transform_indices = @transform_0, window_bounds = array<i64: 1, 512, 128>}, {pipeline_mode = #tpu.pipeline_mode<synchronous>, transform_indices = @transform_1, window_bounds = array<i64: 128, 128>}, {transform_indices = @transform_2, window_bounds = array<i64: 1, 512, 128>}, {pipeline_mode = #tpu.pipeline_mode<synchronous>, transform_indices = @transform_3, window_bounds = array<i64: 1, 128>}, {pipeline_mode = #tpu.pipeline_mode<synchronous>, transform_indices = @transform_4, window_bounds = array<i64: 1, 128>}, {pipeline_mode = #tpu.pipeline_mode<synchronous>, transform_indices = @transform_5, window_bounds = array<i64: 1, 128>}, {pipeline_mode = #tpu.pipeline_mode<synchronous>, transform_indices = @transform_6, window_bounds = array<i64: 1, 128>}, {transform_indices = @transform_7, window_bounds = array<i64: 1, 512, 128>}, {pipeline_mode = #tpu.pipeline_mode<synchronous>, transform_indices = @transform_8, window_bounds = array<i64: 512, 128>}, {pipeline_mode = #tpu.pipeline_mode<synchronous>, transform_indices = @transform_9, window_bounds = array<i64: 512, 128>}]} {
    %c0_i32 = arith.constant 0 : i32
    %0 = arith.cmpi eq, %arg0, %c0_i32 : i32
    %1 = arith.extui %0 : i1 to i32
    %c0_i32_0 = arith.constant 0 : i32
    %2 = arith.cmpi ne, %1, %c0_i32_0 : i32
    scf.if %2 {
      %cst_39 = arith.constant 0.000000e+00 : f32
      %74 = vector.broadcast %cst_39 : f32 to vector<512x128xf32>
      %c0_40 = arith.constant 0 : index
      %c0_41 = arith.constant 0 : index
      %75 = vector.load %arg9[%c0_40, %c0_41] : memref<512x128xf32, #tpu.memory_space<vmem>>, vector<512x128xf32>
      tpu.vector_store %arg9[%c0_40, %c0_41], %74 {strides = array<i32>} : memref<512x128xf32, #tpu.memory_space<vmem>>, vector<512x128xf32>,
      %cst_42 = arith.constant 0.000000e+00 : f32
      %76 = vector.broadcast %cst_42 : f32 to vector<512x128xf32>
      %c0_43 = arith.constant 0 : index
      %c0_44 = arith.constant 0 : index
      %77 = vector.load %arg10[%c0_43, %c0_44] : memref<512x128xf32, #tpu.memory_space<vmem>>, vector<512x128xf32>
      tpu.vector_store %arg10[%c0_43, %c0_44], %76 {strides = array<i32>} : memref<512x128xf32, #tpu.memory_space<vmem>>, vector<512x128xf32>,
    } else {
    }
    %c0 = arith.constant 0 : index
    %c0_1 = arith.constant 0 : index
    %c0_2 = arith.constant 0 : index
    %3 = vector.load %arg1[%c0, %c0_1, %c0_2] : memref<1x512x128xbf16, #tpu.memory_space<vmem>>, vector<1x512x128xbf16>
    %4 = vector.shape_cast %3 : vector<1x512x128xbf16> to vector<512x128xbf16>
    %c0_3 = arith.constant 0 : index
    %c0_4 = arith.constant 0 : index
    %5 = vector.load %arg2[%c0_3, %c0_4] : memref<128x128xbf16, #tpu.memory_space<vmem>>, vector<128x128xbf16>
    %cst = arith.constant dense<0.000000e+00> : vector<512x128xf32>
    %6 = tpu.matmul %4, %5, %cst {dimension_numbers = #tpu.dot_dimension_numbers<[1], [0], [0], [1], [0, 0, 1, 1], [], []>} : vector<512x128xbf16>, vector<128x128xbf16>, vector<512x128xf32> -> vector<512x128xf32>
    %cst_5 = arith.constant dense<0.000000e+00> : vector<128xf32>
    %7 = vector.multi_reduction <add>, %6, %cst_5 [0] : vector<512x128xf32> to vector<128xf32>
    %8 = vector.shape_cast %7 : vector<128xf32> to vector<1x128xf32>
    %cst_6 = arith.constant 5.120000e+02 : f32
    %9 = vector.broadcast %cst_6 : f32 to vector<1x128xf32>
    %10 = arith.divf %8, %9 : vector<1x128xf32>
    %11 = vector.broadcast %10 : vector<1x128xf32> to vector<512x128xf32>
    %12 = arith.subf %6, %11 : vector<512x128xf32>
    %13 = arith.mulf %12, %12 : vector<512x128xf32>
    %cst_7 = arith.constant dense<0.000000e+00> : vector<128xf32>
    %14 = vector.multi_reduction <add>, %13, %cst_7 [0] : vector<512x128xf32> to vector<128xf32>
    %15 = vector.shape_cast %14 : vector<128xf32> to vector<1x128xf32>
    %cst_8 = arith.constant 5.120000e+02 : f32
    %16 = vector.broadcast %cst_8 : f32 to vector<1x128xf32>
    %17 = arith.divf %15, %16 : vector<1x128xf32>
    %18 = vector.broadcast %10 : vector<1x128xf32> to vector<512x128xf32>
    %19 = arith.subf %6, %18 : vector<512x128xf32>
    %cst_9 = arith.constant 9.99999974E-6 : f32
    %20 = vector.broadcast %cst_9 : f32 to vector<1x128xf32>
    %21 = arith.addf %17, %20 : vector<1x128xf32>
    %22 = math.rsqrt %21 : vector<1x128xf32>
    %23 = vector.broadcast %22 : vector<1x128xf32> to vector<512x128xf32>
    %24 = arith.mulf %19, %23 : vector<512x128xf32>
    %c0_10 = arith.constant 0 : index
    %c0_11 = arith.constant 0 : index
    %25 = vector.load %arg4[%c0_10, %c0_11] : memref<1x128xf32, #tpu.memory_space<vmem>>, vector<1x128xf32>
    %26 = vector.broadcast %25 : vector<1x128xf32> to vector<512x128xf32>
    %27 = arith.mulf %24, %26 : vector<512x128xf32>
    %c0_12 = arith.constant 0 : index
    %c0_13 = arith.constant 0 : index
    %c0_14 = arith.constant 0 : index
    %28 = vector.load %arg3[%c0_12, %c0_13, %c0_14] : memref<1x512x128xf32, #tpu.memory_space<vmem>>, vector<1x512x128xf32>
    %29 = vector.shape_cast %28 : vector<1x512x128xf32> to vector<512x128xf32>
    %cst_15 = arith.constant dense<0.000000e+00> : vector<128xf32>
    %30 = vector.multi_reduction <add>, %29, %cst_15 [0] : vector<512x128xf32> to vector<128xf32>
    %31 = vector.shape_cast %30 : vector<128xf32> to vector<1x128xf32>
    %cst_16 = arith.constant 5.120000e+02 : f32
    %32 = vector.broadcast %cst_16 : f32 to vector<1x128xf32>
    %33 = arith.divf %31, %32 : vector<1x128xf32>
    %34 = vector.broadcast %33 : vector<1x128xf32> to vector<512x128xf32>
    %35 = arith.subf %29, %34 : vector<512x128xf32>
    %36 = arith.mulf %35, %35 : vector<512x128xf32>
    %cst_17 = arith.constant dense<0.000000e+00> : vector<128xf32>
    %37 = vector.multi_reduction <add>, %36, %cst_17 [0] : vector<512x128xf32> to vector<128xf32>
    %38 = vector.shape_cast %37 : vector<128xf32> to vector<1x128xf32>
    %cst_18 = arith.constant 5.120000e+02 : f32
    %39 = vector.broadcast %cst_18 : f32 to vector<1x128xf32>
    %40 = arith.divf %38, %39 : vector<1x128xf32>
    %41 = vector.broadcast %33 : vector<1x128xf32> to vector<512x128xf32>
    %42 = arith.subf %29, %41 : vector<512x128xf32>
    %cst_19 = arith.constant 9.99999974E-6 : f32
    %43 = vector.broadcast %cst_19 : f32 to vector<1x128xf32>
    %44 = arith.addf %40, %43 : vector<1x128xf32>
    %45 = math.rsqrt %44 : vector<1x128xf32>
    %46 = vector.broadcast %45 : vector<1x128xf32> to vector<512x128xf32>
    %47 = arith.mulf %42, %46 : vector<512x128xf32>
    %c0_20 = arith.constant 0 : index
    %c0_21 = arith.constant 0 : index
    %48 = vector.load %arg5[%c0_20, %c0_21] : memref<1x128xf32, #tpu.memory_space<vmem>>, vector<1x128xf32>
    %49 = vector.broadcast %48 : vector<1x128xf32> to vector<512x128xf32>
    %50 = arith.mulf %47, %49 : vector<512x128xf32>
    %51 = arith.addf %27, %50 : vector<512x128xf32>
    %c0_22 = arith.constant 0 : index
    %c0_23 = arith.constant 0 : index
    %52 = vector.load %arg9[%c0_22, %c0_23] : memref<512x128xf32, #tpu.memory_space<vmem>>, vector<512x128xf32>
    %c0_24 = arith.constant 0 : index
    %c0_25 = arith.constant 0 : index
    %53 = vector.load %arg10[%c0_24, %c0_25] : memref<512x128xf32, #tpu.memory_space<vmem>>, vector<512x128xf32>
    %c0_26 = arith.constant 0 : index
    %c0_27 = arith.constant 0 : index
    %54 = vector.load %arg7[%c0_26, %c0_27] : memref<1x128xf32, #tpu.memory_space<vmem>>, vector<1x128xf32>
    %c0_28 = arith.constant 0 : index
    %c0_29 = arith.constant 0 : index
    %55 = vector.load %arg6[%c0_28, %c0_29] : memref<1x128xf32, #tpu.memory_space<vmem>>, vector<1x128xf32>
    %cst_30 = arith.constant 1.000000e+00 : f32
    %56 = vector.broadcast %cst_30 : f32 to vector<512x128xf32>
    %57 = arith.subf %56, %53 : vector<512x128xf32>
    %58 = arith.mulf %52, %57 : vector<512x128xf32>
    %59 = vector.broadcast %54 : vector<1x128xf32> to vector<512x128xf32>
    %60 = arith.mulf %58, %59 : vector<512x128xf32>
    %61 = arith.addf %60, %51 : vector<512x128xf32>
    %62 = vector.broadcast %55 : vector<1x128xf32> to vector<512x128xf32>
    %63 = arith.subf %61, %62 : vector<512x128xf32>
    %cst_31 = arith.constant 0.000000e+00 : f32
    %64 = vector.broadcast %cst_31 : f32 to vector<512x128xf32>
    %65 = arith.cmpf ogt, %63, %64 : vector<512x128xf32>
    %66 = arith.extui %65 : vector<512x128xi1> to vector<512x128xi32>
    %67 = arith.sitofp %66 : vector<512x128xi32> to vector<512x128xf32>
    %c0_32 = arith.constant 0 : index
    %c0_33 = arith.constant 0 : index
    %68 = vector.load %arg9[%c0_32, %c0_33] : memref<512x128xf32, #tpu.memory_space<vmem>>, vector<512x128xf32>
    tpu.vector_store %arg9[%c0_32, %c0_33], %61 {strides = array<i32>} : memref<512x128xf32, #tpu.memory_space<vmem>>, vector<512x128xf32>,
    %c0_34 = arith.constant 0 : index
    %c0_35 = arith.constant 0 : index
    %69 = vector.load %arg10[%c0_34, %c0_35] : memref<512x128xf32, #tpu.memory_space<vmem>>, vector<512x128xf32>
    tpu.vector_store %arg10[%c0_34, %c0_35], %67 {strides = array<i32>} : memref<512x128xf32, #tpu.memory_space<vmem>>, vector<512x128xf32>,
    %70 = arith.truncf %67 : vector<512x128xf32> to vector<512x128xbf16>
    %c0_36 = arith.constant 0 : index
    %c0_37 = arith.constant 0 : index
    %c0_38 = arith.constant 0 : index
    %71 = vector.load %arg8[%c0_36, %c0_37, %c0_38] : memref<1x512x128xbf16, #tpu.memory_space<vmem>>, vector<1x512x128xbf16>
    %72 = vector.shape_cast %71 : vector<1x512x128xbf16> to vector<512x128xbf16>
    %73 = vector.shape_cast %70 : vector<512x128xbf16> to vector<1x512x128xbf16>
    tpu.vector_store %arg8[%c0_36, %c0_37, %c0_38], %73 {strides = array<i32>} : memref<1x512x128xbf16, #tpu.memory_space<vmem>>, vector<1x512x128xbf16>,
    return
  }
  func.func @transform_0(%arg0: i32) -> (i32, i32, i32) {
    %c0_i32 = arith.constant 0 : i32
    %c0_i32_0 = arith.constant 0 : i32
    %c0_i32_1 = arith.constant 0 : i32
    return %arg0, %c0_i32, %c0_i32_0 : i32, i32, i32
  }
  func.func @transform_1(%arg0: i32) -> (i32, i32) {
    %c0_i32 = arith.constant 0 : i32
    %c0_i32_0 = arith.constant 0 : i32
    %c0_i32_1 = arith.constant 0 : i32
    return %c0_i32, %c0_i32_0 : i32, i32
  }
  func.func @transform_2(%arg0: i32) -> (i32, i32, i32) {
    %c0_i32 = arith.constant 0 : i32
    %c0_i32_0 = arith.constant 0 : i32
    %c0_i32_1 = arith.constant 0 : i32
    return %arg0, %c0_i32, %c0_i32_0 : i32, i32, i32
  }
  func.func @transform_3(%arg0: i32) -> (i32, i32) {
    %c0_i32 = arith.constant 0 : i32
    %c0_i32_0 = arith.constant 0 : i32
    %c0_i32_1 = arith.constant 0 : i32
    return %c0_i32, %c0_i32_0 : i32, i32
  }
  func.func @transform_4(%arg0: i32) -> (i32, i32) {
    %c0_i32 = arith.constant 0 : i32
    %c0_i32_0 = arith.constant 0 : i32
    %c0_i32_1 = arith.constant 0 : i32
    return %c0_i32, %c0_i32_0 : i32, i32
  }
  func.func @transform_5(%arg0: i32) -> (i32, i32) {
    %c0_i32 = arith.constant 0 : i32
    %c0_i32_0 = arith.constant 0 : i32
    %c0_i32_1 = arith.constant 0 : i32
    return %c0_i32, %c0_i32_0 : i32, i32
  }
  func.func @transform_6(%arg0: i32) -> (i32, i32) {
    %c0_i32 = arith.constant 0 : i32
    %c0_i32_0 = arith.constant 0 : i32
    %c0_i32_1 = arith.constant 0 : i32
    return %c0_i32, %c0_i32_0 : i32, i32
  }
  func.func @transform_7(%arg0: i32) -> (i32, i32, i32) {
    %c0_i32 = arith.constant 0 : i32
    %c0_i32_0 = arith.constant 0 : i32
    %c0_i32_1 = arith.constant 0 : i32
    return %arg0, %c0_i32, %c0_i32_0 : i32, i32, i32
  }
  func.func @transform_8(%arg0: i32) -> (i32, i32) {
    %c0_i32 = arith.constant 0 : i32
    %c0_i32_0 = arith.constant 0 : i32
    %c0_i32_1 = arith.constant 0 : i32
    return %c0_i32, %c0_i32_0 : i32, i32
  }
  func.func @transform_9(%arg0: i32) -> (i32, i32) {
    %c0_i32 = arith.constant 0 : i32
    %c0_i32_0 = arith.constant 0 : i32
    %c0_i32_1 = arith.constant 0 : i32
    return %c0_i32, %c0_i32_0 : i32, i32
  }
}

</mosaic_0001>

<llo_original>
// kernel: fwd.2
$region0: #{fwd.2}
  #allocation0 [shape = 'u32[]', space=smem, size = 0x4, offset = 0x4, fixed_abs, tag = 'smem constant byte address 0x4 - core index']
  #allocation1 [shape = 'u32[144,128]{1,0:T(1,128)}', space=vmem, size = 0x12000, scoped, tag = 'internal scratch']
  %s0 = inlined_call_operand.vmem [shape: bf16[8,512,128], index: 0, kind: input, shape index: {}]
  %s1 = inlined_call_operand.vmem [shape: bf16[128,128], index: 1, kind: input, shape index: {}]
  %s2 = inlined_call_operand.vmem [shape: f32[1,128], index: 2, kind: input, shape index: {}, may-alias: {2,3,4}]
  %s3 = inlined_call_operand.vmem [shape: f32[1,128], index: 3, kind: input, shape index: {}, may-alias: {2,3,4}]
  %s4 = inlined_call_operand.vmem [shape: f32[1,128], index: 4, kind: input, shape index: {}, may-alias: {2,3,4}]
  %s5 = inlined_call_operand.vmem [shape: bf16[8,512,128], index: 5, kind: output, shape index: {0}]
  %s6 = inlined_call_operand.hbm [shape: f32[512,128], index: 6, kind: output, shape index: {1}]
  %s7 = inlined_call_operand.hbm [shape: f32[512,128], index: 7, kind: output, shape index: {2}]
  %8 = xla_tuple %s5, %s6, %s7
  %s9 = sld [smem:[#allocation0]]
  $region73: #{fwd.2} parent=0
    _
  %s11 = ssub.s32 1, %s9
  %s12 = scalar_select 0, %s11, %s9
  $region1: #{fwd.2} parent=0
    #allocation2 [shape = 'u8[262144]{0}', space=vmem, size = 0x40000, scoped, tag = 'output window, operand 1, single buffered']
    #allocation3 [shape = 's32[2]{0}', space=sflag, size = 0x8, scoped, tag = 'scoped memory for fwd.2']
    #allocation4 [shape = 'u8[262144]{0}', space=vmem, size = 0x40000, scoped, tag = 'output window, operand 2, single buffered']
    #allocation5 [shape = 's32[1]{0}', space=sflag, size = 0x4, scoped, tag = 'scoped memory for fwd.2']
    %13 = vsyncpa [#allocation3], 0
    %14 = vsyncpa [#allocation5], 0
    loop: start=0, step=1, limit=10
    $region2: #{fwd.2} parent=1 // loop_pre_header
      _
    $region3: #{fwd.2} parent=1 // loop_header
      %s16 = sphi 0, %s20
      %p17 = scmp.ge.s32.totalorder %s16, 10
      %s26 = sphi 0, %s28
      %s29 = sphi 0, %s26
      %s30 = sphi 0, %s29
      %s46 = sphi 0, %s30
      %s50 = sphi 0, %s50
      %s52 = sphi 0, %s50
      %s53 = sphi 0, %s52
      %s67 = sphi 0, %s53
      %s71 = sphi 0, %s71
      %s73 = sphi 0, %s71
      %s74 = sphi 0, %s73
      %s88 = sphi 0, %s74
      %s92 = sphi 0, %s92
      %s94 = sphi 0, %s92
      %s95 = sphi 0, %s94
      %s109 = sphi 0, %s95
      %s113 = sphi 0, %s113
      %s115 = sphi 0, %s113
      %s116 = sphi 0, %s115
      %s130 = sphi 0, %s116
      %s136 = sphi 0, %s138
      %s139 = sphi 0, %s136
      %s140 = sphi 0, %s139
      %s156 = sphi 0, %s140
      %s160 = sphi 0, %s160
      %s162 = sphi 0, %s160
      %s163 = sphi 0, %s162
      %s177 = sphi 0, %s163
      %s181 = sphi 0, %s181
      %s183 = sphi 0, %s181
      %s184 = sphi 0, %s183
      %s198 = sphi 0, %s184
    $region4: #{fwd.2} parent=1 // loop_header_branch
      %19 = sbr.rel (%p17) target = $region8
    $region5: #{fwd.2} parent=1 // loop_body
      %s21 = ssub.s32 %s16, 1
      %s22 = ssub.s32 %s16, 2
      %s23 = sadd.s32 %s16, 1
      %s24 = ssub.s32 %s16, %s23
      %p25 = scmp.eq.s32.totalorder %s24, 0
      %s27 = sadd.s32 %s26, 1
      %s28 = scalar_select %p25, %s26, %s27
      %p31 = pneg %p25
      %p32 = scmp.eq.s32.totalorder %s16, 7
      %p33 = por %p31, %p32
      %p34 = scmp.ne.s32.totalorder %s26, %s29
      %p35 = scmp.eq.s32.totalorder %s16, 0
      %p36 = por %p34, %p35
      %p37 = scmp.ne.s32.totalorder %s26, %s29
      %p38 = scmp.eq.s32.totalorder %s21, 7
      %p39 = por %p37, %p38
      %p40 = scmp.ne.s32.totalorder %s29, %s30
      %p41 = scmp.eq.s32.totalorder %s21, 0
      %p42 = por %p40, %p41
      %p43 = scmp.ne.s32.totalorder %s29, %s30
      %p44 = scmp.eq.s32.totalorder %s22, 7
      %p45 = por %p43, %p44
      %p47 = scmp.ne.s32.totalorder %s30, %s46
      %p48 = scmp.eq.s32.totalorder %s22, 0
      %p49 = por %p47, %p48
      %s51 = sadd.s32 %s50, 1
      %p54 = scmp.eq.s32.totalorder %s16, 7
      %p55 = scmp.ne.s32.totalorder %s50, %s52
      %p56 = scmp.eq.s32.totalorder %s16, 0
      %p57 = por %p55, %p56
      %p58 = scmp.ne.s32.totalorder %s50, %s52
      %p59 = scmp.eq.s32.totalorder %s21, 7
      %p60 = por %p58, %p59
      %p61 = scmp.ne.s32.totalorder %s52, %s53
      %p62 = scmp.eq.s32.totalorder %s21, 0
      %p63 = por %p61, %p62
      %p64 = scmp.ne.s32.totalorder %s52, %s53
      %p65 = scmp.eq.s32.totalorder %s22, 7
      %p66 = por %p64, %p65
      %p68 = scmp.ne.s32.totalorder %s53, %s67
      %p69 = scmp.eq.s32.totalorder %s22, 0
      %p70 = por %p68, %p69
      %s72 = sadd.s32 %s71, 1
      %p75 = scmp.eq.s32.totalorder %s16, 7
      %p76 = scmp.ne.s32.totalorder %s71, %s73
      %p77 = scmp.eq.s32.totalorder %s16, 0
      %p78 = por %p76, %p77
      %p79 = scmp.ne.s32.totalorder %s71, %s73
      %p80 = scmp.eq.s32.totalorder %s21, 7
      %p81 = por %p79, %p80
      %p82 = scmp.ne.s32.totalorder %s73, %s74
      %p83 = scmp.eq.s32.totalorder %s21, 0
      %p84 = por %p82, %p83
      %p85 = scmp.ne.s32.totalorder %s73, %s74
      %p86 = scmp.eq.s32.totalorder %s22, 7
      %p87 = por %p85, %p86
      %p89 = scmp.ne.s32.totalorder %s74, %s88
      %p90 = scmp.eq.s32.totalorder %s22, 0
      %p91 = por %p89, %p90
      %s93 = sadd.s32 %s92, 1
      %p96 = scmp.eq.s32.totalorder %s16, 7
      %p97 = scmp.ne.s32.totalorder %s92, %s94
      %p98 = scmp.eq.s32.totalorder %s16, 0
      %p99 = por %p97, %p98
      %p100 = scmp.ne.s32.totalorder %s92, %s94
      %p101 = scmp.eq.s32.totalorder %s21, 7
      %p102 = por %p100, %p101
      %p103 = scmp.ne.s32.totalorder %s94, %s95
      %p104 = scmp.eq.s32.totalorder %s21, 0
      %p105 = por %p103, %p104
      %p106 = scmp.ne.s32.totalorder %s94, %s95
      %p107 = scmp.eq.s32.totalorder %s22, 7
      %p108 = por %p106, %p107
      %p110 = scmp.ne.s32.totalorder %s95, %s109
      %p111 = scmp.eq.s32.totalorder %s22, 0
      %p112 = por %p110, %p111
      %s114 = sadd.s32 %s113, 1
      %p117 = scmp.eq.s32.totalorder %s16, 7
      %p118 = scmp.ne.s32.totalorder %s113, %s115
      %p119 = scmp.eq.s32.totalorder %s16, 0
      %p120 = por %p118, %p119
      %p121 = scmp.ne.s32.totalorder %s113, %s115
      %p122 = scmp.eq.s32.totalorder %s21, 7
      %p123 = por %p121, %p122
      %p124 = scmp.ne.s32.totalorder %s115, %s116
      %p125 = scmp.eq.s32.totalorder %s21, 0
      %p126 = por %p124, %p125
      %p127 = scmp.ne.s32.totalorder %s115, %s116
      %p128 = scmp.eq.s32.totalorder %s22, 7
      %p129 = por %p127, %p128
      %p131 = scmp.ne.s32.totalorder %s116, %s130
      %p132 = scmp.eq.s32.totalorder %s22, 0
      %p133 = por %p131, %p132
      %s134 = ssub.s32 %s16, %s23
      %p135 = scmp.eq.s32.totalorder %s134, 0
      %s137 = sadd.s32 %s136, 1
      %s138 = scalar_select %p135, %s136, %s137
      %p141 = pneg %p135
      %p142 = scmp.eq.s32.totalorder %s16, 7
      %p143 = por %p141, %p142
      %p144 = scmp.ne.s32.totalorder %s136, %s139
      %p145 = scmp.eq.s32.totalorder %s16, 0
      %p146 = por %p144, %p145
      %p147 = scmp.ne.s32.totalorder %s136, %s139
      %p148 = scmp.eq.s32.totalorder %s21, 7
      %p149 = por %p147, %p148
      %p150 = scmp.ne.s32.totalorder %s139, %s140
      %p151 = scmp.eq.s32.totalorder %s21, 0
      %p152 = por %p150, %p151
      %p153 = scmp.ne.s32.totalorder %s139, %s140
      %p154 = scmp.eq.s32.totalorder %s22, 7
      %p155 = por %p153, %p154
      %p157 = scmp.ne.s32.totalorder %s140, %s156
      %p158 = scmp.eq.s32.totalorder %s22, 0
      %p159 = por %p157, %p158
      %s161 = sadd.s32 %s160, 1
      %p164 = scmp.eq.s32.totalorder %s16, 7
      %p165 = scmp.ne.s32.totalorder %s160, %s162
      %p166 = scmp.eq.s32.totalorder %s16, 0
      %p167 = por %p165, %p166
      %p168 = scmp.ne.s32.totalorder %s160, %s162
      %p169 = scmp.eq.s32.totalorder %s21, 7
      %p170 = por %p168, %p169
      %p171 = scmp.ne.s32.totalorder %s162, %s163
      %p172 = scmp.eq.s32.totalorder %s21, 0
      %p173 = por %p171, %p172
      %p174 = scmp.ne.s32.totalorder %s162, %s163
      %p175 = scmp.eq.s32.totalorder %s22, 7
      %p176 = por %p174, %p175
      %p178 = scmp.ne.s32.totalorder %s163, %s177
      %p179 = scmp.eq.s32.totalorder %s22, 0
      %p180 = por %p178, %p179
      %s182 = sadd.s32 %s181, 1
      %p185 = scmp.eq.s32.totalorder %s16, 7
      %p186 = scmp.ne.s32.totalorder %s181, %s183
      %p187 = scmp.eq.s32.totalorder %s16, 0
      %p188 = por %p186, %p187
      %p189 = scmp.ne.s32.totalorder %s181, %s183
      %p190 = scmp.eq.s32.totalorder %s21, 7
      %p191 = por %p189, %p190
      %p192 = scmp.ne.s32.totalorder %s183, %s184
      %p193 = scmp.eq.s32.totalorder %s21, 0
      %p194 = por %p192, %p193
      %p195 = scmp.ne.s32.totalorder %s183, %s184
      %p196 = scmp.eq.s32.totalorder %s22, 7
      %p197 = por %p195, %p196
      %p199 = scmp.ne.s32.totalorder %s184, %s198
      %p200 = scmp.eq.s32.totalorder %s22, 0
      %p201 = por %p199, %p200
      %p202 = scmp.le.s32.totalorder 1, %s16
      %p203 = scmp.lt.s32.totalorder %s16, 9
      %p204 = pnand %p202, %p203
      %p205 = pneg %p204
      // Predicated region
      $region9: #{fwd.2} parent=5 // pred_check
        _
      $region10: #{fwd.2} parent=5 // pred_check_branch
        %207 = sbr.rel (%p204) target = $region12
      $region11: #{fwd.2} parent=5 // pred_region
        %s208 = ssub.s32 %s16, 1
        // Predicated region
        $region13: #{fwd.2} parent=11 // pred_check
          %p209 = pneg %p63
        $region14: #{fwd.2} parent=11 // pred_check_branch
          %211 = sbr.rel (%p209) target = $region16
        $region15: #{fwd.2} parent=11 // pred_region
          _
        $region16: #{fwd.2} parent=11 // pred_fallthru
          _
        // Predicated region
        $region17: #{fwd.2} parent=11 // pred_check
          %p212 = pneg %p84
        $region18: #{fwd.2} parent=11 // pred_check_branch
          %214 = sbr.rel (%p212) target = $region20
        $region19: #{fwd.2} parent=11 // pred_region
          _
        $region20: #{fwd.2} parent=11 // pred_fallthru
          _
        // Predicated region
        $region21: #{fwd.2} parent=11 // pred_check
          %p215 = pneg %p105
        $region22: #{fwd.2} parent=11 // pred_check_branch
          %217 = sbr.rel (%p215) target = $region24
        $region23: #{fwd.2} parent=11 // pred_region
          _
        $region24: #{fwd.2} parent=11 // pred_fallthru
          _
        // Predicated region
        $region25: #{fwd.2} parent=11 // pred_check
          %p218 = pneg %p126
        $region26: #{fwd.2} parent=11 // pred_check_branch
          %220 = sbr.rel (%p218) target = $region28
        $region27: #{fwd.2} parent=11 // pred_region
          _
        $region28: #{fwd.2} parent=11 // pred_fallthru
          _
      $region12: #{fwd.2} parent=5 // pred_fallthru
        _
      %p221 = scmp.lt.s32.totalorder %s16, 8
      // Predicated region
      $region29: #{fwd.2} parent=5 // pred_check
        %p222 = pneg %p221
      $region30: #{fwd.2} parent=5 // pred_check_branch
        %224 = sbr.rel (%p222) target = $region32
      $region31: #{fwd.2} parent=5 // pred_region
        // Predicated region
        $region33: #{fwd.2} parent=31 // pred_check
          %p225 = pneg %p36
        $region34: #{fwd.2} parent=31 // pred_check_branch
          %227 = sbr.rel (%p225) target = $region36
        $region35: #{fwd.2} parent=31 // pred_region
          %p228 = scmp.lt.s32.totalorder %s16, 7
          %s229 = scalar_select %p228, %s16, 7
          %s230 = smul.addr %s229, 64
          %s231 = smul.addr %s230, 4
          %s232 = scalar_lea.vmem %s0, %s231
        $region36: #{fwd.2} parent=31 // pred_fallthru
          _
      $region32: #{fwd.2} parent=5 // pred_fallthru
        _
      %p233 = scmp.le.s32.totalorder 1, %s16
      %p234 = scmp.lt.s32.totalorder %s16, 9
      %p235 = pnand %p233, %p234
      %p236 = pneg %p235
      // Predicated region
      $region37: #{fwd.2} parent=5 // pred_check
        _
      $region38: #{fwd.2} parent=5 // pred_check_branch
        %238 = sbr.rel (%p235) target = $region40
      $region39: #{fwd.2} parent=5 // pred_region
        %s239 = ssub.s32 %s16, 1
        %p240 = scmp.lt.s32.totalorder %s21, 7
        %s241 = scalar_select %p240, %s21, 7
        %s242 = smul.addr %s241, 64
        %s243 = smul.addr %s242, 4
        %s244 = scalar_lea.vmem %s0, %s243
        %p245 = pneg %p42
        %p246 = pneg %p39
        %p247 = pneg %p63
        %p248 = pneg %p60
        %p249 = pneg %p84
        %p250 = pneg %p81
        %p251 = pneg %p105
        %p252 = pneg %p102
        %p253 = pneg %p126
        %p254 = pneg %p123
        %p255 = pneg %p152
        %p256 = pneg %p149
        %p257 = scmp.lt.s32.totalorder %s21, 7
        %s258 = scalar_select %p257, %s21, 7
        %s259 = smul.addr %s258, 64
        %s260 = smul.addr %s259, 4
        %s261 = scalar_lea.vmem %s5, %s260
        %p262 = pneg %p173
        %p263 = pneg %p170
        %p264 = pneg %p194
        %p265 = pneg %p191
        %p266 = scmp.lt.s32.totalorder %s21, 7
        %s267 = scalar_select %p266, %s21, 7
        %s268 = smul.addr %s267, 64
        %s269 = smul.addr %s268, 4
        %s270 = scalar_lea.vmem %s0, %s269
        %p271 = scmp.lt.s32.totalorder %s21, 7
        %s272 = scalar_select %p271, %s21, 7
        %s273 = smul.addr %s272, 64
        %s274 = smul.addr %s273, 4
        %s275 = scalar_lea.vmem %s5, %s274
        %p277 = scmp.eq.s32.totalorder %s21, 0
        // Predicated region
        $region41: #{fwd.2} parent=39 // pred_check
          %p278 = pneg %p277
        $region42: #{fwd.2} parent=39 // pred_check_branch
          %280 = sbr.rel (%p278) target = $region44
        $region43: #{fwd.2} parent=39 // pred_region
          %281 = vst [vmem:[#allocation2] sm:$0xff] 0.0
          %282 = vst [vmem:[#allocation2 + $0x8] sm:$0xff] 0.0
          %283 = vst [vmem:[#allocation2 + $0x10] sm:$0xff] 0.0
          %284 = vst [vmem:[#allocation2 + $0x18] sm:$0xff] 0.0
          %285 = vst [vmem:[#allocation2 + $0x20] sm:$0xff] 0.0
          %286 = vst [vmem:[#allocation2 + $0x28] sm:$0xff] 0.0
          %287 = vst [vmem:[#allocation2 + $0x30] sm:$0xff] 0.0
          %288 = vst [vmem:[#allocation2 + $0x38] sm:$0xff] 0.0
          %289 = vst [vmem:[#allocation2 + $0x40] sm:$0xff] 0.0
          %290 = vst [vmem:[#allocation2 + $0x48] sm:$0xff] 0.0
          %291 = vst [vmem:[#allocation2 + $0x50] sm:$0xff] 0.0
          %292 = vst [vmem:[#allocation2 + $0x58] sm:$0xff] 0.0
          %293 = vst [vmem:[#allocation2 + $0x60] sm:$0xff] 0.0
          %294 = vst [vmem:[#allocation2 + $0x68] sm:$0xff] 0.0
          %295 = vst [vmem:[#allocation2 + $0x70] sm:$0xff] 0.0
          %296 = vst [vmem:[#allocation2 + $0x78] sm:$0xff] 0.0
          %297 = vst [vmem:[#allocation2 + $0x80] sm:$0xff] 0.0
          %298 = vst [vmem:[#allocation2 + $0x88] sm:$0xff] 0.0
          %299 = vst [vmem:[#allocation2 + $0x90] sm:$0xff] 0.0
          %300 = vst [vmem:[#allocation2 + $0x98] sm:$0xff] 0.0
          %301 = vst [vmem:[#allocation2 + $0xa0] sm:$0xff] 0.0
          %302 = vst [vmem:[#allocation2 + $0xa8] sm:$0xff] 0.0
          %303 = vst [vmem:[#allocation2 + $0xb0] sm:$0xff] 0.0
          %304 = vst [vmem:[#allocation2 + $0xb8] sm:$0xff] 0.0
          %305 = vst [vmem:[#allocation2 + $0xc0] sm:$0xff] 0.0
          %306 = vst [vmem:[#allocation2 + $0xc8] sm:$0xff] 0.0
          %307 = vst [vmem:[#allocation2 + $0xd0] sm:$0xff] 0.0
          %308 = vst [vmem:[#allocation2 + $0xd8] sm:$0xff] 0.0
          %309 = vst [vmem:[#allocation2 + $0xe0] sm:$0xff] 0.0
          %310 = vst [vmem:[#allocation2 + $0xe8] sm:$0xff] 0.0
          %311 = vst [vmem:[#allocation2 + $0xf0] sm:$0xff] 0.0
          %312 = vst [vmem:[#allocation2 + $0xf8] sm:$0xff] 0.0
          %313 = vst [vmem:[#allocation2 + $0x100] sm:$0xff] 0.0
          %314 = vst [vmem:[#allocation2 + $0x108] sm:$0xff] 0.0
          %315 = vst [vmem:[#allocation2 + $0x110] sm:$0xff] 0.0
          %316 = vst [vmem:[#allocation2 + $0x118] sm:$0xff] 0.0
          %317 = vst [vmem:[#allocation2 + $0x120] sm:$0xff] 0.0
          %318 = vst [vmem:[#allocation2 + $0x128] sm:$0xff] 0.0
          %319 = vst [vmem:[#allocation2 + $0x130] sm:$0xff] 0.0
          %320 = vst [vmem:[#allocation2 + $0x138] sm:$0xff] 0.0
          %321 = vst [vmem:[#allocation2 + $0x140] sm:$0xff] 0.0
          %322 = vst [vmem:[#allocation2 + $0x148] sm:$0xff] 0.0
          %323 = vst [vmem:[#allocation2 + $0x150] sm:$0xff] 0.0
          %324 = vst [vmem:[#allocation2 + $0x158] sm:$0xff] 0.0
          %325 = vst [vmem:[#allocation2 + $0x160] sm:$0xff] 0.0
          %326 = vst [vmem:[#allocation2 + $0x168] sm:$0xff] 0.0
          %327 = vst [vmem:[#allocation2 + $0x170] sm:$0xff] 0.0
          %328 = vst [vmem:[#allocation2 + $0x178] sm:$0xff] 0.0
          %329 = vst [vmem:[#allocation2 + $0x180] sm:$0xff] 0.0
          %330 = vst [vmem:[#allocation2 + $0x188] sm:$0xff] 0.0
          %331 = vst [vmem:[#allocation2 + $0x190] sm:$0xff] 0.0
          %332 = vst [vmem:[#allocation2 + $0x198] sm:$0xff] 0.0
          %333 = vst [vmem:[#allocation2 + $0x1a0] sm:$0xff] 0.0
          %334 = vst [vmem:[#allocation2 + $0x1a8] sm:$0xff] 0.0
          %335 = vst [vmem:[#allocation2 + $0x1b0] sm:$0xff] 0.0
          %336 = vst [vmem:[#allocation2 + $0x1b8] sm:$0xff] 0.0
          %337 = vst [vmem:[#allocation2 + $0x1c0] sm:$0xff] 0.0
          %338 = vst [vmem:[#allocation2 + $0x1c8] sm:$0xff] 0.0
          %339 = vst [vmem:[#allocation2 + $0x1d0] sm:$0xff] 0.0
          %340 = vst [vmem:[#allocation2 + $0x1d8] sm:$0xff] 0.0
          %341 = vst [vmem:[#allocation2 + $0x1e0] sm:$0xff] 0.0
          %342 = vst [vmem:[#allocation2 + $0x1e8] sm:$0xff] 0.0
          %343 = vst [vmem:[#allocation2 + $0x1f0] sm:$0xff] 0.0
          %344 = vst [vmem:[#allocation2 + $0x1f8] sm:$0xff] 0.0
          %345 = vst [vmem:[#allocation4] sm:$0xff] 0.0
          %346 = vst [vmem:[#allocation4 + $0x8] sm:$0xff] 0.0
          %347 = vst [vmem:[#allocation4 + $0x10] sm:$0xff] 0.0
          %348 = vst [vmem:[#allocation4 + $0x18] sm:$0xff] 0.0
          %349 = vst [vmem:[#allocation4 + $0x20] sm:$0xff] 0.0
          %350 = vst [vmem:[#allocation4 + $0x28] sm:$0xff] 0.0
          %351 = vst [vmem:[#allocation4 + $0x30] sm:$0xff] 0.0
          %352 = vst [vmem:[#allocation4 + $0x38] sm:$0xff] 0.0
          %353 = vst [vmem:[#allocation4 + $0x40] sm:$0xff] 0.0
          %354 = vst [vmem:[#allocation4 + $0x48] sm:$0xff] 0.0
          %355 = vst [vmem:[#allocation4 + $0x50] sm:$0xff] 0.0
          %356 = vst [vmem:[#allocation4 + $0x58] sm:$0xff] 0.0
          %357 = vst [vmem:[#allocation4 + $0x60] sm:$0xff] 0.0
          %358 = vst [vmem:[#allocation4 + $0x68] sm:$0xff] 0.0
          %359 = vst [vmem:[#allocation4 + $0x70] sm:$0xff] 0.0
          %360 = vst [vmem:[#allocation4 + $0x78] sm:$0xff] 0.0
          %361 = vst [vmem:[#allocation4 + $0x80] sm:$0xff] 0.0
          %362 = vst [vmem:[#allocation4 + $0x88] sm:$0xff] 0.0
          %363 = vst [vmem:[#allocation4 + $0x90] sm:$0xff] 0.0
          %364 = vst [vmem:[#allocation4 + $0x98] sm:$0xff] 0.0
          %365 = vst [vmem:[#allocation4 + $0xa0] sm:$0xff] 0.0
          %366 = vst [vmem:[#allocation4 + $0xa8] sm:$0xff] 0.0
          %367 = vst [vmem:[#allocation4 + $0xb0] sm:$0xff] 0.0
          %368 = vst [vmem:[#allocation4 + $0xb8] sm:$0xff] 0.0
          %369 = vst [vmem:[#allocation4 + $0xc0] sm:$0xff] 0.0
          %370 = vst [vmem:[#allocation4 + $0xc8] sm:$0xff] 0.0
          %371 = vst [vmem:[#allocation4 + $0xd0] sm:$0xff] 0.0
          %372 = vst [vmem:[#allocation4 + $0xd8] sm:$0xff] 0.0
          %373 = vst [vmem:[#allocation4 + $0xe0] sm:$0xff] 0.0
          %374 = vst [vmem:[#allocation4 + $0xe8] sm:$0xff] 0.0
          %375 = vst [vmem:[#allocation4 + $0xf0] sm:$0xff] 0.0
          %376 = vst [vmem:[#allocation4 + $0xf8] sm:$0xff] 0.0
          %377 = vst [vmem:[#allocation4 + $0x100] sm:$0xff] 0.0
          %378 = vst [vmem:[#allocation4 + $0x108] sm:$0xff] 0.0
          %379 = vst [vmem:[#allocation4 + $0x110] sm:$0xff] 0.0
          %380 = vst [vmem:[#allocation4 + $0x118] sm:$0xff] 0.0
          %381 = vst [vmem:[#allocation4 + $0x120] sm:$0xff] 0.0
          %382 = vst [vmem:[#allocation4 + $0x128] sm:$0xff] 0.0
          %383 = vst [vmem:[#allocation4 + $0x130] sm:$0xff] 0.0
          %384 = vst [vmem:[#allocation4 + $0x138] sm:$0xff] 0.0
          %385 = vst [vmem:[#allocation4 + $0x140] sm:$0xff] 0.0
          %386 = vst [vmem:[#allocation4 + $0x148] sm:$0xff] 0.0
          %387 = vst [vmem:[#allocation4 + $0x150] sm:$0xff] 0.0
          %388 = vst [vmem:[#allocation4 + $0x158] sm:$0xff] 0.0
          %389 = vst [vmem:[#allocation4 + $0x160] sm:$0xff] 0.0
          %390 = vst [vmem:[#allocation4 + $0x168] sm:$0xff] 0.0
          %391 = vst [vmem:[#allocation4 + $0x170] sm:$0xff] 0.0
          %392 = vst [vmem:[#allocation4 + $0x178] sm:$0xff] 0.0
          %393 = vst [vmem:[#allocation4 + $0x180] sm:$0xff] 0.0
          %394 = vst [vmem:[#allocation4 + $0x188] sm:$0xff] 0.0
          %395 = vst [vmem:[#allocation4 + $0x190] sm:$0xff] 0.0
          %396 = vst [vmem:[#allocation4 + $0x198] sm:$0xff] 0.0
          %397 = vst [vmem:[#allocation4 + $0x1a0] sm:$0xff] 0.0
          %398 = vst [vmem:[#allocation4 + $0x1a8] sm:$0xff] 0.0
          %399 = vst [vmem:[#allocation4 + $0x1b0] sm:$0xff] 0.0
          %400 = vst [vmem:[#allocation4 + $0x1b8] sm:$0xff] 0.0
          %401 = vst [vmem:[#allocation4 + $0x1c0] sm:$0xff] 0.0
          %402 = vst [vmem:[#allocation4 + $0x1c8] sm:$0xff] 0.0
          %403 = vst [vmem:[#allocation4 + $0x1d0] sm:$0xff] 0.0
          %404 = vst [vmem:[#allocation4 + $0x1d8] sm:$0xff] 0.0
          %405 = vst [vmem:[#allocation4 + $0x1e0] sm:$0xff] 0.0
          %406 = vst [vmem:[#allocation4 + $0x1e8] sm:$0xff] 0.0
          %407 = vst [vmem:[#allocation4 + $0x1f0] sm:$0xff] 0.0
          %408 = vst [vmem:[#allocation4 + $0x1f8] sm:$0xff] 0.0
        $region44: #{fwd.2} parent=39 // pred_fallthru
          _
        %v409 = vld [vmem:[%s270] sm:$0xf]
        %v410 = vld [vmem:[%s270 + $0x4] sm:$0xf]
        %v411 = vld [vmem:[%s270 + $0x8] sm:$0xf]
        %v412 = vld [vmem:[%s270 + $0xc] sm:$0xf]
        %v413 = vld [vmem:[%s270 + $0x10] sm:$0xf]
        %v414 = vld [vmem:[%s270 + $0x14] sm:$0xf]
        %v415 = vld [vmem:[%s270 + $0x18] sm:$0xf]
        %v416 = vld [vmem:[%s270 + $0x1c] sm:$0xf]
        %v417 = vld [vmem:[%s270 + $0x20] sm:$0xf]
        %v418 = vld [vmem:[%s270 + $0x24] sm:$0xf]
        %v419 = vld [vmem:[%s270 + $0x28] sm:$0xf]
        %v420 = vld [vmem:[%s270 + $0x2c] sm:$0xf]
        %v421 = vld [vmem:[%s270 + $0x30] sm:$0xf]
        %v422 = vld [vmem:[%s270 + $0x34] sm:$0xf]
        %v423 = vld [vmem:[%s270 + $0x38] sm:$0xf]
        %v424 = vld [vmem:[%s270 + $0x3c] sm:$0xf]
        %v425 = vld [vmem:[%s270 + $0x40] sm:$0xf]
        %v426 = vld [vmem:[%s270 + $0x44] sm:$0xf]
        %v427 = vld [vmem:[%s270 + $0x48] sm:$0xf]
        %v428 = vld [vmem:[%s270 + $0x4c] sm:$0xf]
        %v429 = vld [vmem:[%s270 + $0x50] sm:$0xf]
        %v430 = vld [vmem:[%s270 + $0x54] sm:$0xf]
        %v431 = vld [vmem:[%s270 + $0x58] sm:$0xf]
        %v432 = vld [vmem:[%s270 + $0x5c] sm:$0xf]
        %v433 = vld [vmem:[%s270 + $0x60] sm:$0xf]
        %v434 = vld [vmem:[%s270 + $0x64] sm:$0xf]
        %v435 = vld [vmem:[%s270 + $0x68] sm:$0xf]
        %v436 = vld [vmem:[%s270 + $0x6c] sm:$0xf]
        %v437 = vld [vmem:[%s270 + $0x70] sm:$0xf]
        %v438 = vld [vmem:[%s270 + $0x74] sm:$0xf]
        %v439 = vld [vmem:[%s270 + $0x78] sm:$0xf]
        %v440 = vld [vmem:[%s270 + $0x7c] sm:$0xf]
        %v441 = vld [vmem:[%s270 + $0x80] sm:$0xf]
        %v442 = vld [vmem:[%s270 + $0x84] sm:$0xf]
        %v443 = vld [vmem:[%s270 + $0x88] sm:$0xf]
        %v444 = vld [vmem:[%s270 + $0x8c] sm:$0xf]
        %v445 = vld [vmem:[%s270 + $0x90] sm:$0xf]
        %v446 = vld [vmem:[%s270 + $0x94] sm:$0xf]
        %v447 = vld [vmem:[%s270 + $0x98] sm:$0xf]
        %v448 = vld [vmem:[%s270 + $0x9c] sm:$0xf]
        %v449 = vld [vmem:[%s270 + $0xa0] sm:$0xf]
        %v450 = vld [vmem:[%s270 + $0xa4] sm:$0xf]
        %v451 = vld [vmem:[%s270 + $0xa8] sm:$0xf]
        %v452 = vld [vmem:[%s270 + $0xac] sm:$0xf]
        %v453 = vld [vmem:[%s270 + $0xb0] sm:$0xf]
        %v454 = vld [vmem:[%s270 + $0xb4] sm:$0xf]
        %v455 = vld [vmem:[%s270 + $0xb8] sm:$0xf]
        %v456 = vld [vmem:[%s270 + $0xbc] sm:$0xf]
        %v457 = vld [vmem:[%s270 + $0xc0] sm:$0xf]
        %v458 = vld [vmem:[%s270 + $0xc4] sm:$0xf]
        %v459 = vld [vmem:[%s270 + $0xc8] sm:$0xf]
        %v460 = vld [vmem:[%s270 + $0xcc] sm:$0xf]
        %v461 = vld [vmem:[%s270 + $0xd0] sm:$0xf]
        %v462 = vld [vmem:[%s270 + $0xd4] sm:$0xf]
        %v463 = vld [vmem:[%s270 + $0xd8] sm:$0xf]
        %v464 = vld [vmem:[%s270 + $0xdc] sm:$0xf]
        %v465 = vld [vmem:[%s270 + $0xe0] sm:$0xf]
        %v466 = vld [vmem:[%s270 + $0xe4] sm:$0xf]
        %v467 = vld [vmem:[%s270 + $0xe8] sm:$0xf]
        %v468 = vld [vmem:[%s270 + $0xec] sm:$0xf]
        %v469 = vld [vmem:[%s270 + $0xf0] sm:$0xf]
        %v470 = vld [vmem:[%s270 + $0xf4] sm:$0xf]
        %v471 = vld [vmem:[%s270 + $0xf8] sm:$0xf]
        %v472 = vld [vmem:[%s270 + $0xfc] sm:$0xf]
        %v473 = vld [vmem:[%s1] sm:$0xf]
        %v474 = vld [vmem:[%s1 + $0x4] sm:$0xf]
        %v475 = vld [vmem:[%s1 + $0x8] sm:$0xf]
        %v476 = vld [vmem:[%s1 + $0xc] sm:$0xf]
        %v477 = vld [vmem:[%s1 + $0x10] sm:$0xf]
        %v478 = vld [vmem:[%s1 + $0x14] sm:$0xf]
        %v479 = vld [vmem:[%s1 + $0x18] sm:$0xf]
        %v480 = vld [vmem:[%s1 + $0x1c] sm:$0xf]
        %v481 = vld [vmem:[%s1 + $0x20] sm:$0xf]
        %v482 = vld [vmem:[%s1 + $0x24] sm:$0xf]
        %v483 = vld [vmem:[%s1 + $0x28] sm:$0xf]
        %v484 = vld [vmem:[%s1 + $0x2c] sm:$0xf]
        %v485 = vld [vmem:[%s1 + $0x30] sm:$0xf]
        %v486 = vld [vmem:[%s1 + $0x34] sm:$0xf]
        %v487 = vld [vmem:[%s1 + $0x38] sm:$0xf]
        %v488 = vld [vmem:[%s1 + $0x3c] sm:$0xf]
        %v553 = vunpack.c.l.b16 %v409
        %v554 = vunpack.c.l.b16 %v410
        %v555 = vunpack.c.l.b16 %v411
        %v556 = vunpack.c.l.b16 %v412
        %v557 = vunpack.c.l.b16 %v413
        %v558 = vunpack.c.l.b16 %v414
        %v559 = vunpack.c.l.b16 %v415
        %v560 = vunpack.c.l.b16 %v416
        %v561 = vunpack.c.l.b16 %v417
        %v562 = vunpack.c.l.b16 %v418
        %v563 = vunpack.c.l.b16 %v419
        %v564 = vunpack.c.l.b16 %v420
        %v565 = vunpack.c.l.b16 %v421
        %v566 = vunpack.c.l.b16 %v422
        %v567 = vunpack.c.l.b16 %v423
        %v568 = vunpack.c.l.b16 %v424
        %v569 = vunpack.c.l.b16 %v425
        %v570 = vunpack.c.l.b16 %v426
        %v571 = vunpack.c.l.b16 %v427
        %v572 = vunpack.c.l.b16 %v428
        %v573 = vunpack.c.l.b16 %v429
        %v574 = vunpack.c.l.b16 %v430
        %v575 = vunpack.c.l.b16 %v431
        %v576 = vunpack.c.l.b16 %v432
        %v577 = vunpack.c.l.b16 %v433
        %v578 = vunpack.c.l.b16 %v434
        %v579 = vunpack.c.l.b16 %v435
        %v580 = vunpack.c.l.b16 %v436
        %v581 = vunpack.c.l.b16 %v437
        %v582 = vunpack.c.l.b16 %v438
        %v583 = vunpack.c.l.b16 %v439
        %v584 = vunpack.c.l.b16 %v440
        %v585 = vunpack.c.l.b16 %v441
        %v586 = vunpack.c.l.b16 %v442
        %v587 = vunpack.c.l.b16 %v443
        %v588 = vunpack.c.l.b16 %v444
        %v589 = vunpack.c.l.b16 %v445
        %v590 = vunpack.c.l.b16 %v446
        %v591 = vunpack.c.l.b16 %v447
        %v592 = vunpack.c.l.b16 %v448
        %v593 = vunpack.c.l.b16 %v449
        %v594 = vunpack.c.l.b16 %v450
        %v595 = vunpack.c.l.b16 %v451
        %v596 = vunpack.c.l.b16 %v452
        %v597 = vunpack.c.l.b16 %v453
        %v598 = vunpack.c.l.b16 %v454
        %v599 = vunpack.c.l.b16 %v455
        %v600 = vunpack.c.l.b16 %v456
        %v601 = vunpack.c.l.b16 %v457
        %v602 = vunpack.c.l.b16 %v458
        %v603 = vunpack.c.l.b16 %v459
        %v604 = vunpack.c.l.b16 %v460
        %v605 = vunpack.c.l.b16 %v461
        %v606 = vunpack.c.l.b16 %v462
        %v607 = vunpack.c.l.b16 %v463
        %v608 = vunpack.c.l.b16 %v464
        %v609 = vunpack.c.l.b16 %v465
        %v610 = vunpack.c.l.b16 %v466
        %v611 = vunpack.c.l.b16 %v467
        %v612 = vunpack.c.l.b16 %v468
        %v613 = vunpack.c.l.b16 %v469
        %v614 = vunpack.c.l.b16 %v470
        %v615 = vunpack.c.l.b16 %v471
        %v616 = vunpack.c.l.b16 %v472
        %v617 = vpack.c.b16 %v554, %v553
        %v618 = vpack.c.b16 %v556, %v555
        %v619 = vpack.c.b16 %v558, %v557
        %v620 = vpack.c.b16 %v560, %v559
        %v621 = vpack.c.b16 %v562, %v561
        %v622 = vpack.c.b16 %v564, %v563
        %v623 = vpack.c.b16 %v566, %v565
        %v624 = vpack.c.b16 %v568, %v567
        %v625 = vpack.c.b16 %v570, %v569
        %v626 = vpack.c.b16 %v572, %v571
        %v627 = vpack.c.b16 %v574, %v573
        %v628 = vpack.c.b16 %v576, %v575
        %v629 = vpack.c.b16 %v578, %v577
        %v630 = vpack.c.b16 %v580, %v579
        %v631 = vpack.c.b16 %v582, %v581
        %v632 = vpack.c.b16 %v584, %v583
        %v633 = vpack.c.b16 %v586, %v585
        %v634 = vpack.c.b16 %v588, %v587
        %v635 = vpack.c.b16 %v590, %v589
        %v636 = vpack.c.b16 %v592, %v591
        %v637 = vpack.c.b16 %v594, %v593
        %v638 = vpack.c.b16 %v596, %v595
        %v639 = vpack.c.b16 %v598, %v597
        %v640 = vpack.c.b16 %v600, %v599
        %v641 = vpack.c.b16 %v602, %v601
        %v642 = vpack.c.b16 %v604, %v603
        %v643 = vpack.c.b16 %v606, %v605
        %v644 = vpack.c.b16 %v608, %v607
        %v645 = vpack.c.b16 %v610, %v609
        %v646 = vpack.c.b16 %v612, %v611
        %v647 = vpack.c.b16 %v614, %v613
        %v648 = vpack.c.b16 %v616, %v615
        %v697 = vunpack.c.l.b16 %v473
        %v698 = vunpack.c.l.b16 %v474
        %v699 = vunpack.c.l.b16 %v475
        %v700 = vunpack.c.l.b16 %v476
        %v701 = vunpack.c.l.b16 %v477
        %v702 = vunpack.c.l.b16 %v478
        %v703 = vunpack.c.l.b16 %v479
        %v704 = vunpack.c.l.b16 %v480
        %v705 = vunpack.c.l.b16 %v481
        %v706 = vunpack.c.l.b16 %v482
        %v707 = vunpack.c.l.b16 %v483
        %v708 = vunpack.c.l.b16 %v484
        %v709 = vunpack.c.l.b16 %v485
        %v710 = vunpack.c.l.b16 %v486
        %v711 = vunpack.c.l.b16 %v487
        %v712 = vunpack.c.l.b16 %v488
        %v713 = vpack.c.b16 %v698, %v697
        %v714 = vpack.c.b16 %v700, %v699
        %v715 = vpack.c.b16 %v702, %v701
        %v716 = vpack.c.b16 %v704, %v703
        %v717 = vpack.c.b16 %v706, %v705
        %v718 = vpack.c.b16 %v708, %v707
        %v719 = vpack.c.b16 %v710, %v709
        %v720 = vpack.c.b16 %v712, %v711
        %729 = vmatprep.subr.bf16.mxu0 0
        %730 = vmatpush1.bf16.msra.mxu0 %v720
        %731 = vmatprep.subr.bf16.mxu0 0
        %732 = vmatpush1.bf16.msra.mxu0 %v719
        %733 = vmatprep.subr.bf16.mxu0 0
        %734 = vmatpush1.bf16.msra.mxu0 %v718
        %735 = vmatprep.subr.bf16.mxu0 0
        %736 = vmatpush1.bf16.msra.mxu0 %v717
        %737 = vmatprep.subr.bf16.mxu0 0
        %738 = vmatpush1.bf16.msra.mxu0 %v716
        %739 = vmatprep.subr.bf16.mxu0 0
        %740 = vmatpush1.bf16.msra.mxu0 %v715
        %741 = vmatprep.subr.bf16.mxu0 0
        %742 = vmatpush1.bf16.msra.mxu0 %v714
        %743 = vmatprep.subr.bf16.mxu0 0
        %744 = vmatpush1.bf16.msra.mxu0 %v713
        %745 = vmatprep.subr.bf16.mxu0 0
        %746 = vmatpush2.bf16.msra.mxu0 0
        %747 = vmatprep.subr.bf16.mxu0 0
        %748 = vmatpush2.bf16.msra.mxu0 0
        %749 = vmatprep.subr.bf16.mxu0 0
        %750 = vmatpush2.bf16.msra.mxu0 0
        %751 = vmatprep.subr.bf16.mxu0 0
        %752 = vmatpush2.bf16.msra.mxu0 0
        %753 = vmatprep.subr.bf16.mxu0 0
        %754 = vmatpush2.bf16.msra.mxu0 0
        %755 = vmatprep.subr.bf16.mxu0 0
        %756 = vmatpush2.bf16.msra.mxu0 0
        %757 = vmatprep.subr.bf16.mxu0 0
        %758 = vmatpush2.bf16.msra.mxu0 0
        %759 = vmatprep.subr.bf16.mxu0 0
        %760 = vmatpush2.bf16.msra.mxu0 0
        %761 = vmatprep.mubr.bf16.mxu0 0
        %762 = vmatmul.mubr.bf16.gmra.mxu0 %v617
        %v763 = vpop.f32.mrf.mxu0
        %v764 = vadd.f32 0.0, %v763
        %v765 = vpop.f32.mrf.mxu0
        %v766 = vpop.f32.mrf.mxu0
        %v767 = vadd.f32 0.0, %v766
        %v768 = vpop.f32.mrf.mxu0
        %769 = vmatprep.mubr.bf16.mxu0 0
        %770 = vmatmul.mubr.bf16.gmra.mxu0 %v618
        %v771 = vpop.f32.mrf.mxu0
        %v772 = vadd.f32 0.0, %v771
        %v773 = vpop.f32.mrf.mxu0
        %v774 = vpop.f32.mrf.mxu0
        %v775 = vadd.f32 0.0, %v774
        %v776 = vpop.f32.mrf.mxu0
        %777 = vmatprep.mubr.bf16.mxu0 0
        %778 = vmatmul.mubr.bf16.gmra.mxu0 %v619
        %v779 = vpop.f32.mrf.mxu0
        %v780 = vadd.f32 0.0, %v779
        %v781 = vpop.f32.mrf.mxu0
        %v782 = vpop.f32.mrf.mxu0
        %v783 = vadd.f32 0.0, %v782
        %v784 = vpop.f32.mrf.mxu0
        %785 = vmatprep.mubr.bf16.mxu0 0
        %786 = vmatmul.mubr.bf16.gmra.mxu0 %v620
        %v787 = vpop.f32.mrf.mxu0
        %v788 = vadd.f32 0.0, %v787
        %v789 = vpop.f32.mrf.mxu0
        %v790 = vpop.f32.mrf.mxu0
        %v791 = vadd.f32 0.0, %v790
        %v792 = vpop.f32.mrf.mxu0
        %793 = vmatprep.mubr.bf16.mxu0 0
        %794 = vmatmul.mubr.bf16.gmra.mxu0 %v621
        %v795 = vpop.f32.mrf.mxu0
        %v796 = vadd.f32 0.0, %v795
        %v797 = vpop.f32.mrf.mxu0
        %v798 = vpop.f32.mrf.mxu0
        %v799 = vadd.f32 0.0, %v798
        %v800 = vpop.f32.mrf.mxu0
        %801 = vmatprep.mubr.bf16.mxu0 0
        %802 = vmatmul.mubr.bf16.gmra.mxu0 %v622
        %v803 = vpop.f32.mrf.mxu0
        %v804 = vadd.f32 0.0, %v803
        %v805 = vpop.f32.mrf.mxu0
        %v806 = vpop.f32.mrf.mxu0
        %v807 = vadd.f32 0.0, %v806
        %v808 = vpop.f32.mrf.mxu0
        %809 = vmatprep.mubr.bf16.mxu0 0
        %810 = vmatmul.mubr.bf16.gmra.mxu0 %v623
        %v811 = vpop.f32.mrf.mxu0
        %v812 = vadd.f32 0.0, %v811
        %v813 = vpop.f32.mrf.mxu0
        %v814 = vpop.f32.mrf.mxu0
        %v815 = vadd.f32 0.0, %v814
        %v816 = vpop.f32.mrf.mxu0
        %817 = vmatprep.mubr.bf16.mxu0 0
        %818 = vmatmul.mubr.bf16.gmra.mxu0 %v624
        %v819 = vpop.f32.mrf.mxu0
        %v820 = vadd.f32 0.0, %v819
        %v821 = vpop.f32.mrf.mxu0
        %v822 = vpop.f32.mrf.mxu0
        %v823 = vadd.f32 0.0, %v822
        %v824 = vpop.f32.mrf.mxu0
        %825 = vmatprep.mubr.bf16.mxu0 0
        %826 = vmatmul.mubr.bf16.gmra.mxu0 %v625
        %v827 = vpop.f32.mrf.mxu0
        %v828 = vadd.f32 0.0, %v827
        %v829 = vpop.f32.mrf.mxu0
        %v830 = vpop.f32.mrf.mxu0
        %v831 = vadd.f32 0.0, %v830
        %v832 = vpop.f32.mrf.mxu0
        %833 = vmatprep.mubr.bf16.mxu0 0
        %834 = vmatmul.mubr.bf16.gmra.mxu0 %v626
        %v835 = vpop.f32.mrf.mxu0
        %v836 = vadd.f32 0.0, %v835
        %v837 = vpop.f32.mrf.mxu0
        %v838 = vpop.f32.mrf.mxu0
        %v839 = vadd.f32 0.0, %v838
        %v840 = vpop.f32.mrf.mxu0
        %841 = vmatprep.mubr.bf16.mxu0 0
        %842 = vmatmul.mubr.bf16.gmra.mxu0 %v627
        %v843 = vpop.f32.mrf.mxu0
        %v844 = vadd.f32 0.0, %v843
        %v845 = vpop.f32.mrf.mxu0
        %v846 = vpop.f32.mrf.mxu0
        %v847 = vadd.f32 0.0, %v846
        %v848 = vpop.f32.mrf.mxu0
        %849 = vmatprep.mubr.bf16.mxu0 0
        %850 = vmatmul.mubr.bf16.gmra.mxu0 %v628
        %v851 = vpop.f32.mrf.mxu0
        %v852 = vadd.f32 0.0, %v851
        %v853 = vpop.f32.mrf.mxu0
        %v854 = vpop.f32.mrf.mxu0
        %v855 = vadd.f32 0.0, %v854
        %v856 = vpop.f32.mrf.mxu0
        %857 = vmatprep.mubr.bf16.mxu0 0
        %858 = vmatmul.mubr.bf16.gmra.mxu0 %v629
        %v859 = vpop.f32.mrf.mxu0
        %v860 = vadd.f32 0.0, %v859
        %v861 = vpop.f32.mrf.mxu0
        %v862 = vpop.f32.mrf.mxu0
        %v863 = vadd.f32 0.0, %v862
        %v864 = vpop.f32.mrf.mxu0
        %865 = vmatprep.mubr.bf16.mxu0 0
        %866 = vmatmul.mubr.bf16.gmra.mxu0 %v630
        %v867 = vpop.f32.mrf.mxu0
        %v868 = vadd.f32 0.0, %v867
        %v869 = vpop.f32.mrf.mxu0
        %v870 = vpop.f32.mrf.mxu0
        %v871 = vadd.f32 0.0, %v870
        %v872 = vpop.f32.mrf.mxu0
        %873 = vmatprep.mubr.bf16.mxu0 0
        %874 = vmatmul.mubr.bf16.gmra.mxu0 %v631
        %v875 = vpop.f32.mrf.mxu0
        %v876 = vadd.f32 0.0, %v875
        %v877 = vpop.f32.mrf.mxu0
        %v878 = vpop.f32.mrf.mxu0
        %v879 = vadd.f32 0.0, %v878
        %v880 = vpop.f32.mrf.mxu0
        %881 = vmatprep.mubr.bf16.mxu0 0
        %882 = vmatmul.mubr.bf16.gmra.mxu0 %v632
        %v883 = vpop.f32.mrf.mxu0
        %v884 = vadd.f32 0.0, %v883
        %v885 = vpop.f32.mrf.mxu0
        %v886 = vpop.f32.mrf.mxu0
        %v887 = vadd.f32 0.0, %v886
        %v888 = vpop.f32.mrf.mxu0
        %889 = vmatprep.mubr.bf16.mxu0 0
        %890 = vmatmul.mubr.bf16.gmra.mxu0 %v633
        %v891 = vpop.f32.mrf.mxu0
        %v892 = vadd.f32 0.0, %v891
        %v893 = vpop.f32.mrf.mxu0
        %v894 = vpop.f32.mrf.mxu0
        %v895 = vadd.f32 0.0, %v894
        %v896 = vpop.f32.mrf.mxu0
        %897 = vmatprep.mubr.bf16.mxu0 0
        %898 = vmatmul.mubr.bf16.gmra.mxu0 %v634
        %v899 = vpop.f32.mrf.mxu0
        %v900 = vadd.f32 0.0, %v899
        %v901 = vpop.f32.mrf.mxu0
        %v902 = vpop.f32.mrf.mxu0
        %v903 = vadd.f32 0.0, %v902
        %v904 = vpop.f32.mrf.mxu0
        %905 = vmatprep.mubr.bf16.mxu0 0
        %906 = vmatmul.mubr.bf16.gmra.mxu0 %v635
        %v907 = vpop.f32.mrf.mxu0
        %v908 = vadd.f32 0.0, %v907
        %v909 = vpop.f32.mrf.mxu0
        %v910 = vpop.f32.mrf.mxu0
        %v911 = vadd.f32 0.0, %v910
        %v912 = vpop.f32.mrf.mxu0
        %913 = vmatprep.mubr.bf16.mxu0 0
        %914 = vmatmul.mubr.bf16.gmra.mxu0 %v636
        %v915 = vpop.f32.mrf.mxu0
        %v916 = vadd.f32 0.0, %v915
        %v917 = vpop.f32.mrf.mxu0
        %v918 = vpop.f32.mrf.mxu0
        %v919 = vadd.f32 0.0, %v918
        %v920 = vpop.f32.mrf.mxu0
        %921 = vmatprep.mubr.bf16.mxu0 0
        %922 = vmatmul.mubr.bf16.gmra.mxu0 %v637
        %v923 = vpop.f32.mrf.mxu0
        %v924 = vadd.f32 0.0, %v923
        %v925 = vpop.f32.mrf.mxu0
        %v926 = vpop.f32.mrf.mxu0
        %v927 = vadd.f32 0.0, %v926
        %v928 = vpop.f32.mrf.mxu0
        %929 = vmatprep.mubr.bf16.mxu0 0
        %930 = vmatmul.mubr.bf16.gmra.mxu0 %v638
        %v931 = vpop.f32.mrf.mxu0
        %v932 = vadd.f32 0.0, %v931
        %v933 = vpop.f32.mrf.mxu0
        %v934 = vpop.f32.mrf.mxu0
        %v935 = vadd.f32 0.0, %v934
        %v936 = vpop.f32.mrf.mxu0
        %937 = vmatprep.mubr.bf16.mxu0 0
        %938 = vmatmul.mubr.bf16.gmra.mxu0 %v639
        %v939 = vpop.f32.mrf.mxu0
        %v940 = vadd.f32 0.0, %v939
        %v941 = vpop.f32.mrf.mxu0
        %v942 = vpop.f32.mrf.mxu0
        %v943 = vadd.f32 0.0, %v942
        %v944 = vpop.f32.mrf.mxu0
        %945 = vmatprep.mubr.bf16.mxu0 0
        %946 = vmatmul.mubr.bf16.gmra.mxu0 %v640
        %v947 = vpop.f32.mrf.mxu0
        %v948 = vadd.f32 0.0, %v947
        %v949 = vpop.f32.mrf.mxu0
        %v950 = vpop.f32.mrf.mxu0
        %v951 = vadd.f32 0.0, %v950
        %v952 = vpop.f32.mrf.mxu0
        %953 = vmatprep.mubr.bf16.mxu0 0
        %954 = vmatmul.mubr.bf16.gmra.mxu0 %v641
        %v955 = vpop.f32.mrf.mxu0
        %v956 = vadd.f32 0.0, %v955
        %v957 = vpop.f32.mrf.mxu0
        %v958 = vpop.f32.mrf.mxu0
        %v959 = vadd.f32 0.0, %v958
        %v960 = vpop.f32.mrf.mxu0
        %961 = vmatprep.mubr.bf16.mxu0 0
        %962 = vmatmul.mubr.bf16.gmra.mxu0 %v642
        %v963 = vpop.f32.mrf.mxu0
        %v964 = vadd.f32 0.0, %v963
        %v965 = vpop.f32.mrf.mxu0
        %v966 = vpop.f32.mrf.mxu0
        %v967 = vadd.f32 0.0, %v966
        %v968 = vpop.f32.mrf.mxu0
        %969 = vmatprep.mubr.bf16.mxu0 0
        %970 = vmatmul.mubr.bf16.gmra.mxu0 %v643
        %v971 = vpop.f32.mrf.mxu0
        %v972 = vadd.f32 0.0, %v971
        %v973 = vpop.f32.mrf.mxu0
        %v974 = vpop.f32.mrf.mxu0
        %v975 = vadd.f32 0.0, %v974
        %v976 = vpop.f32.mrf.mxu0
        %977 = vmatprep.mubr.bf16.mxu0 0
        %978 = vmatmul.mubr.bf16.gmra.mxu0 %v644
        %v979 = vpop.f32.mrf.mxu0
        %v980 = vadd.f32 0.0, %v979
        %v981 = vpop.f32.mrf.mxu0
        %v982 = vpop.f32.mrf.mxu0
        %v983 = vadd.f32 0.0, %v982
        %v984 = vpop.f32.mrf.mxu0
        %985 = vmatprep.mubr.bf16.mxu0 0
        %986 = vmatmul.mubr.bf16.gmra.mxu0 %v645
        %v987 = vpop.f32.mrf.mxu0
        %v988 = vadd.f32 0.0, %v987
        %v989 = vpop.f32.mrf.mxu0
        %v990 = vpop.f32.mrf.mxu0
        %v991 = vadd.f32 0.0, %v990
        %v992 = vpop.f32.mrf.mxu0
        %993 = vmatprep.mubr.bf16.mxu0 0
        %994 = vmatmul.mubr.bf16.gmra.mxu0 %v646
        %v995 = vpop.f32.mrf.mxu0
        %v996 = vadd.f32 0.0, %v995
        %v997 = vpop.f32.mrf.mxu0
        %v998 = vpop.f32.mrf.mxu0
        %v999 = vadd.f32 0.0, %v998
        %v1000 = vpop.f32.mrf.mxu0
        %1001 = vmatprep.mubr.bf16.mxu0 0
        %1002 = vmatmul.mubr.bf16.gmra.mxu0 %v647
        %v1003 = vpop.f32.mrf.mxu0
        %v1004 = vadd.f32 0.0, %v1003
        %v1005 = vpop.f32.mrf.mxu0
        %v1006 = vpop.f32.mrf.mxu0
        %v1007 = vadd.f32 0.0, %v1006
        %v1008 = vpop.f32.mrf.mxu0
        %1009 = vmatprep.mubr.bf16.mxu0 0
        %1010 = vmatmul.mubr.bf16.gmra.mxu0 %v648
        %v1011 = vpop.f32.mrf.mxu0
        %v1012 = vadd.f32 0.0, %v1011
        %v1013 = vpop.f32.mrf.mxu0
        %v1014 = vpop.f32.mrf.mxu0
        %v1015 = vadd.f32 0.0, %v1014
        %v1016 = vpop.f32.mrf.mxu0
        %1017 = vdwg.mxu0
        %v1018 = vadd.f32 %v764, %v767
        %v1019 = vadd.f32 %v1018, %v772
        %v1020 = vadd.f32 %v1019, %v775
        %v1021 = vadd.f32 %v1020, %v780
        %v1022 = vadd.f32 %v1021, %v783
        %v1023 = vadd.f32 %v1022, %v788
        %v1024 = vadd.f32 %v1023, %v791
        %v1025 = vadd.f32 %v1024, %v796
        %v1026 = vadd.f32 %v1025, %v799
        %v1027 = vadd.f32 %v1026, %v804
        %v1028 = vadd.f32 %v1027, %v807
        %v1029 = vadd.f32 %v1028, %v812
        %v1030 = vadd.f32 %v1029, %v815
        %v1031 = vadd.f32 %v1030, %v820
        %v1032 = vadd.f32 %v1031, %v823
        %v1033 = vadd.f32 %v1032, %v828
        %v1034 = vadd.f32 %v1033, %v831
        %v1035 = vadd.f32 %v1034, %v836
        %v1036 = vadd.f32 %v1035, %v839
        %v1037 = vadd.f32 %v1036, %v844
        %v1038 = vadd.f32 %v1037, %v847
        %v1039 = vadd.f32 %v1038, %v852
        %v1040 = vadd.f32 %v1039, %v855
        %v1041 = vadd.f32 %v1040, %v860
        %v1042 = vadd.f32 %v1041, %v863
        %v1043 = vadd.f32 %v1042, %v868
        %v1044 = vadd.f32 %v1043, %v871
        %v1045 = vadd.f32 %v1044, %v876
        %v1046 = vadd.f32 %v1045, %v879
        %v1047 = vadd.f32 %v1046, %v884
        %v1048 = vadd.f32 %v1047, %v887
        %v1049 = vadd.f32 %v1048, %v892
        %v1050 = vadd.f32 %v1049, %v895
        %v1051 = vadd.f32 %v1050, %v900
        %v1052 = vadd.f32 %v1051, %v903
        %v1053 = vadd.f32 %v1052, %v908
        %v1054 = vadd.f32 %v1053, %v911
        %v1055 = vadd.f32 %v1054, %v916
        %v1056 = vadd.f32 %v1055, %v919
        %v1057 = vadd.f32 %v1056, %v924
        %v1058 = vadd.f32 %v1057, %v927
        %v1059 = vadd.f32 %v1058, %v932
        %v1060 = vadd.f32 %v1059, %v935
        %v1061 = vadd.f32 %v1060, %v940
        %v1062 = vadd.f32 %v1061, %v943
        %v1063 = vadd.f32 %v1062, %v948
        %v1064 = vadd.f32 %v1063, %v951
        %v1065 = vadd.f32 %v1064, %v956
        %v1066 = vadd.f32 %v1065, %v959
        %v1067 = vadd.f32 %v1066, %v964
        %v1068 = vadd.f32 %v1067, %v967
        %v1069 = vadd.f32 %v1068, %v972
        %v1070 = vadd.f32 %v1069, %v975
        %v1071 = vadd.f32 %v1070, %v980
        %v1072 = vadd.f32 %v1071, %v983
        %v1073 = vadd.f32 %v1072, %v988
        %v1074 = vadd.f32 %v1073, %v991
        %v1075 = vadd.f32 %v1074, %v996
        %v1076 = vadd.f32 %v1075, %v999
        %v1077 = vadd.f32 %v1076, %v1004
        %v1078 = vadd.f32 %v1077, %v1007
        %v1079 = vadd.f32 %v1078, %v1012
        %v1080 = vadd.f32 %v1079, %v1015
        %v1081 = vrot.slane %v1080, 4
        %v1082 = vadd.f32 %v1080, %v1081
        %v1083 = vrot.slane %v1082, 2
        %v1084 = vadd.f32 %v1082, %v1083
        %v1085 = vrot.slane %v1084, 1
        %v1086 = vadd.f32 %v1084, %v1085
        %v1087 = vrcp.pop 512.0
        %v1088 = vmul.f32 %v1086, %v1087
        %v1089 = vsub.f32 %v764, %v1088
        %v1090 = vsub.f32 %v767, %v1088
        %v1091 = vsub.f32 %v772, %v1088
        %v1092 = vsub.f32 %v775, %v1088
        %v1093 = vsub.f32 %v780, %v1088
        %v1094 = vsub.f32 %v783, %v1088
        %v1095 = vsub.f32 %v788, %v1088
        %v1096 = vsub.f32 %v791, %v1088
        %v1097 = vsub.f32 %v796, %v1088
        %v1098 = vsub.f32 %v799, %v1088
        %v1099 = vsub.f32 %v804, %v1088
        %v1100 = vsub.f32 %v807, %v1088
        %v1101 = vsub.f32 %v812, %v1088
        %v1102 = vsub.f32 %v815, %v1088
        %v1103 = vsub.f32 %v820, %v1088
        %v1104 = vsub.f32 %v823, %v1088
        %v1105 = vsub.f32 %v828, %v1088
        %v1106 = vsub.f32 %v831, %v1088
        %v1107 = vsub.f32 %v836, %v1088
        %v1108 = vsub.f32 %v839, %v1088
        %v1109 = vsub.f32 %v844, %v1088
        %v1110 = vsub.f32 %v847, %v1088
        %v1111 = vsub.f32 %v852, %v1088
        %v1112 = vsub.f32 %v855, %v1088
        %v1113 = vsub.f32 %v860, %v1088
        %v1114 = vsub.f32 %v863, %v1088
        %v1115 = vsub.f32 %v868, %v1088
        %v1116 = vsub.f32 %v871, %v1088
        %v1117 = vsub.f32 %v876, %v1088
        %v1118 = vsub.f32 %v879, %v1088
        %v1119 = vsub.f32 %v884, %v1088
        %v1120 = vsub.f32 %v887, %v1088
        %v1121 = vsub.f32 %v892, %v1088
        %v1122 = vsub.f32 %v895, %v1088
        %v1123 = vsub.f32 %v900, %v1088
        %v1124 = vsub.f32 %v903, %v1088
        %v1125 = vsub.f32 %v908, %v1088
        %v1126 = vsub.f32 %v911, %v1088
        %v1127 = vsub.f32 %v916, %v1088
        %v1128 = vsub.f32 %v919, %v1088
        %v1129 = vsub.f32 %v924, %v1088
        %v1130 = vsub.f32 %v927, %v1088
        %v1131 = vsub.f32 %v932, %v1088
        %v1132 = vsub.f32 %v935, %v1088
        %v1133 = vsub.f32 %v940, %v1088
        %v1134 = vsub.f32 %v943, %v1088
        %v1135 = vsub.f32 %v948, %v1088
        %v1136 = vsub.f32 %v951, %v1088
        %v1137 = vsub.f32 %v956, %v1088
        %v1138 = vsub.f32 %v959, %v1088
        %v1139 = vsub.f32 %v964, %v1088
        %v1140 = vsub.f32 %v967, %v1088
        %v1141 = vsub.f32 %v972, %v1088
        %v1142 = vsub.f32 %v975, %v1088
        %v1143 = vsub.f32 %v980, %v1088
        %v1144 = vsub.f32 %v983, %v1088
        %v1145 = vsub.f32 %v988, %v1088
        %v1146 = vsub.f32 %v991, %v1088
        %v1147 = vsub.f32 %v996, %v1088
        %v1148 = vsub.f32 %v999, %v1088
        %v1149 = vsub.f32 %v1004, %v1088
        %v1150 = vsub.f32 %v1007, %v1088
        %v1151 = vsub.f32 %v1012, %v1088
        %v1152 = vsub.f32 %v1015, %v1088
        %v1153 = vmul.f32 %v1089, %v1089
        %v1154 = vmul.f32 %v1090, %v1090
        %v1155 = vmul.f32 %v1091, %v1091
        %v1156 = vmul.f32 %v1092, %v1092
        %v1157 = vmul.f32 %v1093, %v1093
        %v1158 = vmul.f32 %v1094, %v1094
        %v1159 = vmul.f32 %v1095, %v1095
        %v1160 = vmul.f32 %v1096, %v1096
        %v1161 = vmul.f32 %v1097, %v1097
        %v1162 = vmul.f32 %v1098, %v1098
        %v1163 = vmul.f32 %v1099, %v1099
        %v1164 = vmul.f32 %v1100, %v1100
        %v1165 = vmul.f32 %v1101, %v1101
        %v1166 = vmul.f32 %v1102, %v1102
        %v1167 = vmul.f32 %v1103, %v1103
        %v1168 = vmul.f32 %v1104, %v1104
        %v1169 = vmul.f32 %v1105, %v1105
        %v1170 = vmul.f32 %v1106, %v1106
        %v1171 = vmul.f32 %v1107, %v1107
        %v1172 = vmul.f32 %v1108, %v1108
        %v1173 = vmul.f32 %v1109, %v1109
        %v1174 = vmul.f32 %v1110, %v1110
        %v1175 = vmul.f32 %v1111, %v1111
        %v1176 = vmul.f32 %v1112, %v1112
        %v1177 = vmul.f32 %v1113, %v1113
        %v1178 = vmul.f32 %v1114, %v1114
        %v1179 = vmul.f32 %v1115, %v1115
        %v1180 = vmul.f32 %v1116, %v1116
        %v1181 = vmul.f32 %v1117, %v1117
        %v1182 = vmul.f32 %v1118, %v1118
        %v1183 = vmul.f32 %v1119, %v1119
        %v1184 = vmul.f32 %v1120, %v1120
        %v1185 = vmul.f32 %v1121, %v1121
        %v1186 = vmul.f32 %v1122, %v1122
        %v1187 = vmul.f32 %v1123, %v1123
        %v1188 = vmul.f32 %v1124, %v1124
        %v1189 = vmul.f32 %v1125, %v1125
        %v1190 = vmul.f32 %v1126, %v1126
        %v1191 = vmul.f32 %v1127, %v1127
        %v1192 = vmul.f32 %v1128, %v1128
        %v1193 = vmul.f32 %v1129, %v1129
        %v1194 = vmul.f32 %v1130, %v1130
        %v1195 = vmul.f32 %v1131, %v1131
        %v1196 = vmul.f32 %v1132, %v1132
        %v1197 = vmul.f32 %v1133, %v1133
        %v1198 = vmul.f32 %v1134, %v1134
        %v1199 = vmul.f32 %v1135, %v1135
        %v1200 = vmul.f32 %v1136, %v1136
        %v1201 = vmul.f32 %v1137, %v1137
        %v1202 = vmul.f32 %v1138, %v1138
        %v1203 = vmul.f32 %v1139, %v1139
        %v1204 = vmul.f32 %v1140, %v1140
        %v1205 = vmul.f32 %v1141, %v1141
        %v1206 = vmul.f32 %v1142, %v1142
        %v1207 = vmul.f32 %v1143, %v1143
        %v1208 = vmul.f32 %v1144, %v1144
        %v1209 = vmul.f32 %v1145, %v1145
        %v1210 = vmul.f32 %v1146, %v1146
        %v1211 = vmul.f32 %v1147, %v1147
        %v1212 = vmul.f32 %v1148, %v1148
        %v1213 = vmul.f32 %v1149, %v1149
        %v1214 = vmul.f32 %v1150, %v1150
        %v1215 = vmul.f32 %v1151, %v1151
        %v1216 = vmul.f32 %v1152, %v1152
        %v1217 = vadd.f32 %v1153, %v1154
        %v1218 = vadd.f32 %v1217, %v1155
        %v1219 = vadd.f32 %v1218, %v1156
        %v1220 = vadd.f32 %v1219, %v1157
        %v1221 = vadd.f32 %v1220, %v1158
        %v1222 = vadd.f32 %v1221, %v1159
        %v1223 = vadd.f32 %v1222, %v1160
        %v1224 = vadd.f32 %v1223, %v1161
        %v1225 = vadd.f32 %v1224, %v1162
        %v1226 = vadd.f32 %v1225, %v1163
        %v1227 = vadd.f32 %v1226, %v1164
        %v1228 = vadd.f32 %v1227, %v1165
        %v1229 = vadd.f32 %v1228, %v1166
        %v1230 = vadd.f32 %v1229, %v1167
        %v1231 = vadd.f32 %v1230, %v1168
        %v1232 = vadd.f32 %v1231, %v1169
        %v1233 = vadd.f32 %v1232, %v1170
        %v1234 = vadd.f32 %v1233, %v1171
        %v1235 = vadd.f32 %v1234, %v1172
        %v1236 = vadd.f32 %v1235, %v1173
        %v1237 = vadd.f32 %v1236, %v1174
        %v1238 = vadd.f32 %v1237, %v1175
        %v1239 = vadd.f32 %v1238, %v1176
        %v1240 = vadd.f32 %v1239, %v1177
        %v1241 = vadd.f32 %v1240, %v1178
        %v1242 = vadd.f32 %v1241, %v1179
        %v1243 = vadd.f32 %v1242, %v1180
        %v1244 = vadd.f32 %v1243, %v1181
        %v1245 = vadd.f32 %v1244, %v1182
        %v1246 = vadd.f32 %v1245, %v1183
        %v1247 = vadd.f32 %v1246, %v1184
        %v1248 = vadd.f32 %v1247, %v1185
        %v1249 = vadd.f32 %v1248, %v1186
        %v1250 = vadd.f32 %v1249, %v1187
        %v1251 = vadd.f32 %v1250, %v1188
        %v1252 = vadd.f32 %v1251, %v1189
        %v1253 = vadd.f32 %v1252, %v1190
        %v1254 = vadd.f32 %v1253, %v1191
        %v1255 = vadd.f32 %v1254, %v1192
        %v1256 = vadd.f32 %v1255, %v1193
        %v1257 = vadd.f32 %v1256, %v1194
        %v1258 = vadd.f32 %v1257, %v1195
        %v1259 = vadd.f32 %v1258, %v1196
        %v1260 = vadd.f32 %v1259, %v1197
        %v1261 = vadd.f32 %v1260, %v1198
        %v1262 = vadd.f32 %v1261, %v1199
        %v1263 = vadd.f32 %v1262, %v1200
        %v1264 = vadd.f32 %v1263, %v1201
        %v1265 = vadd.f32 %v1264, %v1202
        %v1266 = vadd.f32 %v1265, %v1203
        %v1267 = vadd.f32 %v1266, %v1204
        %v1268 = vadd.f32 %v1267, %v1205
        %v1269 = vadd.f32 %v1268, %v1206
        %v1270 = vadd.f32 %v1269, %v1207
        %v1271 = vadd.f32 %v1270, %v1208
        %v1272 = vadd.f32 %v1271, %v1209
        %v1273 = vadd.f32 %v1272, %v1210
        %v1274 = vadd.f32 %v1273, %v1211
        %v1275 = vadd.f32 %v1274, %v1212
        %v1276 = vadd.f32 %v1275, %v1213
        %v1277 = vadd.f32 %v1276, %v1214
        %v1278 = vadd.f32 %v1277, %v1215
        %v1279 = vadd.f32 %v1278, %v1216
        %v1280 = vrot.slane %v1279, 4
        %v1281 = vadd.f32 %v1279, %v1280
        %v1282 = vrot.slane %v1281, 2
        %v1283 = vadd.f32 %v1281, %v1282
        %v1284 = vrot.slane %v1283, 1
        %v1285 = vadd.f32 %v1283, %v1284
        %v1286 = vmul.f32 %v1285, %v1087
        %v1287 = vadd.f32 %v1286, 1e-05
        %v1288 = vrsqrt.pop %v1287
        %v1289 = vmul.f32 %v1089, %v1288
        %v1290 = vmul.f32 %v1090, %v1288
        %v1291 = vmul.f32 %v1091, %v1288
        %v1292 = vmul.f32 %v1092, %v1288
        %v1293 = vmul.f32 %v1093, %v1288
        %v1294 = vmul.f32 %v1094, %v1288
        %v1295 = vmul.f32 %v1095, %v1288
        %v1296 = vmul.f32 %v1096, %v1288
        %v1297 = vmul.f32 %v1097, %v1288
        %v1298 = vmul.f32 %v1098, %v1288
        %v1299 = vmul.f32 %v1099, %v1288
        %v1300 = vmul.f32 %v1100, %v1288
        %v1301 = vmul.f32 %v1101, %v1288
        %v1302 = vmul.f32 %v1102, %v1288
        %v1303 = vmul.f32 %v1103, %v1288
        %v1304 = vmul.f32 %v1104, %v1288
        %v1305 = vmul.f32 %v1105, %v1288
        %v1306 = vmul.f32 %v1106, %v1288
        %v1307 = vmul.f32 %v1107, %v1288
        %v1308 = vmul.f32 %v1108, %v1288
        %v1309 = vmul.f32 %v1109, %v1288
        %v1310 = vmul.f32 %v1110, %v1288
        %v1311 = vmul.f32 %v1111, %v1288
        %v1312 = vmul.f32 %v1112, %v1288
        %v1313 = vmul.f32 %v1113, %v1288
        %v1314 = vmul.f32 %v1114, %v1288
        %v1315 = vmul.f32 %v1115, %v1288
        %v1316 = vmul.f32 %v1116, %v1288
        %v1317 = vmul.f32 %v1117, %v1288
        %v1318 = vmul.f32 %v1118, %v1288
        %v1319 = vmul.f32 %v1119, %v1288
        %v1320 = vmul.f32 %v1120, %v1288
        %v1321 = vmul.f32 %v1121, %v1288
        %v1322 = vmul.f32 %v1122, %v1288
        %v1323 = vmul.f32 %v1123, %v1288
        %v1324 = vmul.f32 %v1124, %v1288
        %v1325 = vmul.f32 %v1125, %v1288
        %v1326 = vmul.f32 %v1126, %v1288
        %v1327 = vmul.f32 %v1127, %v1288
        %v1328 = vmul.f32 %v1128, %v1288
        %v1329 = vmul.f32 %v1129, %v1288
        %v1330 = vmul.f32 %v1130, %v1288
        %v1331 = vmul.f32 %v1131, %v1288
        %v1332 = vmul.f32 %v1132, %v1288
        %v1333 = vmul.f32 %v1133, %v1288
        %v1334 = vmul.f32 %v1134, %v1288
        %v1335 = vmul.f32 %v1135, %v1288
        %v1336 = vmul.f32 %v1136, %v1288
        %v1337 = vmul.f32 %v1137, %v1288
        %v1338 = vmul.f32 %v1138, %v1288
        %v1339 = vmul.f32 %v1139, %v1288
        %v1340 = vmul.f32 %v1140, %v1288
        %v1341 = vmul.f32 %v1141, %v1288
        %v1342 = vmul.f32 %v1142, %v1288
        %v1343 = vmul.f32 %v1143, %v1288
        %v1344 = vmul.f32 %v1144, %v1288
        %v1345 = vmul.f32 %v1145, %v1288
        %v1346 = vmul.f32 %v1146, %v1288
        %v1347 = vmul.f32 %v1147, %v1288
        %v1348 = vmul.f32 %v1148, %v1288
        %v1349 = vmul.f32 %v1149, %v1288
        %v1350 = vmul.f32 %v1150, %v1288
        %v1351 = vmul.f32 %v1151, %v1288
        %v1352 = vmul.f32 %v1152, %v1288
        %v1353 = vld [vmem:[%s2] sm:$0x1]
        %v1355 = vlaneseq
        %v1356 = vshrl.u32 %v1355, 7
        %v1357 = vsub.s32 0, %v1356
        %v1358 = vrot.slane %v1353, %v1357
        %v1360 = vmul.f32 %v1289, %v1358
        %v1361 = vmul.f32 %v1290, %v1358
        %v1362 = vmul.f32 %v1291, %v1358
        %v1363 = vmul.f32 %v1292, %v1358
        %v1364 = vmul.f32 %v1293, %v1358
        %v1365 = vmul.f32 %v1294, %v1358
        %v1366 = vmul.f32 %v1295, %v1358
        %v1367 = vmul.f32 %v1296, %v1358
        %v1368 = vmul.f32 %v1297, %v1358
        %v1369 = vmul.f32 %v1298, %v1358
        %v1370 = vmul.f32 %v1299, %v1358
        %v1371 = vmul.f32 %v1300, %v1358
        %v1372 = vmul.f32 %v1301, %v1358
        %v1373 = vmul.f32 %v1302, %v1358
        %v1374 = vmul.f32 %v1303, %v1358
        %v1375 = vmul.f32 %v1304, %v1358
        %v1376 = vmul.f32 %v1305, %v1358
        %v1377 = vmul.f32 %v1306, %v1358
        %v1378 = vmul.f32 %v1307, %v1358
        %v1379 = vmul.f32 %v1308, %v1358
        %v1380 = vmul.f32 %v1309, %v1358
        %v1381 = vmul.f32 %v1310, %v1358
        %v1382 = vmul.f32 %v1311, %v1358
        %v1383 = vmul.f32 %v1312, %v1358
        %v1384 = vmul.f32 %v1313, %v1358
        %v1385 = vmul.f32 %v1314, %v1358
        %v1386 = vmul.f32 %v1315, %v1358
        %v1387 = vmul.f32 %v1316, %v1358
        %v1388 = vmul.f32 %v1317, %v1358
        %v1389 = vmul.f32 %v1318, %v1358
        %v1390 = vmul.f32 %v1319, %v1358
        %v1391 = vmul.f32 %v1320, %v1358
        %v1392 = vmul.f32 %v1321, %v1358
        %v1393 = vmul.f32 %v1322, %v1358
        %v1394 = vmul.f32 %v1323, %v1358
        %v1395 = vmul.f32 %v1324, %v1358
        %v1396 = vmul.f32 %v1325, %v1358
        %v1397 = vmul.f32 %v1326, %v1358
        %v1398 = vmul.f32 %v1327, %v1358
        %v1399 = vmul.f32 %v1328, %v1358
        %v1400 = vmul.f32 %v1329, %v1358
        %v1401 = vmul.f32 %v1330, %v1358
        %v1402 = vmul.f32 %v1331, %v1358
        %v1403 = vmul.f32 %v1332, %v1358
        %v1404 = vmul.f32 %v1333, %v1358
        %v1405 = vmul.f32 %v1334, %v1358
        %v1406 = vmul.f32 %v1335, %v1358
        %v1407 = vmul.f32 %v1336, %v1358
        %v1408 = vmul.f32 %v1337, %v1358
        %v1409 = vmul.f32 %v1338, %v1358
        %v1410 = vmul.f32 %v1339, %v1358
        %v1411 = vmul.f32 %v1340, %v1358
        %v1412 = vmul.f32 %v1341, %v1358
        %v1413 = vmul.f32 %v1342, %v1358
        %v1414 = vmul.f32 %v1343, %v1358
        %v1415 = vmul.f32 %v1344, %v1358
        %v1416 = vmul.f32 %v1345, %v1358
        %v1417 = vmul.f32 %v1346, %v1358
        %v1418 = vmul.f32 %v1347, %v1358
        %v1419 = vmul.f32 %v1348, %v1358
        %v1420 = vmul.f32 %v1349, %v1358
        %v1421 = vmul.f32 %v1350, %v1358
        %v1422 = vmul.f32 %v1351, %v1358
        %v1423 = vmul.f32 %v1352, %v1358
        %v1424 = vld [vmem:[#allocation2] sm:$0xff]
        %v1425 = vld [vmem:[#allocation2 + $0x8] sm:$0xff]
        %v1426 = vld [vmem:[#allocation2 + $0x10] sm:$0xff]
        %v1427 = vld [vmem:[#allocation2 + $0x18] sm:$0xff]
        %v1428 = vld [vmem:[#allocation2 + $0x20] sm:$0xff]
        %v1429 = vld [vmem:[#allocation2 + $0x28] sm:$0xff]
        %v1430 = vld [vmem:[#allocation2 + $0x30] sm:$0xff]
        %v1431 = vld [vmem:[#allocation2 + $0x38] sm:$0xff]
        %v1432 = vld [vmem:[#allocation2 + $0x40] sm:$0xff]
        %v1433 = vld [vmem:[#allocation2 + $0x48] sm:$0xff]
        %v1434 = vld [vmem:[#allocation2 + $0x50] sm:$0xff]
        %v1435 = vld [vmem:[#allocation2 + $0x58] sm:$0xff]
        %v1436 = vld [vmem:[#allocation2 + $0x60] sm:$0xff]
        %v1437 = vld [vmem:[#allocation2 + $0x68] sm:$0xff]
        %v1438 = vld [vmem:[#allocation2 + $0x70] sm:$0xff]
        %v1439 = vld [vmem:[#allocation2 + $0x78] sm:$0xff]
        %v1440 = vld [vmem:[#allocation2 + $0x80] sm:$0xff]
        %v1441 = vld [vmem:[#allocation2 + $0x88] sm:$0xff]
        %v1442 = vld [vmem:[#allocation2 + $0x90] sm:$0xff]
        %v1443 = vld [vmem:[#allocation2 + $0x98] sm:$0xff]
        %v1444 = vld [vmem:[#allocation2 + $0xa0] sm:$0xff]
        %v1445 = vld [vmem:[#allocation2 + $0xa8] sm:$0xff]
        %v1446 = vld [vmem:[#allocation2 + $0xb0] sm:$0xff]
        %v1447 = vld [vmem:[#allocation2 + $0xb8] sm:$0xff]
        %v1448 = vld [vmem:[#allocation2 + $0xc0] sm:$0xff]
        %v1449 = vld [vmem:[#allocation2 + $0xc8] sm:$0xff]
        %v1450 = vld [vmem:[#allocation2 + $0xd0] sm:$0xff]
        %v1451 = vld [vmem:[#allocation2 + $0xd8] sm:$0xff]
        %v1452 = vld [vmem:[#allocation2 + $0xe0] sm:$0xff]
        %v1453 = vld [vmem:[#allocation2 + $0xe8] sm:$0xff]
        %v1454 = vld [vmem:[#allocation2 + $0xf0] sm:$0xff]
        %v1455 = vld [vmem:[#allocation2 + $0xf8] sm:$0xff]
        %v1456 = vld [vmem:[#allocation2 + $0x100] sm:$0xff]
        %v1457 = vld [vmem:[#allocation2 + $0x108] sm:$0xff]
        %v1458 = vld [vmem:[#allocation2 + $0x110] sm:$0xff]
        %v1459 = vld [vmem:[#allocation2 + $0x118] sm:$0xff]
        %v1460 = vld [vmem:[#allocation2 + $0x120] sm:$0xff]
        %v1461 = vld [vmem:[#allocation2 + $0x128] sm:$0xff]
        %v1462 = vld [vmem:[#allocation2 + $0x130] sm:$0xff]
        %v1463 = vld [vmem:[#allocation2 + $0x138] sm:$0xff]
        %v1464 = vld [vmem:[#allocation2 + $0x140] sm:$0xff]
        %v1465 = vld [vmem:[#allocation2 + $0x148] sm:$0xff]
        %v1466 = vld [vmem:[#allocation2 + $0x150] sm:$0xff]
        %v1467 = vld [vmem:[#allocation2 + $0x158] sm:$0xff]
        %v1468 = vld [vmem:[#allocation2 + $0x160] sm:$0xff]
        %v1469 = vld [vmem:[#allocation2 + $0x168] sm:$0xff]
        %v1470 = vld [vmem:[#allocation2 + $0x170] sm:$0xff]
        %v1471 = vld [vmem:[#allocation2 + $0x178] sm:$0xff]
        %v1472 = vld [vmem:[#allocation2 + $0x180] sm:$0xff]
        %v1473 = vld [vmem:[#allocation2 + $0x188] sm:$0xff]
        %v1474 = vld [vmem:[#allocation2 + $0x190] sm:$0xff]
        %v1475 = vld [vmem:[#allocation2 + $0x198] sm:$0xff]
        %v1476 = vld [vmem:[#allocation2 + $0x1a0] sm:$0xff]
        %v1477 = vld [vmem:[#allocation2 + $0x1a8] sm:$0xff]
        %v1478 = vld [vmem:[#allocation2 + $0x1b0] sm:$0xff]
        %v1479 = vld [vmem:[#allocation2 + $0x1b8] sm:$0xff]
        %v1480 = vld [vmem:[#allocation2 + $0x1c0] sm:$0xff]
        %v1481 = vld [vmem:[#allocation2 + $0x1c8] sm:$0xff]
        %v1482 = vld [vmem:[#allocation2 + $0x1d0] sm:$0xff]
        %v1483 = vld [vmem:[#allocation2 + $0x1d8] sm:$0xff]
        %v1484 = vld [vmem:[#allocation2 + $0x1e0] sm:$0xff]
        %v1485 = vld [vmem:[#allocation2 + $0x1e8] sm:$0xff]
        %v1486 = vld [vmem:[#allocation2 + $0x1f0] sm:$0xff]
        %v1487 = vld [vmem:[#allocation2 + $0x1f8] sm:$0xff]
        %v1488 = vld [vmem:[#allocation4] sm:$0xff]
        %v1489 = vld [vmem:[#allocation4 + $0x8] sm:$0xff]
        %v1490 = vld [vmem:[#allocation4 + $0x10] sm:$0xff]
        %v1491 = vld [vmem:[#allocation4 + $0x18] sm:$0xff]
        %v1492 = vld [vmem:[#allocation4 + $0x20] sm:$0xff]
        %v1493 = vld [vmem:[#allocation4 + $0x28] sm:$0xff]
        %v1494 = vld [vmem:[#allocation4 + $0x30] sm:$0xff]
        %v1495 = vld [vmem:[#allocation4 + $0x38] sm:$0xff]
        %v1496 = vld [vmem:[#allocation4 + $0x40] sm:$0xff]
        %v1497 = vld [vmem:[#allocation4 + $0x48] sm:$0xff]
        %v1498 = vld [vmem:[#allocation4 + $0x50] sm:$0xff]
        %v1499 = vld [vmem:[#allocation4 + $0x58] sm:$0xff]
        %v1500 = vld [vmem:[#allocation4 + $0x60] sm:$0xff]
        %v1501 = vld [vmem:[#allocation4 + $0x68] sm:$0xff]
        %v1502 = vld [vmem:[#allocation4 + $0x70] sm:$0xff]
        %v1503 = vld [vmem:[#allocation4 + $0x78] sm:$0xff]
        %v1504 = vld [vmem:[#allocation4 + $0x80] sm:$0xff]
        %v1505 = vld [vmem:[#allocation4 + $0x88] sm:$0xff]
        %v1506 = vld [vmem:[#allocation4 + $0x90] sm:$0xff]
        %v1507 = vld [vmem:[#allocation4 + $0x98] sm:$0xff]
        %v1508 = vld [vmem:[#allocation4 + $0xa0] sm:$0xff]
        %v1509 = vld [vmem:[#allocation4 + $0xa8] sm:$0xff]
        %v1510 = vld [vmem:[#allocation4 + $0xb0] sm:$0xff]
        %v1511 = vld [vmem:[#allocation4 + $0xb8] sm:$0xff]
        %v1512 = vld [vmem:[#allocation4 + $0xc0] sm:$0xff]
        %v1513 = vld [vmem:[#allocation4 + $0xc8] sm:$0xff]
        %v1514 = vld [vmem:[#allocation4 + $0xd0] sm:$0xff]
        %v1515 = vld [vmem:[#allocation4 + $0xd8] sm:$0xff]
        %v1516 = vld [vmem:[#allocation4 + $0xe0] sm:$0xff]
        %v1517 = vld [vmem:[#allocation4 + $0xe8] sm:$0xff]
        %v1518 = vld [vmem:[#allocation4 + $0xf0] sm:$0xff]
        %v1519 = vld [vmem:[#allocation4 + $0xf8] sm:$0xff]
        %v1520 = vld [vmem:[#allocation4 + $0x100] sm:$0xff]
        %v1521 = vld [vmem:[#allocation4 + $0x108] sm:$0xff]
        %v1522 = vld [vmem:[#allocation4 + $0x110] sm:$0xff]
        %v1523 = vld [vmem:[#allocation4 + $0x118] sm:$0xff]
        %v1524 = vld [vmem:[#allocation4 + $0x120] sm:$0xff]
        %v1525 = vld [vmem:[#allocation4 + $0x128] sm:$0xff]
        %v1526 = vld [vmem:[#allocation4 + $0x130] sm:$0xff]
        %v1527 = vld [vmem:[#allocation4 + $0x138] sm:$0xff]
        %v1528 = vld [vmem:[#allocation4 + $0x140] sm:$0xff]
        %v1529 = vld [vmem:[#allocation4 + $0x148] sm:$0xff]
        %v1530 = vld [vmem:[#allocation4 + $0x150] sm:$0xff]
        %v1531 = vld [vmem:[#allocation4 + $0x158] sm:$0xff]
        %v1532 = vld [vmem:[#allocation4 + $0x160] sm:$0xff]
        %v1533 = vld [vmem:[#allocation4 + $0x168] sm:$0xff]
        %v1534 = vld [vmem:[#allocation4 + $0x170] sm:$0xff]
        %v1535 = vld [vmem:[#allocation4 + $0x178] sm:$0xff]
        %v1536 = vld [vmem:[#allocation4 + $0x180] sm:$0xff]
        %v1537 = vld [vmem:[#allocation4 + $0x188] sm:$0xff]
        %v1538 = vld [vmem:[#allocation4 + $0x190] sm:$0xff]
        %v1539 = vld [vmem:[#allocation4 + $0x198] sm:$0xff]
        %v1540 = vld [vmem:[#allocation4 + $0x1a0] sm:$0xff]
        %v1541 = vld [vmem:[#allocation4 + $0x1a8] sm:$0xff]
        %v1542 = vld [vmem:[#allocation4 + $0x1b0] sm:$0xff]
        %v1543 = vld [vmem:[#allocation4 + $0x1b8] sm:$0xff]
        %v1544 = vld [vmem:[#allocation4 + $0x1c0] sm:$0xff]
        %v1545 = vld [vmem:[#allocation4 + $0x1c8] sm:$0xff]
        %v1546 = vld [vmem:[#allocation4 + $0x1d0] sm:$0xff]
        %v1547 = vld [vmem:[#allocation4 + $0x1d8] sm:$0xff]
        %v1548 = vld [vmem:[#allocation4 + $0x1e0] sm:$0xff]
        %v1549 = vld [vmem:[#allocation4 + $0x1e8] sm:$0xff]
        %v1550 = vld [vmem:[#allocation4 + $0x1f0] sm:$0xff]
        %v1551 = vld [vmem:[#allocation4 + $0x1f8] sm:$0xff]
        %v1552 = vld [vmem:[%s4] sm:$0x1]
        %v1553 = vld [vmem:[%s3] sm:$0x1]
        %v1554 = vsub.f32 1.0, %v1488
        %v1555 = vsub.f32 1.0, %v1489
        %v1556 = vsub.f32 1.0, %v1490
        %v1557 = vsub.f32 1.0, %v1491
        %v1558 = vsub.f32 1.0, %v1492
        %v1559 = vsub.f32 1.0, %v1493
        %v1560 = vsub.f32 1.0, %v1494
        %v1561 = vsub.f32 1.0, %v1495
        %v1562 = vsub.f32 1.0, %v1496
        %v1563 = vsub.f32 1.0, %v1497
        %v1564 = vsub.f32 1.0, %v1498
        %v1565 = vsub.f32 1.0, %v1499
        %v1566 = vsub.f32 1.0, %v1500
        %v1567 = vsub.f32 1.0, %v1501
        %v1568 = vsub.f32 1.0, %v1502
        %v1569 = vsub.f32 1.0, %v1503
        %v1570 = vsub.f32 1.0, %v1504
        %v1571 = vsub.f32 1.0, %v1505
        %v1572 = vsub.f32 1.0, %v1506
        %v1573 = vsub.f32 1.0, %v1507
        %v1574 = vsub.f32 1.0, %v1508
        %v1575 = vsub.f32 1.0, %v1509
        %v1576 = vsub.f32 1.0, %v1510
        %v1577 = vsub.f32 1.0, %v1511
        %v1578 = vsub.f32 1.0, %v1512
        %v1579 = vsub.f32 1.0, %v1513
        %v1580 = vsub.f32 1.0, %v1514
        %v1581 = vsub.f32 1.0, %v1515
        %v1582 = vsub.f32 1.0, %v1516
        %v1583 = vsub.f32 1.0, %v1517
        %v1584 = vsub.f32 1.0, %v1518
        %v1585 = vsub.f32 1.0, %v1519
        %v1586 = vsub.f32 1.0, %v1520
        %v1587 = vsub.f32 1.0, %v1521
        %v1588 = vsub.f32 1.0, %v1522
        %v1589 = vsub.f32 1.0, %v1523
        %v1590 = vsub.f32 1.0, %v1524
        %v1591 = vsub.f32 1.0, %v1525
        %v1592 = vsub.f32 1.0, %v1526
        %v1593 = vsub.f32 1.0, %v1527
        %v1594 = vsub.f32 1.0, %v1528
        %v1595 = vsub.f32 1.0, %v1529
        %v1596 = vsub.f32 1.0, %v1530
        %v1597 = vsub.f32 1.0, %v1531
        %v1598 = vsub.f32 1.0, %v1532
        %v1599 = vsub.f32 1.0, %v1533
        %v1600 = vsub.f32 1.0, %v1534
        %v1601 = vsub.f32 1.0, %v1535
        %v1602 = vsub.f32 1.0, %v1536
        %v1603 = vsub.f32 1.0, %v1537
        %v1604 = vsub.f32 1.0, %v1538
        %v1605 = vsub.f32 1.0, %v1539
        %v1606 = vsub.f32 1.0, %v1540
        %v1607 = vsub.f32 1.0, %v1541
        %v1608 = vsub.f32 1.0, %v1542
        %v1609 = vsub.f32 1.0, %v1543
        %v1610 = vsub.f32 1.0, %v1544
        %v1611 = vsub.f32 1.0, %v1545
        %v1612 = vsub.f32 1.0, %v1546
        %v1613 = vsub.f32 1.0, %v1547
        %v1614 = vsub.f32 1.0, %v1548
        %v1615 = vsub.f32 1.0, %v1549
        %v1616 = vsub.f32 1.0, %v1550
        %v1617 = vsub.f32 1.0, %v1551
        %v1618 = vmul.f32 %v1424, %v1554
        %v1619 = vmul.f32 %v1425, %v1555
        %v1620 = vmul.f32 %v1426, %v1556
        %v1621 = vmul.f32 %v1427, %v1557
        %v1622 = vmul.f32 %v1428, %v1558
        %v1623 = vmul.f32 %v1429, %v1559
        %v1624 = vmul.f32 %v1430, %v1560
        %v1625 = vmul.f32 %v1431, %v1561
        %v1626 = vmul.f32 %v1432, %v1562
        %v1627 = vmul.f32 %v1433, %v1563
        %v1628 = vmul.f32 %v1434, %v1564
        %v1629 = vmul.f32 %v1435, %v1565
        %v1630 = vmul.f32 %v1436, %v1566
        %v1631 = vmul.f32 %v1437, %v1567
        %v1632 = vmul.f32 %v1438, %v1568
        %v1633 = vmul.f32 %v1439, %v1569
        %v1634 = vmul.f32 %v1440, %v1570
        %v1635 = vmul.f32 %v1441, %v1571
        %v1636 = vmul.f32 %v1442, %v1572
        %v1637 = vmul.f32 %v1443, %v1573
        %v1638 = vmul.f32 %v1444, %v1574
        %v1639 = vmul.f32 %v1445, %v1575
        %v1640 = vmul.f32 %v1446, %v1576
        %v1641 = vmul.f32 %v1447, %v1577
        %v1642 = vmul.f32 %v1448, %v1578
        %v1643 = vmul.f32 %v1449, %v1579
        %v1644 = vmul.f32 %v1450, %v1580
        %v1645 = vmul.f32 %v1451, %v1581
        %v1646 = vmul.f32 %v1452, %v1582
        %v1647 = vmul.f32 %v1453, %v1583
        %v1648 = vmul.f32 %v1454, %v1584
        %v1649 = vmul.f32 %v1455, %v1585
        %v1650 = vmul.f32 %v1456, %v1586
        %v1651 = vmul.f32 %v1457, %v1587
        %v1652 = vmul.f32 %v1458, %v1588
        %v1653 = vmul.f32 %v1459, %v1589
        %v1654 = vmul.f32 %v1460, %v1590
        %v1655 = vmul.f32 %v1461, %v1591
        %v1656 = vmul.f32 %v1462, %v1592
        %v1657 = vmul.f32 %v1463, %v1593
        %v1658 = vmul.f32 %v1464, %v1594
        %v1659 = vmul.f32 %v1465, %v1595
        %v1660 = vmul.f32 %v1466, %v1596
        %v1661 = vmul.f32 %v1467, %v1597
        %v1662 = vmul.f32 %v1468, %v1598
        %v1663 = vmul.f32 %v1469, %v1599
        %v1664 = vmul.f32 %v1470, %v1600
        %v1665 = vmul.f32 %v1471, %v1601
        %v1666 = vmul.f32 %v1472, %v1602
        %v1667 = vmul.f32 %v1473, %v1603
        %v1668 = vmul.f32 %v1474, %v1604
        %v1669 = vmul.f32 %v1475, %v1605
        %v1670 = vmul.f32 %v1476, %v1606
        %v1671 = vmul.f32 %v1477, %v1607
        %v1672 = vmul.f32 %v1478, %v1608
        %v1673 = vmul.f32 %v1479, %v1609
        %v1674 = vmul.f32 %v1480, %v1610
        %v1675 = vmul.f32 %v1481, %v1611
        %v1676 = vmul.f32 %v1482, %v1612
        %v1677 = vmul.f32 %v1483, %v1613
        %v1678 = vmul.f32 %v1484, %v1614
        %v1679 = vmul.f32 %v1485, %v1615
        %v1680 = vmul.f32 %v1486, %v1616
        %v1681 = vmul.f32 %v1487, %v1617
        %v1683 = vlaneseq
        %v1684 = vshrl.u32 %v1683, 7
        %v1685 = vsub.s32 0, %v1684
        %v1686 = vrot.slane %v1552, %v1685
        %v1688 = vmul.f32 %v1618, %v1686
        %v1689 = vmul.f32 %v1619, %v1686
        %v1690 = vmul.f32 %v1620, %v1686
        %v1691 = vmul.f32 %v1621, %v1686
        %v1692 = vmul.f32 %v1622, %v1686
        %v1693 = vmul.f32 %v1623, %v1686
        %v1694 = vmul.f32 %v1624, %v1686
        %v1695 = vmul.f32 %v1625, %v1686
        %v1696 = vmul.f32 %v1626, %v1686
        %v1697 = vmul.f32 %v1627, %v1686
        %v1698 = vmul.f32 %v1628, %v1686
        %v1699 = vmul.f32 %v1629, %v1686
        %v1700 = vmul.f32 %v1630, %v1686
        %v1701 = vmul.f32 %v1631, %v1686
        %v1702 = vmul.f32 %v1632, %v1686
        %v1703 = vmul.f32 %v1633, %v1686
        %v1704 = vmul.f32 %v1634, %v1686
        %v1705 = vmul.f32 %v1635, %v1686
        %v1706 = vmul.f32 %v1636, %v1686
        %v1707 = vmul.f32 %v1637, %v1686
        %v1708 = vmul.f32 %v1638, %v1686
        %v1709 = vmul.f32 %v1639, %v1686
        %v1710 = vmul.f32 %v1640, %v1686
        %v1711 = vmul.f32 %v1641, %v1686
        %v1712 = vmul.f32 %v1642, %v1686
        %v1713 = vmul.f32 %v1643, %v1686
        %v1714 = vmul.f32 %v1644, %v1686
        %v1715 = vmul.f32 %v1645, %v1686
        %v1716 = vmul.f32 %v1646, %v1686
        %v1717 = vmul.f32 %v1647, %v1686
        %v1718 = vmul.f32 %v1648, %v1686
        %v1719 = vmul.f32 %v1649, %v1686
        %v1720 = vmul.f32 %v1650, %v1686
        %v1721 = vmul.f32 %v1651, %v1686
        %v1722 = vmul.f32 %v1652, %v1686
        %v1723 = vmul.f32 %v1653, %v1686
        %v1724 = vmul.f32 %v1654, %v1686
        %v1725 = vmul.f32 %v1655, %v1686
        %v1726 = vmul.f32 %v1656, %v1686
        %v1727 = vmul.f32 %v1657, %v1686
        %v1728 = vmul.f32 %v1658, %v1686
        %v1729 = vmul.f32 %v1659, %v1686
        %v1730 = vmul.f32 %v1660, %v1686
        %v1731 = vmul.f32 %v1661, %v1686
        %v1732 = vmul.f32 %v1662, %v1686
        %v1733 = vmul.f32 %v1663, %v1686
        %v1734 = vmul.f32 %v1664, %v1686
        %v1735 = vmul.f32 %v1665, %v1686
        %v1736 = vmul.f32 %v1666, %v1686
        %v1737 = vmul.f32 %v1667, %v1686
        %v1738 = vmul.f32 %v1668, %v1686
        %v1739 = vmul.f32 %v1669, %v1686
        %v1740 = vmul.f32 %v1670, %v1686
        %v1741 = vmul.f32 %v1671, %v1686
        %v1742 = vmul.f32 %v1672, %v1686
        %v1743 = vmul.f32 %v1673, %v1686
        %v1744 = vmul.f32 %v1674, %v1686
        %v1745 = vmul.f32 %v1675, %v1686
        %v1746 = vmul.f32 %v1676, %v1686
        %v1747 = vmul.f32 %v1677, %v1686
        %v1748 = vmul.f32 %v1678, %v1686
        %v1749 = vmul.f32 %v1679, %v1686
        %v1750 = vmul.f32 %v1680, %v1686
        %v1751 = vmul.f32 %v1681, %v1686
        %v1752 = vadd.f32 %v1688, %v1360
        %v1753 = vadd.f32 %v1689, %v1361
        %v1754 = vadd.f32 %v1690, %v1362
        %v1755 = vadd.f32 %v1691, %v1363
        %v1756 = vadd.f32 %v1692, %v1364
        %v1757 = vadd.f32 %v1693, %v1365
        %v1758 = vadd.f32 %v1694, %v1366
        %v1759 = vadd.f32 %v1695, %v1367
        %v1760 = vadd.f32 %v1696, %v1368
        %v1761 = vadd.f32 %v1697, %v1369
        %v1762 = vadd.f32 %v1698, %v1370
        %v1763 = vadd.f32 %v1699, %v1371
        %v1764 = vadd.f32 %v1700, %v1372
        %v1765 = vadd.f32 %v1701, %v1373
        %v1766 = vadd.f32 %v1702, %v1374
        %v1767 = vadd.f32 %v1703, %v1375
        %v1768 = vadd.f32 %v1704, %v1376
        %v1769 = vadd.f32 %v1705, %v1377
        %v1770 = vadd.f32 %v1706, %v1378
        %v1771 = vadd.f32 %v1707, %v1379
        %v1772 = vadd.f32 %v1708, %v1380
        %v1773 = vadd.f32 %v1709, %v1381
        %v1774 = vadd.f32 %v1710, %v1382
        %v1775 = vadd.f32 %v1711, %v1383
        %v1776 = vadd.f32 %v1712, %v1384
        %v1777 = vadd.f32 %v1713, %v1385
        %v1778 = vadd.f32 %v1714, %v1386
        %v1779 = vadd.f32 %v1715, %v1387
        %v1780 = vadd.f32 %v1716, %v1388
        %v1781 = vadd.f32 %v1717, %v1389
        %v1782 = vadd.f32 %v1718, %v1390
        %v1783 = vadd.f32 %v1719, %v1391
        %v1784 = vadd.f32 %v1720, %v1392
        %v1785 = vadd.f32 %v1721, %v1393
        %v1786 = vadd.f32 %v1722, %v1394
        %v1787 = vadd.f32 %v1723, %v1395
        %v1788 = vadd.f32 %v1724, %v1396
        %v1789 = vadd.f32 %v1725, %v1397
        %v1790 = vadd.f32 %v1726, %v1398
        %v1791 = vadd.f32 %v1727, %v1399
        %v1792 = vadd.f32 %v1728, %v1400
        %v1793 = vadd.f32 %v1729, %v1401
        %v1794 = vadd.f32 %v1730, %v1402
        %v1795 = vadd.f32 %v1731, %v1403
        %v1796 = vadd.f32 %v1732, %v1404
        %v1797 = vadd.f32 %v1733, %v1405
        %v1798 = vadd.f32 %v1734, %v1406
        %v1799 = vadd.f32 %v1735, %v1407
        %v1800 = vadd.f32 %v1736, %v1408
        %v1801 = vadd.f32 %v1737, %v1409
        %v1802 = vadd.f32 %v1738, %v1410
        %v1803 = vadd.f32 %v1739, %v1411
        %v1804 = vadd.f32 %v1740, %v1412
        %v1805 = vadd.f32 %v1741, %v1413
        %v1806 = vadd.f32 %v1742, %v1414
        %v1807 = vadd.f32 %v1743, %v1415
        %v1808 = vadd.f32 %v1744, %v1416
        %v1809 = vadd.f32 %v1745, %v1417
        %v1810 = vadd.f32 %v1746, %v1418
        %v1811 = vadd.f32 %v1747, %v1419
        %v1812 = vadd.f32 %v1748, %v1420
        %v1813 = vadd.f32 %v1749, %v1421
        %v1814 = vadd.f32 %v1750, %v1422
        %v1815 = vadd.f32 %v1751, %v1423
        %v1817 = vlaneseq
        %v1818 = vshrl.u32 %v1817, 7
        %v1819 = vsub.s32 0, %v1818
        %v1820 = vrot.slane %v1553, %v1819
        %v1822 = vsub.f32 %v1752, %v1820
        %v1823 = vsub.f32 %v1753, %v1820
        %v1824 = vsub.f32 %v1754, %v1820
        %v1825 = vsub.f32 %v1755, %v1820
        %v1826 = vsub.f32 %v1756, %v1820
        %v1827 = vsub.f32 %v1757, %v1820
        %v1828 = vsub.f32 %v1758, %v1820
        %v1829 = vsub.f32 %v1759, %v1820
        %v1830 = vsub.f32 %v1760, %v1820
        %v1831 = vsub.f32 %v1761, %v1820
        %v1832 = vsub.f32 %v1762, %v1820
        %v1833 = vsub.f32 %v1763, %v1820
        %v1834 = vsub.f32 %v1764, %v1820
        %v1835 = vsub.f32 %v1765, %v1820
        %v1836 = vsub.f32 %v1766, %v1820
        %v1837 = vsub.f32 %v1767, %v1820
        %v1838 = vsub.f32 %v1768, %v1820
        %v1839 = vsub.f32 %v1769, %v1820
        %v1840 = vsub.f32 %v1770, %v1820
        %v1841 = vsub.f32 %v1771, %v1820
        %v1842 = vsub.f32 %v1772, %v1820
        %v1843 = vsub.f32 %v1773, %v1820
        %v1844 = vsub.f32 %v1774, %v1820
        %v1845 = vsub.f32 %v1775, %v1820
        %v1846 = vsub.f32 %v1776, %v1820
        %v1847 = vsub.f32 %v1777, %v1820
        %v1848 = vsub.f32 %v1778, %v1820
        %v1849 = vsub.f32 %v1779, %v1820
        %v1850 = vsub.f32 %v1780, %v1820
        %v1851 = vsub.f32 %v1781, %v1820
        %v1852 = vsub.f32 %v1782, %v1820
        %v1853 = vsub.f32 %v1783, %v1820
        %v1854 = vsub.f32 %v1784, %v1820
        %v1855 = vsub.f32 %v1785, %v1820
        %v1856 = vsub.f32 %v1786, %v1820
        %v1857 = vsub.f32 %v1787, %v1820
        %v1858 = vsub.f32 %v1788, %v1820
        %v1859 = vsub.f32 %v1789, %v1820
        %v1860 = vsub.f32 %v1790, %v1820
        %v1861 = vsub.f32 %v1791, %v1820
        %v1862 = vsub.f32 %v1792, %v1820
        %v1863 = vsub.f32 %v1793, %v1820
        %v1864 = vsub.f32 %v1794, %v1820
        %v1865 = vsub.f32 %v1795, %v1820
        %v1866 = vsub.f32 %v1796, %v1820
        %v1867 = vsub.f32 %v1797, %v1820
        %v1868 = vsub.f32 %v1798, %v1820
        %v1869 = vsub.f32 %v1799, %v1820
        %v1870 = vsub.f32 %v1800, %v1820
        %v1871 = vsub.f32 %v1801, %v1820
        %v1872 = vsub.f32 %v1802, %v1820
        %v1873 = vsub.f32 %v1803, %v1820
        %v1874 = vsub.f32 %v1804, %v1820
        %v1875 = vsub.f32 %v1805, %v1820
        %v1876 = vsub.f32 %v1806, %v1820
        %v1877 = vsub.f32 %v1807, %v1820
        %v1878 = vsub.f32 %v1808, %v1820
        %v1879 = vsub.f32 %v1809, %v1820
        %v1880 = vsub.f32 %v1810, %v1820
        %v1881 = vsub.f32 %v1811, %v1820
        %v1882 = vsub.f32 %v1812, %v1820
        %v1883 = vsub.f32 %v1813, %v1820
        %v1884 = vsub.f32 %v1814, %v1820
        %v1885 = vsub.f32 %v1815, %v1820
        %vm1886 = vcmp.gt.f32.partialorder %v1822, 0.0
        %vm1887 = vcmp.gt.f32.partialorder %v1823, 0.0
        %vm1888 = vcmp.gt.f32.partialorder %v1824, 0.0
        %vm1889 = vcmp.gt.f32.partialorder %v1825, 0.0
        %vm1890 = vcmp.gt.f32.partialorder %v1826, 0.0
        %vm1891 = vcmp.gt.f32.partialorder %v1827, 0.0
        %vm1892 = vcmp.gt.f32.partialorder %v1828, 0.0
        %vm1893 = vcmp.gt.f32.partialorder %v1829, 0.0
        %vm1894 = vcmp.gt.f32.partialorder %v1830, 0.0
        %vm1895 = vcmp.gt.f32.partialorder %v1831, 0.0
        %vm1896 = vcmp.gt.f32.partialorder %v1832, 0.0
        %vm1897 = vcmp.gt.f32.partialorder %v1833, 0.0
        %vm1898 = vcmp.gt.f32.partialorder %v1834, 0.0
        %vm1899 = vcmp.gt.f32.partialorder %v1835, 0.0
        %vm1900 = vcmp.gt.f32.partialorder %v1836, 0.0
        %vm1901 = vcmp.gt.f32.partialorder %v1837, 0.0
        %vm1902 = vcmp.gt.f32.partialorder %v1838, 0.0
        %vm1903 = vcmp.gt.f32.partialorder %v1839, 0.0
        %vm1904 = vcmp.gt.f32.partialorder %v1840, 0.0
        %vm1905 = vcmp.gt.f32.partialorder %v1841, 0.0
        %vm1906 = vcmp.gt.f32.partialorder %v1842, 0.0
        %vm1907 = vcmp.gt.f32.partialorder %v1843, 0.0
        %vm1908 = vcmp.gt.f32.partialorder %v1844, 0.0
        %vm1909 = vcmp.gt.f32.partialorder %v1845, 0.0
        %vm1910 = vcmp.gt.f32.partialorder %v1846, 0.0
        %vm1911 = vcmp.gt.f32.partialorder %v1847, 0.0
        %vm1912 = vcmp.gt.f32.partialorder %v1848, 0.0
        %vm1913 = vcmp.gt.f32.partialorder %v1849, 0.0
        %vm1914 = vcmp.gt.f32.partialorder %v1850, 0.0
        %vm1915 = vcmp.gt.f32.partialorder %v1851, 0.0
        %vm1916 = vcmp.gt.f32.partialorder %v1852, 0.0
        %vm1917 = vcmp.gt.f32.partialorder %v1853, 0.0
        %vm1918 = vcmp.gt.f32.partialorder %v1854, 0.0
        %vm1919 = vcmp.gt.f32.partialorder %v1855, 0.0
        %vm1920 = vcmp.gt.f32.partialorder %v1856, 0.0
        %vm1921 = vcmp.gt.f32.partialorder %v1857, 0.0
        %vm1922 = vcmp.gt.f32.partialorder %v1858, 0.0
        %vm1923 = vcmp.gt.f32.partialorder %v1859, 0.0
        %vm1924 = vcmp.gt.f32.partialorder %v1860, 0.0
        %vm1925 = vcmp.gt.f32.partialorder %v1861, 0.0
        %vm1926 = vcmp.gt.f32.partialorder %v1862, 0.0
        %vm1927 = vcmp.gt.f32.partialorder %v1863, 0.0
        %vm1928 = vcmp.gt.f32.partialorder %v1864, 0.0
        %vm1929 = vcmp.gt.f32.partialorder %v1865, 0.0
        %vm1930 = vcmp.gt.f32.partialorder %v1866, 0.0
        %vm1931 = vcmp.gt.f32.partialorder %v1867, 0.0
        %vm1932 = vcmp.gt.f32.partialorder %v1868, 0.0
        %vm1933 = vcmp.gt.f32.partialorder %v1869, 0.0
        %vm1934 = vcmp.gt.f32.partialorder %v1870, 0.0
        %vm1935 = vcmp.gt.f32.partialorder %v1871, 0.0
        %vm1936 = vcmp.gt.f32.partialorder %v1872, 0.0
        %vm1937 = vcmp.gt.f32.partialorder %v1873, 0.0
        %vm1938 = vcmp.gt.f32.partialorder %v1874, 0.0
        %vm1939 = vcmp.gt.f32.partialorder %v1875, 0.0
        %vm1940 = vcmp.gt.f32.partialorder %v1876, 0.0
        %vm1941 = vcmp.gt.f32.partialorder %v1877, 0.0
        %vm1942 = vcmp.gt.f32.partialorder %v1878, 0.0
        %vm1943 = vcmp.gt.f32.partialorder %v1879, 0.0
        %vm1944 = vcmp.gt.f32.partialorder %v1880, 0.0
        %vm1945 = vcmp.gt.f32.partialorder %v1881, 0.0
        %vm1946 = vcmp.gt.f32.partialorder %v1882, 0.0
        %vm1947 = vcmp.gt.f32.partialorder %v1883, 0.0
        %vm1948 = vcmp.gt.f32.partialorder %v1884, 0.0
        %vm1949 = vcmp.gt.f32.partialorder %v1885, 0.0
        %v1950 = vsel %vm1886, 1, 0
        %v1951 = vsel %vm1887, 1, 0
        %v1952 = vsel %vm1888, 1, 0
        %v1953 = vsel %vm1889, 1, 0
        %v1954 = vsel %vm1890, 1, 0
        %v1955 = vsel %vm1891, 1, 0
        %v1956 = vsel %vm1892, 1, 0
        %v1957 = vsel %vm1893, 1, 0
        %v1958 = vsel %vm1894, 1, 0
        %v1959 = vsel %vm1895, 1, 0
        %v1960 = vsel %vm1896, 1, 0
        %v1961 = vsel %vm1897, 1, 0
        %v1962 = vsel %vm1898, 1, 0
        %v1963 = vsel %vm1899, 1, 0
        %v1964 = vsel %vm1900, 1, 0
        %v1965 = vsel %vm1901, 1, 0
        %v1966 = vsel %vm1902, 1, 0
        %v1967 = vsel %vm1903, 1, 0
        %v1968 = vsel %vm1904, 1, 0
        %v1969 = vsel %vm1905, 1, 0
        %v1970 = vsel %vm1906, 1, 0
        %v1971 = vsel %vm1907, 1, 0
        %v1972 = vsel %vm1908, 1, 0
        %v1973 = vsel %vm1909, 1, 0
        %v1974 = vsel %vm1910, 1, 0
        %v1975 = vsel %vm1911, 1, 0
        %v1976 = vsel %vm1912, 1, 0
        %v1977 = vsel %vm1913, 1, 0
        %v1978 = vsel %vm1914, 1, 0
        %v1979 = vsel %vm1915, 1, 0
        %v1980 = vsel %vm1916, 1, 0
        %v1981 = vsel %vm1917, 1, 0
        %v1982 = vsel %vm1918, 1, 0
        %v1983 = vsel %vm1919, 1, 0
        %v1984 = vsel %vm1920, 1, 0
        %v1985 = vsel %vm1921, 1, 0
        %v1986 = vsel %vm1922, 1, 0
        %v1987 = vsel %vm1923, 1, 0
        %v1988 = vsel %vm1924, 1, 0
        %v1989 = vsel %vm1925, 1, 0
        %v1990 = vsel %vm1926, 1, 0
        %v1991 = vsel %vm1927, 1, 0
        %v1992 = vsel %vm1928, 1, 0
        %v1993 = vsel %vm1929, 1, 0
        %v1994 = vsel %vm1930, 1, 0
        %v1995 = vsel %vm1931, 1, 0
        %v1996 = vsel %vm1932, 1, 0
        %v1997 = vsel %vm1933, 1, 0
        %v1998 = vsel %vm1934, 1, 0
        %v1999 = vsel %vm1935, 1, 0
        %v2000 = vsel %vm1936, 1, 0
        %v2001 = vsel %vm1937, 1, 0
        %v2002 = vsel %vm1938, 1, 0
        %v2003 = vsel %vm1939, 1, 0
        %v2004 = vsel %vm1940, 1, 0
        %v2005 = vsel %vm1941, 1, 0
        %v2006 = vsel %vm1942, 1, 0
        %v2007 = vsel %vm1943, 1, 0
        %v2008 = vsel %vm1944, 1, 0
        %v2009 = vsel %vm1945, 1, 0
        %v2010 = vsel %vm1946, 1, 0
        %v2011 = vsel %vm1947, 1, 0
        %v2012 = vsel %vm1948, 1, 0
        %v2013 = vsel %vm1949, 1, 0
        %v2014 = vcvt.s32.f32 %v1950
        %v2015 = vcvt.s32.f32 %v1951
        %v2016 = vcvt.s32.f32 %v1952
        %v2017 = vcvt.s32.f32 %v1953
        %v2018 = vcvt.s32.f32 %v1954
        %v2019 = vcvt.s32.f32 %v1955
        %v2020 = vcvt.s32.f32 %v1956
        %v2021 = vcvt.s32.f32 %v1957
        %v2022 = vcvt.s32.f32 %v1958
        %v2023 = vcvt.s32.f32 %v1959
        %v2024 = vcvt.s32.f32 %v1960
        %v2025 = vcvt.s32.f32 %v1961
        %v2026 = vcvt.s32.f32 %v1962
        %v2027 = vcvt.s32.f32 %v1963
        %v2028 = vcvt.s32.f32 %v1964
        %v2029 = vcvt.s32.f32 %v1965
        %v2030 = vcvt.s32.f32 %v1966
        %v2031 = vcvt.s32.f32 %v1967
        %v2032 = vcvt.s32.f32 %v1968
        %v2033 = vcvt.s32.f32 %v1969
        %v2034 = vcvt.s32.f32 %v1970
        %v2035 = vcvt.s32.f32 %v1971
        %v2036 = vcvt.s32.f32 %v1972
        %v2037 = vcvt.s32.f32 %v1973
        %v2038 = vcvt.s32.f32 %v1974
        %v2039 = vcvt.s32.f32 %v1975
        %v2040 = vcvt.s32.f32 %v1976
        %v2041 = vcvt.s32.f32 %v1977
        %v2042 = vcvt.s32.f32 %v1978
        %v2043 = vcvt.s32.f32 %v1979
        %v2044 = vcvt.s32.f32 %v1980
        %v2045 = vcvt.s32.f32 %v1981
        %v2046 = vcvt.s32.f32 %v1982
        %v2047 = vcvt.s32.f32 %v1983
        %v2048 = vcvt.s32.f32 %v1984
        %v2049 = vcvt.s32.f32 %v1985
        %v2050 = vcvt.s32.f32 %v1986
        %v2051 = vcvt.s32.f32 %v1987
        %v2052 = vcvt.s32.f32 %v1988
        %v2053 = vcvt.s32.f32 %v1989
        %v2054 = vcvt.s32.f32 %v1990
        %v2055 = vcvt.s32.f32 %v1991
        %v2056 = vcvt.s32.f32 %v1992
        %v2057 = vcvt.s32.f32 %v1993
        %v2058 = vcvt.s32.f32 %v1994
        %v2059 = vcvt.s32.f32 %v1995
        %v2060 = vcvt.s32.f32 %v1996
        %v2061 = vcvt.s32.f32 %v1997
        %v2062 = vcvt.s32.f32 %v1998
        %v2063 = vcvt.s32.f32 %v1999
        %v2064 = vcvt.s32.f32 %v2000
        %v2065 = vcvt.s32.f32 %v2001
        %v2066 = vcvt.s32.f32 %v2002
        %v2067 = vcvt.s32.f32 %v2003
        %v2068 = vcvt.s32.f32 %v2004
        %v2069 = vcvt.s32.f32 %v2005
        %v2070 = vcvt.s32.f32 %v2006
        %v2071 = vcvt.s32.f32 %v2007
        %v2072 = vcvt.s32.f32 %v2008
        %v2073 = vcvt.s32.f32 %v2009
        %v2074 = vcvt.s32.f32 %v2010
        %v2075 = vcvt.s32.f32 %v2011
        %v2076 = vcvt.s32.f32 %v2012
        %v2077 = vcvt.s32.f32 %v2013
        %2078 = vst [vmem:[#allocation2] sm:$0xff] %v1752
        %2079 = vst [vmem:[#allocation2 + $0x8] sm:$0xff] %v1753
        %2080 = vst [vmem:[#allocation2 + $0x10] sm:$0xff] %v1754
        %2081 = vst [vmem:[#allocation2 + $0x18] sm:$0xff] %v1755
        %2082 = vst [vmem:[#allocation2 + $0x20] sm:$0xff] %v1756
        %2083 = vst [vmem:[#allocation2 + $0x28] sm:$0xff] %v1757
        %2084 = vst [vmem:[#allocation2 + $0x30] sm:$0xff] %v1758
        %2085 = vst [vmem:[#allocation2 + $0x38] sm:$0xff] %v1759
        %2086 = vst [vmem:[#allocation2 + $0x40] sm:$0xff] %v1760
        %2087 = vst [vmem:[#allocation2 + $0x48] sm:$0xff] %v1761
        %2088 = vst [vmem:[#allocation2 + $0x50] sm:$0xff] %v1762
        %2089 = vst [vmem:[#allocation2 + $0x58] sm:$0xff] %v1763
        %2090 = vst [vmem:[#allocation2 + $0x60] sm:$0xff] %v1764
        %2091 = vst [vmem:[#allocation2 + $0x68] sm:$0xff] %v1765
        %2092 = vst [vmem:[#allocation2 + $0x70] sm:$0xff] %v1766
        %2093 = vst [vmem:[#allocation2 + $0x78] sm:$0xff] %v1767
        %2094 = vst [vmem:[#allocation2 + $0x80] sm:$0xff] %v1768
        %2095 = vst [vmem:[#allocation2 + $0x88] sm:$0xff] %v1769
        %2096 = vst [vmem:[#allocation2 + $0x90] sm:$0xff] %v1770
        %2097 = vst [vmem:[#allocation2 + $0x98] sm:$0xff] %v1771
        %2098 = vst [vmem:[#allocation2 + $0xa0] sm:$0xff] %v1772
        %2099 = vst [vmem:[#allocation2 + $0xa8] sm:$0xff] %v1773
        %2100 = vst [vmem:[#allocation2 + $0xb0] sm:$0xff] %v1774
        %2101 = vst [vmem:[#allocation2 + $0xb8] sm:$0xff] %v1775
        %2102 = vst [vmem:[#allocation2 + $0xc0] sm:$0xff] %v1776
        %2103 = vst [vmem:[#allocation2 + $0xc8] sm:$0xff] %v1777
        %2104 = vst [vmem:[#allocation2 + $0xd0] sm:$0xff] %v1778
        %2105 = vst [vmem:[#allocation2 + $0xd8] sm:$0xff] %v1779
        %2106 = vst [vmem:[#allocation2 + $0xe0] sm:$0xff] %v1780
        %2107 = vst [vmem:[#allocation2 + $0xe8] sm:$0xff] %v1781
        %2108 = vst [vmem:[#allocation2 + $0xf0] sm:$0xff] %v1782
        %2109 = vst [vmem:[#allocation2 + $0xf8] sm:$0xff] %v1783
        %2110 = vst [vmem:[#allocation2 + $0x100] sm:$0xff] %v1784
        %2111 = vst [vmem:[#allocation2 + $0x108] sm:$0xff] %v1785
        %2112 = vst [vmem:[#allocation2 + $0x110] sm:$0xff] %v1786
        %2113 = vst [vmem:[#allocation2 + $0x118] sm:$0xff] %v1787
        %2114 = vst [vmem:[#allocation2 + $0x120] sm:$0xff] %v1788
        %2115 = vst [vmem:[#allocation2 + $0x128] sm:$0xff] %v1789
        %2116 = vst [vmem:[#allocation2 + $0x130] sm:$0xff] %v1790
        %2117 = vst [vmem:[#allocation2 + $0x138] sm:$0xff] %v1791
        %2118 = vst [vmem:[#allocation2 + $0x140] sm:$0xff] %v1792
        %2119 = vst [vmem:[#allocation2 + $0x148] sm:$0xff] %v1793
        %2120 = vst [vmem:[#allocation2 + $0x150] sm:$0xff] %v1794
        %2121 = vst [vmem:[#allocation2 + $0x158] sm:$0xff] %v1795
        %2122 = vst [vmem:[#allocation2 + $0x160] sm:$0xff] %v1796
        %2123 = vst [vmem:[#allocation2 + $0x168] sm:$0xff] %v1797
        %2124 = vst [vmem:[#allocation2 + $0x170] sm:$0xff] %v1798
        %2125 = vst [vmem:[#allocation2 + $0x178] sm:$0xff] %v1799
        %2126 = vst [vmem:[#allocation2 + $0x180] sm:$0xff] %v1800
        %2127 = vst [vmem:[#allocation2 + $0x188] sm:$0xff] %v1801
        %2128 = vst [vmem:[#allocation2 + $0x190] sm:$0xff] %v1802
        %2129 = vst [vmem:[#allocation2 + $0x198] sm:$0xff] %v1803
        %2130 = vst [vmem:[#allocation2 + $0x1a0] sm:$0xff] %v1804
        %2131 = vst [vmem:[#allocation2 + $0x1a8] sm:$0xff] %v1805
        %2132 = vst [vmem:[#allocation2 + $0x1b0] sm:$0xff] %v1806
        %2133 = vst [vmem:[#allocation2 + $0x1b8] sm:$0xff] %v1807
        %2134 = vst [vmem:[#allocation2 + $0x1c0] sm:$0xff] %v1808
        %2135 = vst [vmem:[#allocation2 + $0x1c8] sm:$0xff] %v1809
        %2136 = vst [vmem:[#allocation2 + $0x1d0] sm:$0xff] %v1810
        %2137 = vst [vmem:[#allocation2 + $0x1d8] sm:$0xff] %v1811
        %2138 = vst [vmem:[#allocation2 + $0x1e0] sm:$0xff] %v1812
        %2139 = vst [vmem:[#allocation2 + $0x1e8] sm:$0xff] %v1813
        %2140 = vst [vmem:[#allocation2 + $0x1f0] sm:$0xff] %v1814
        %2141 = vst [vmem:[#allocation2 + $0x1f8] sm:$0xff] %v1815
        %2142 = vst [vmem:[#allocation4] sm:$0xff] %v2014
        %2143 = vst [vmem:[#allocation4 + $0x8] sm:$0xff] %v2015
        %2144 = vst [vmem:[#allocation4 + $0x10] sm:$0xff] %v2016
        %2145 = vst [vmem:[#allocation4 + $0x18] sm:$0xff] %v2017
        %2146 = vst [vmem:[#allocation4 + $0x20] sm:$0xff] %v2018
        %2147 = vst [vmem:[#allocation4 + $0x28] sm:$0xff] %v2019
        %2148 = vst [vmem:[#allocation4 + $0x30] sm:$0xff] %v2020
        %2149 = vst [vmem:[#allocation4 + $0x38] sm:$0xff] %v2021
        %2150 = vst [vmem:[#allocation4 + $0x40] sm:$0xff] %v2022
        %2151 = vst [vmem:[#allocation4 + $0x48] sm:$0xff] %v2023
        %2152 = vst [vmem:[#allocation4 + $0x50] sm:$0xff] %v2024
        %2153 = vst [vmem:[#allocation4 + $0x58] sm:$0xff] %v2025
        %2154 = vst [vmem:[#allocation4 + $0x60] sm:$0xff] %v2026
        %2155 = vst [vmem:[#allocation4 + $0x68] sm:$0xff] %v2027
        %2156 = vst [vmem:[#allocation4 + $0x70] sm:$0xff] %v2028
        %2157 = vst [vmem:[#allocation4 + $0x78] sm:$0xff] %v2029
        %2158 = vst [vmem:[#allocation4 + $0x80] sm:$0xff] %v2030
        %2159 = vst [vmem:[#allocation4 + $0x88] sm:$0xff] %v2031
        %2160 = vst [vmem:[#allocation4 + $0x90] sm:$0xff] %v2032
        %2161 = vst [vmem:[#allocation4 + $0x98] sm:$0xff] %v2033
        %2162 = vst [vmem:[#allocation4 + $0xa0] sm:$0xff] %v2034
        %2163 = vst [vmem:[#allocation4 + $0xa8] sm:$0xff] %v2035
        %2164 = vst [vmem:[#allocation4 + $0xb0] sm:$0xff] %v2036
        %2165 = vst [vmem:[#allocation4 + $0xb8] sm:$0xff] %v2037
        %2166 = vst [vmem:[#allocation4 + $0xc0] sm:$0xff] %v2038
        %2167 = vst [vmem:[#allocation4 + $0xc8] sm:$0xff] %v2039
        %2168 = vst [vmem:[#allocation4 + $0xd0] sm:$0xff] %v2040
        %2169 = vst [vmem:[#allocation4 + $0xd8] sm:$0xff] %v2041
        %2170 = vst [vmem:[#allocation4 + $0xe0] sm:$0xff] %v2042
        %2171 = vst [vmem:[#allocation4 + $0xe8] sm:$0xff] %v2043
        %2172 = vst [vmem:[#allocation4 + $0xf0] sm:$0xff] %v2044
        %2173 = vst [vmem:[#allocation4 + $0xf8] sm:$0xff] %v2045
        %2174 = vst [vmem:[#allocation4 + $0x100] sm:$0xff] %v2046
        %2175 = vst [vmem:[#allocation4 + $0x108] sm:$0xff] %v2047
        %2176 = vst [vmem:[#allocation4 + $0x110] sm:$0xff] %v2048
        %2177 = vst [vmem:[#allocation4 + $0x118] sm:$0xff] %v2049
        %2178 = vst [vmem:[#allocation4 + $0x120] sm:$0xff] %v2050
        %2179 = vst [vmem:[#allocation4 + $0x128] sm:$0xff] %v2051
        %2180 = vst [vmem:[#allocation4 + $0x130] sm:$0xff] %v2052
        %2181 = vst [vmem:[#allocation4 + $0x138] sm:$0xff] %v2053
        %2182 = vst [vmem:[#allocation4 + $0x140] sm:$0xff] %v2054
        %2183 = vst [vmem:[#allocation4 + $0x148] sm:$0xff] %v2055
        %2184 = vst [vmem:[#allocation4 + $0x150] sm:$0xff] %v2056
        %2185 = vst [vmem:[#allocation4 + $0x158] sm:$0xff] %v2057
        %2186 = vst [vmem:[#allocation4 + $0x160] sm:$0xff] %v2058
        %2187 = vst [vmem:[#allocation4 + $0x168] sm:$0xff] %v2059
        %2188 = vst [vmem:[#allocation4 + $0x170] sm:$0xff] %v2060
        %2189 = vst [vmem:[#allocation4 + $0x178] sm:$0xff] %v2061
        %2190 = vst [vmem:[#allocation4 + $0x180] sm:$0xff] %v2062
        %2191 = vst [vmem:[#allocation4 + $0x188] sm:$0xff] %v2063
        %2192 = vst [vmem:[#allocation4 + $0x190] sm:$0xff] %v2064
        %2193 = vst [vmem:[#allocation4 + $0x198] sm:$0xff] %v2065
        %2194 = vst [vmem:[#allocation4 + $0x1a0] sm:$0xff] %v2066
        %2195 = vst [vmem:[#allocation4 + $0x1a8] sm:$0xff] %v2067
        %2196 = vst [vmem:[#allocation4 + $0x1b0] sm:$0xff] %v2068
        %2197 = vst [vmem:[#allocation4 + $0x1b8] sm:$0xff] %v2069
        %2198 = vst [vmem:[#allocation4 + $0x1c0] sm:$0xff] %v2070
        %2199 = vst [vmem:[#allocation4 + $0x1c8] sm:$0xff] %v2071
        %2200 = vst [vmem:[#allocation4 + $0x1d0] sm:$0xff] %v2072
        %2201 = vst [vmem:[#allocation4 + $0x1d8] sm:$0xff] %v2073
        %2202 = vst [vmem:[#allocation4 + $0x1e0] sm:$0xff] %v2074
        %2203 = vst [vmem:[#allocation4 + $0x1e8] sm:$0xff] %v2075
        %2204 = vst [vmem:[#allocation4 + $0x1f0] sm:$0xff] %v2076
        %2205 = vst [vmem:[#allocation4 + $0x1f8] sm:$0xff] %v2077
        %v2206 = vpack.c.bf16 %v2015, %v2014
        %v2207 = vpack.c.bf16 %v2017, %v2016
        %v2208 = vpack.c.bf16 %v2019, %v2018
        %v2209 = vpack.c.bf16 %v2021, %v2020
        %v2210 = vpack.c.bf16 %v2023, %v2022
        %v2211 = vpack.c.bf16 %v2025, %v2024
        %v2212 = vpack.c.bf16 %v2027, %v2026
        %v2213 = vpack.c.bf16 %v2029, %v2028
        %v2214 = vpack.c.bf16 %v2031, %v2030
        %v2215 = vpack.c.bf16 %v2033, %v2032
        %v2216 = vpack.c.bf16 %v2035, %v2034
        %v2217 = vpack.c.bf16 %v2037, %v2036
        %v2218 = vpack.c.bf16 %v2039, %v2038
        %v2219 = vpack.c.bf16 %v2041, %v2040
        %v2220 = vpack.c.bf16 %v2043, %v2042
        %v2221 = vpack.c.bf16 %v2045, %v2044
        %v2222 = vpack.c.bf16 %v2047, %v2046
        %v2223 = vpack.c.bf16 %v2049, %v2048
        %v2224 = vpack.c.bf16 %v2051, %v2050
        %v2225 = vpack.c.bf16 %v2053, %v2052
        %v2226 = vpack.c.bf16 %v2055, %v2054
        %v2227 = vpack.c.bf16 %v2057, %v2056
        %v2228 = vpack.c.bf16 %v2059, %v2058
        %v2229 = vpack.c.bf16 %v2061, %v2060
        %v2230 = vpack.c.bf16 %v2063, %v2062
        %v2231 = vpack.c.bf16 %v2065, %v2064
        %v2232 = vpack.c.bf16 %v2067, %v2066
        %v2233 = vpack.c.bf16 %v2069, %v2068
        %v2234 = vpack.c.bf16 %v2071, %v2070
        %v2235 = vpack.c.bf16 %v2073, %v2072
        %v2236 = vpack.c.bf16 %v2075, %v2074
        %v2237 = vpack.c.bf16 %v2077, %v2076
        %v2270 = vunpack.c.l.b16 %v2206
        %v2271 = vunpack.c.h.b16 %v2206
        %v2272 = vunpack.c.l.b16 %v2207
        %v2273 = vunpack.c.h.b16 %v2207
        %v2274 = vunpack.c.l.b16 %v2208
        %v2275 = vunpack.c.h.b16 %v2208
        %v2276 = vunpack.c.l.b16 %v2209
        %v2277 = vunpack.c.h.b16 %v2209
        %v2278 = vunpack.c.l.b16 %v2210
        %v2279 = vunpack.c.h.b16 %v2210
        %v2280 = vunpack.c.l.b16 %v2211
        %v2281 = vunpack.c.h.b16 %v2211
        %v2282 = vunpack.c.l.b16 %v2212
        %v2283 = vunpack.c.h.b16 %v2212
        %v2284 = vunpack.c.l.b16 %v2213
        %v2285 = vunpack.c.h.b16 %v2213
        %v2286 = vunpack.c.l.b16 %v2214
        %v2287 = vunpack.c.h.b16 %v2214
        %v2288 = vunpack.c.l.b16 %v2215
        %v2289 = vunpack.c.h.b16 %v2215
        %v2290 = vunpack.c.l.b16 %v2216
        %v2291 = vunpack.c.h.b16 %v2216
        %v2292 = vunpack.c.l.b16 %v2217
        %v2293 = vunpack.c.h.b16 %v2217
        %v2294 = vunpack.c.l.b16 %v2218
        %v2295 = vunpack.c.h.b16 %v2218
        %v2296 = vunpack.c.l.b16 %v2219
        %v2297 = vunpack.c.h.b16 %v2219
        %v2298 = vunpack.c.l.b16 %v2220
        %v2299 = vunpack.c.h.b16 %v2220
        %v2300 = vunpack.c.l.b16 %v2221
        %v2301 = vunpack.c.h.b16 %v2221
        %v2302 = vunpack.c.l.b16 %v2222
        %v2303 = vunpack.c.h.b16 %v2222
        %v2304 = vunpack.c.l.b16 %v2223
        %v2305 = vunpack.c.h.b16 %v2223
        %v2306 = vunpack.c.l.b16 %v2224
        %v2307 = vunpack.c.h.b16 %v2224
        %v2308 = vunpack.c.l.b16 %v2225
        %v2309 = vunpack.c.h.b16 %v2225
        %v2310 = vunpack.c.l.b16 %v2226
        %v2311 = vunpack.c.h.b16 %v2226
        %v2312 = vunpack.c.l.b16 %v2227
        %v2313 = vunpack.c.h.b16 %v2227
        %v2314 = vunpack.c.l.b16 %v2228
        %v2315 = vunpack.c.h.b16 %v2228
        %v2316 = vunpack.c.l.b16 %v2229
        %v2317 = vunpack.c.h.b16 %v2229
        %v2318 = vunpack.c.l.b16 %v2230
        %v2319 = vunpack.c.h.b16 %v2230
        %v2320 = vunpack.c.l.b16 %v2231
        %v2321 = vunpack.c.h.b16 %v2231
        %v2322 = vunpack.c.l.b16 %v2232
        %v2323 = vunpack.c.h.b16 %v2232
        %v2324 = vunpack.c.l.b16 %v2233
        %v2325 = vunpack.c.h.b16 %v2233
        %v2326 = vunpack.c.l.b16 %v2234
        %v2327 = vunpack.c.h.b16 %v2234
        %v2328 = vunpack.c.l.b16 %v2235
        %v2329 = vunpack.c.h.b16 %v2235
        %v2330 = vunpack.c.l.b16 %v2236
        %v2331 = vunpack.c.h.b16 %v2236
        %v2332 = vunpack.c.l.b16 %v2237
        %v2333 = vunpack.c.h.b16 %v2237
        %v2334 = vpack.c.b16 %v2270, %v2270
        %v2335 = vpack.c.b16 %v2271, %v2271
        %v2336 = vpack.c.b16 %v2272, %v2272
        %v2337 = vpack.c.b16 %v2273, %v2273
        %v2338 = vpack.c.b16 %v2274, %v2274
        %v2339 = vpack.c.b16 %v2275, %v2275
        %v2340 = vpack.c.b16 %v2276, %v2276
        %v2341 = vpack.c.b16 %v2277, %v2277
        %v2342 = vpack.c.b16 %v2278, %v2278
        %v2343 = vpack.c.b16 %v2279, %v2279
        %v2344 = vpack.c.b16 %v2280, %v2280
        %v2345 = vpack.c.b16 %v2281, %v2281
        %v2346 = vpack.c.b16 %v2282, %v2282
        %v2347 = vpack.c.b16 %v2283, %v2283
        %v2348 = vpack.c.b16 %v2284, %v2284
        %v2349 = vpack.c.b16 %v2285, %v2285
        %v2350 = vpack.c.b16 %v2286, %v2286
        %v2351 = vpack.c.b16 %v2287, %v2287
        %v2352 = vpack.c.b16 %v2288, %v2288
        %v2353 = vpack.c.b16 %v2289, %v2289
        %v2354 = vpack.c.b16 %v2290, %v2290
        %v2355 = vpack.c.b16 %v2291, %v2291
        %v2356 = vpack.c.b16 %v2292, %v2292
        %v2357 = vpack.c.b16 %v2293, %v2293
        %v2358 = vpack.c.b16 %v2294, %v2294
        %v2359 = vpack.c.b16 %v2295, %v2295
        %v2360 = vpack.c.b16 %v2296, %v2296
        %v2361 = vpack.c.b16 %v2297, %v2297
        %v2362 = vpack.c.b16 %v2298, %v2298
        %v2363 = vpack.c.b16 %v2299, %v2299
        %v2364 = vpack.c.b16 %v2300, %v2300
        %v2365 = vpack.c.b16 %v2301, %v2301
        %v2366 = vpack.c.b16 %v2302, %v2302
        %v2367 = vpack.c.b16 %v2303, %v2303
        %v2368 = vpack.c.b16 %v2304, %v2304
        %v2369 = vpack.c.b16 %v2305, %v2305
        %v2370 = vpack.c.b16 %v2306, %v2306
        %v2371 = vpack.c.b16 %v2307, %v2307
        %v2372 = vpack.c.b16 %v2308, %v2308
        %v2373 = vpack.c.b16 %v2309, %v2309
        %v2374 = vpack.c.b16 %v2310, %v2310
        %v2375 = vpack.c.b16 %v2311, %v2311
        %v2376 = vpack.c.b16 %v2312, %v2312
        %v2377 = vpack.c.b16 %v2313, %v2313
        %v2378 = vpack.c.b16 %v2314, %v2314
        %v2379 = vpack.c.b16 %v2315, %v2315
        %v2380 = vpack.c.b16 %v2316, %v2316
        %v2381 = vpack.c.b16 %v2317, %v2317
        %v2382 = vpack.c.b16 %v2318, %v2318
        %v2383 = vpack.c.b16 %v2319, %v2319
        %v2384 = vpack.c.b16 %v2320, %v2320
        %v2385 = vpack.c.b16 %v2321, %v2321
        %v2386 = vpack.c.b16 %v2322, %v2322
        %v2387 = vpack.c.b16 %v2323, %v2323
        %v2388 = vpack.c.b16 %v2324, %v2324
        %v2389 = vpack.c.b16 %v2325, %v2325
        %v2390 = vpack.c.b16 %v2326, %v2326
        %v2391 = vpack.c.b16 %v2327, %v2327
        %v2392 = vpack.c.b16 %v2328, %v2328
        %v2393 = vpack.c.b16 %v2329, %v2329
        %v2394 = vpack.c.b16 %v2330, %v2330
        %v2395 = vpack.c.b16 %v2331, %v2331
        %v2396 = vpack.c.b16 %v2332, %v2332
        %v2397 = vpack.c.b16 %v2333, %v2333
        %2462 = vst [vmem:[%s275] sm:$0xf] %v2334
        %2463 = vst [vmem:[%s275 + $0x4] sm:$0xf] %v2335
        %2464 = vst [vmem:[%s275 + $0x8] sm:$0xf] %v2336
        %2465 = vst [vmem:[%s275 + $0xc] sm:$0xf] %v2337
        %2466 = vst [vmem:[%s275 + $0x10] sm:$0xf] %v2338
        %2467 = vst [vmem:[%s275 + $0x14] sm:$0xf] %v2339
        %2468 = vst [vmem:[%s275 + $0x18] sm:$0xf] %v2340
        %2469 = vst [vmem:[%s275 + $0x1c] sm:$0xf] %v2341
        %2470 = vst [vmem:[%s275 + $0x20] sm:$0xf] %v2342
        %2471 = vst [vmem:[%s275 + $0x24] sm:$0xf] %v2343
        %2472 = vst [vmem:[%s275 + $0x28] sm:$0xf] %v2344
        %2473 = vst [vmem:[%s275 + $0x2c] sm:$0xf] %v2345
        %2474 = vst [vmem:[%s275 + $0x30] sm:$0xf] %v2346
        %2475 = vst [vmem:[%s275 + $0x34] sm:$0xf] %v2347
        %2476 = vst [vmem:[%s275 + $0x38] sm:$0xf] %v2348
        %2477 = vst [vmem:[%s275 + $0x3c] sm:$0xf] %v2349
        %2478 = vst [vmem:[%s275 + $0x40] sm:$0xf] %v2350
        %2479 = vst [vmem:[%s275 + $0x44] sm:$0xf] %v2351
        %2480 = vst [vmem:[%s275 + $0x48] sm:$0xf] %v2352
        %2481 = vst [vmem:[%s275 + $0x4c] sm:$0xf] %v2353
        %2482 = vst [vmem:[%s275 + $0x50] sm:$0xf] %v2354
        %2483 = vst [vmem:[%s275 + $0x54] sm:$0xf] %v2355
        %2484 = vst [vmem:[%s275 + $0x58] sm:$0xf] %v2356
        %2485 = vst [vmem:[%s275 + $0x5c] sm:$0xf] %v2357
        %2486 = vst [vmem:[%s275 + $0x60] sm:$0xf] %v2358
        %2487 = vst [vmem:[%s275 + $0x64] sm:$0xf] %v2359
        %2488 = vst [vmem:[%s275 + $0x68] sm:$0xf] %v2360
        %2489 = vst [vmem:[%s275 + $0x6c] sm:$0xf] %v2361
        %2490 = vst [vmem:[%s275 + $0x70] sm:$0xf] %v2362
        %2491 = vst [vmem:[%s275 + $0x74] sm:$0xf] %v2363
        %2492 = vst [vmem:[%s275 + $0x78] sm:$0xf] %v2364
        %2493 = vst [vmem:[%s275 + $0x7c] sm:$0xf] %v2365
        %2494 = vst [vmem:[%s275 + $0x80] sm:$0xf] %v2366
        %2495 = vst [vmem:[%s275 + $0x84] sm:$0xf] %v2367
        %2496 = vst [vmem:[%s275 + $0x88] sm:$0xf] %v2368
        %2497 = vst [vmem:[%s275 + $0x8c] sm:$0xf] %v2369
        %2498 = vst [vmem:[%s275 + $0x90] sm:$0xf] %v2370
        %2499 = vst [vmem:[%s275 + $0x94] sm:$0xf] %v2371
        %2500 = vst [vmem:[%s275 + $0x98] sm:$0xf] %v2372
        %2501 = vst [vmem:[%s275 + $0x9c] sm:$0xf] %v2373
        %2502 = vst [vmem:[%s275 + $0xa0] sm:$0xf] %v2374
        %2503 = vst [vmem:[%s275 + $0xa4] sm:$0xf] %v2375
        %2504 = vst [vmem:[%s275 + $0xa8] sm:$0xf] %v2376
        %2505 = vst [vmem:[%s275 + $0xac] sm:$0xf] %v2377
        %2506 = vst [vmem:[%s275 + $0xb0] sm:$0xf] %v2378
        %2507 = vst [vmem:[%s275 + $0xb4] sm:$0xf] %v2379
        %2508 = vst [vmem:[%s275 + $0xb8] sm:$0xf] %v2380
        %2509 = vst [vmem:[%s275 + $0xbc] sm:$0xf] %v2381
        %2510 = vst [vmem:[%s275 + $0xc0] sm:$0xf] %v2382
        %2511 = vst [vmem:[%s275 + $0xc4] sm:$0xf] %v2383
        %2512 = vst [vmem:[%s275 + $0xc8] sm:$0xf] %v2384
        %2513 = vst [vmem:[%s275 + $0xcc] sm:$0xf] %v2385
        %2514 = vst [vmem:[%s275 + $0xd0] sm:$0xf] %v2386
        %2515 = vst [vmem:[%s275 + $0xd4] sm:$0xf] %v2387
        %2516 = vst [vmem:[%s275 + $0xd8] sm:$0xf] %v2388
        %2517 = vst [vmem:[%s275 + $0xdc] sm:$0xf] %v2389
        %2518 = vst [vmem:[%s275 + $0xe0] sm:$0xf] %v2390
        %2519 = vst [vmem:[%s275 + $0xe4] sm:$0xf] %v2391
        %2520 = vst [vmem:[%s275 + $0xe8] sm:$0xf] %v2392
        %2521 = vst [vmem:[%s275 + $0xec] sm:$0xf] %v2393
        %2522 = vst [vmem:[%s275 + $0xf0] sm:$0xf] %v2394
        %2523 = vst [vmem:[%s275 + $0xf4] sm:$0xf] %v2395
        %2524 = vst [vmem:[%s275 + $0xf8] sm:$0xf] %v2396
        %2525 = vst [vmem:[%s275 + $0xfc] sm:$0xf] %v2397
        %p2526 = scmp.lt.s32.totalorder %s21, 7
        %s2527 = scalar_select %p2526, %s21, 7
        %s2528 = smul.addr %s2527, 64
        %s2529 = smul.addr %s2528, 4
        %s2530 = scalar_lea.vmem %s5, %s2529
        // Predicated region
        $region45: #{fwd.2} parent=39 // pred_check
          %p2531 = pneg %p149
        $region46: #{fwd.2} parent=39 // pred_check_branch
          %2533 = sbr.rel (%p2531) target = $region48
        $region47: #{fwd.2} parent=39 // pred_region
          _
        $region48: #{fwd.2} parent=39 // pred_fallthru
          _
        // Predicated region
        $region49: #{fwd.2} parent=39 // pred_check
          %p2534 = pneg %p170
        $region50: #{fwd.2} parent=39 // pred_check_branch
          %2536 = sbr.rel (%p2534) target = $region52
        $region51: #{fwd.2} parent=39 // pred_region
          %s2538 = ssub.s32 8192, 8192
          %2539 = vsyncadd [#allocation3], %s2538
          %s2540 = sshll.u32 [#allocation2], 4
          %s2541 = int_to_ptr.vmem [resolvable:$true] %s2540
          %2546 = dma.vmem_to_hbm [thread:$0]  %s2541, 8192, %s6, [#allocation3], 128, 128, 8
        $region52: #{fwd.2} parent=39 // pred_fallthru
          _
        // Predicated region
        $region53: #{fwd.2} parent=39 // pred_check
          %p2547 = pneg %p191
        $region54: #{fwd.2} parent=39 // pred_check_branch
          %2549 = sbr.rel (%p2547) target = $region56
        $region55: #{fwd.2} parent=39 // pred_region
          %s2551 = ssub.s32 8192, 8192
          %2552 = vsyncadd [#allocation5], %s2551
          %s2553 = sshll.u32 [#allocation4], 4
          %s2554 = int_to_ptr.vmem [resolvable:$true] %s2553
          %2559 = dma.vmem_to_hbm [thread:$0]  %s2554, 8192, %s7, [#allocation5], 128, 128, 8
        $region56: #{fwd.2} parent=39 // pred_fallthru
          _
        // Predicated region
        $region57: #{fwd.2} parent=39 // pred_check
          %p2560 = pneg %p170
        $region58: #{fwd.2} parent=39 // pred_check_branch
          %2562 = sbr.rel (%p2560) target = $region60
        $region59: #{fwd.2} parent=39 // pred_region
          %2563 = dma.done [#allocation3], 8192
        $region60: #{fwd.2} parent=39 // pred_fallthru
          _
        // Predicated region
        $region61: #{fwd.2} parent=39 // pred_check
          %p2564 = pneg %p191
        $region62: #{fwd.2} parent=39 // pred_check_branch
          %2566 = sbr.rel (%p2564) target = $region64
        $region63: #{fwd.2} parent=39 // pred_region
          %2567 = dma.done [#allocation5], 8192
        $region64: #{fwd.2} parent=39 // pred_fallthru
          _
      $region40: #{fwd.2} parent=5 // pred_fallthru
        _
      %p2568 = scmp.le.s32.totalorder 2, %s16
      // Predicated region
      $region65: #{fwd.2} parent=5 // pred_check
        %p2569 = pneg %p2568
      $region66: #{fwd.2} parent=5 // pred_check_branch
        %2571 = sbr.rel (%p2569) target = $region68
      $region67: #{fwd.2} parent=5 // pred_region
        %s2572 = ssub.s32 %s16, 2
        // Predicated region
        $region69: #{fwd.2} parent=67 // pred_check
          %p2573 = pneg %p155
        $region70: #{fwd.2} parent=67 // pred_check_branch
          %2575 = sbr.rel (%p2573) target = $region72
        $region71: #{fwd.2} parent=67 // pred_region
          %p2576 = scmp.lt.s32.totalorder %s22, 7
          %s2577 = scalar_select %p2576, %s22, 7
          %s2578 = smul.addr %s2577, 64
          %s2579 = smul.addr %s2578, 4
          %s2580 = scalar_lea.vmem %s5, %s2579
        $region72: #{fwd.2} parent=67 // pred_fallthru
          _
      $region68: #{fwd.2} parent=5 // pred_fallthru
        _
    $region6: #{fwd.2} parent=1 // loop_footer
      %s20 = sadd.s32 1, %s16
    $region7: #{fwd.2} parent=1 // loop_footer_branch
      %15 = sbr.rel target = $region3
    $region8: #{fwd.2} parent=1 // loop_exit
      _
    %2581 = vsyncpa [#allocation3], 1
    %s2582 = scalar_lea.sflag [#allocation3], 1
    %2583 = vsyncpa %s2582, 1
    %2584 = vsyncpa [#allocation5], 1

// kernel: fwd.3
$region0: #{fwd.3}
  #allocation0 [shape = 'u32[]', space=smem, size = 0x4, offset = 0x4, fixed_abs, tag = 'smem constant byte address 0x4 - core index']
  #allocation1 [shape = 'u32[144,128]{1,0:T(1,128)}', space=vmem, size = 0x12000, scoped, tag = 'internal scratch']
  %s0 = inlined_call_operand.vmem [shape: bf16[8,512,128], index: 0, kind: input, shape index: {}]
  %s1 = inlined_call_operand.vmem [shape: bf16[128,128], index: 1, kind: input, shape index: {}]
  %s2 = inlined_call_operand.vmem [shape: f32[8,512,128], index: 2, kind: input, shape index: {}]
  %s3 = inlined_call_operand.vmem [shape: f32[1,128], index: 3, kind: input, shape index: {}, may-alias: {3,4}]
  %s4 = inlined_call_operand.vmem [shape: f32[1,128], index: 4, kind: input, shape index: {}, may-alias: {3,4}]
  %s5 = inlined_call_operand.vmem [shape: f32[1,128], index: 5, kind: input, shape index: {}]
  %s6 = inlined_call_operand.vmem [shape: f32[1,128], index: 6, kind: input, shape index: {}]
  %s7 = inlined_call_operand.vmem [shape: bf16[8,512,128], index: 7, kind: output, shape index: {0}]
  %s8 = inlined_call_operand.hbm [shape: f32[512,128], index: 8, kind: output, shape index: {1}]
  %s9 = inlined_call_operand.hbm [shape: f32[512,128], index: 9, kind: output, shape index: {2}]
  %10 = xla_tuple %s7, %s8, %s9
  %s11 = sld [smem:[#allocation0]]
  $region81: #{fwd.3} parent=0
    _
  %s13 = ssub.s32 1, %s11
  %s14 = scalar_select 0, %s13, %s11
  $region1: #{fwd.3} parent=0
    #allocation2 [shape = 'u8[262144]{0}', space=vmem, size = 0x40000, scoped, tag = 'output window, operand 1, single buffered']
    #allocation3 [shape = 's32[2]{0}', space=sflag, size = 0x8, scoped, tag = 'scoped memory for fwd.3']
    #allocation4 [shape = 'u8[262144]{0}', space=vmem, size = 0x40000, scoped, tag = 'output window, operand 2, single buffered']
    #allocation5 [shape = 's32[1]{0}', space=sflag, size = 0x4, scoped, tag = 'scoped memory for fwd.3']
    %15 = vsyncpa [#allocation3], 0
    %16 = vsyncpa [#allocation5], 0
    loop: start=0, step=1, limit=10
    $region2: #{fwd.3} parent=1 // loop_pre_header
      _
    $region3: #{fwd.3} parent=1 // loop_header
      %s18 = sphi 0, %s22
      %p19 = scmp.ge.s32.totalorder %s18, 10
      %s28 = sphi 0, %s30
      %s31 = sphi 0, %s28
      %s32 = sphi 0, %s31
      %s48 = sphi 0, %s32
      %s52 = sphi 0, %s52
      %s54 = sphi 0, %s52
      %s55 = sphi 0, %s54
      %s69 = sphi 0, %s55
      %s75 = sphi 0, %s77
      %s78 = sphi 0, %s75
      %s79 = sphi 0, %s78
      %s95 = sphi 0, %s79
      %s99 = sphi 0, %s99
      %s101 = sphi 0, %s99
      %s102 = sphi 0, %s101
      %s116 = sphi 0, %s102
      %s120 = sphi 0, %s120
      %s122 = sphi 0, %s120
      %s123 = sphi 0, %s122
      %s137 = sphi 0, %s123
      %s141 = sphi 0, %s141
      %s143 = sphi 0, %s141
      %s144 = sphi 0, %s143
      %s158 = sphi 0, %s144
      %s162 = sphi 0, %s162
      %s164 = sphi 0, %s162
      %s165 = sphi 0, %s164
      %s179 = sphi 0, %s165
      %s185 = sphi 0, %s187
      %s188 = sphi 0, %s185
      %s189 = sphi 0, %s188
      %s205 = sphi 0, %s189
      %s209 = sphi 0, %s209
      %s211 = sphi 0, %s209
      %s212 = sphi 0, %s211
      %s226 = sphi 0, %s212
      %s230 = sphi 0, %s230
      %s232 = sphi 0, %s230
      %s233 = sphi 0, %s232
      %s247 = sphi 0, %s233
    $region4: #{fwd.3} parent=1 // loop_header_branch
      %21 = sbr.rel (%p19) target = $region8
    $region5: #{fwd.3} parent=1 // loop_body
      %s23 = ssub.s32 %s18, 1
      %s24 = ssub.s32 %s18, 2
      %s25 = sadd.s32 %s18, 1
      %s26 = ssub.s32 %s18, %s25
      %p27 = scmp.eq.s32.totalorder %s26, 0
      %s29 = sadd.s32 %s28, 1
      %s30 = scalar_select %p27, %s28, %s29
      %p33 = pneg %p27
      %p34 = scmp.eq.s32.totalorder %s18, 7
      %p35 = por %p33, %p34
      %p36 = scmp.ne.s32.totalorder %s28, %s31
      %p37 = scmp.eq.s32.totalorder %s18, 0
      %p38 = por %p36, %p37
      %p39 = scmp.ne.s32.totalorder %s28, %s31
      %p40 = scmp.eq.s32.totalorder %s23, 7
      %p41 = por %p39, %p40
      %p42 = scmp.ne.s32.totalorder %s31, %s32
      %p43 = scmp.eq.s32.totalorder %s23, 0
      %p44 = por %p42, %p43
      %p45 = scmp.ne.s32.totalorder %s31, %s32
      %p46 = scmp.eq.s32.totalorder %s24, 7
      %p47 = por %p45, %p46
      %p49 = scmp.ne.s32.totalorder %s32, %s48
      %p50 = scmp.eq.s32.totalorder %s24, 0
      %p51 = por %p49, %p50
      %s53 = sadd.s32 %s52, 1
      %p56 = scmp.eq.s32.totalorder %s18, 7
      %p57 = scmp.ne.s32.totalorder %s52, %s54
      %p58 = scmp.eq.s32.totalorder %s18, 0
      %p59 = por %p57, %p58
      %p60 = scmp.ne.s32.totalorder %s52, %s54
      %p61 = scmp.eq.s32.totalorder %s23, 7
      %p62 = por %p60, %p61
      %p63 = scmp.ne.s32.totalorder %s54, %s55
      %p64 = scmp.eq.s32.totalorder %s23, 0
      %p65 = por %p63, %p64
      %p66 = scmp.ne.s32.totalorder %s54, %s55
      %p67 = scmp.eq.s32.totalorder %s24, 7
      %p68 = por %p66, %p67
      %p70 = scmp.ne.s32.totalorder %s55, %s69
      %p71 = scmp.eq.s32.totalorder %s24, 0
      %p72 = por %p70, %p71
      %s73 = ssub.s32 %s18, %s25
      %p74 = scmp.eq.s32.totalorder %s73, 0
      %s76 = sadd.s32 %s75, 1
      %s77 = scalar_select %p74, %s75, %s76
      %p80 = pneg %p74
      %p81 = scmp.eq.s32.totalorder %s18, 7
      %p82 = por %p80, %p81
      %p83 = scmp.ne.s32.totalorder %s75, %s78
      %p84 = scmp.eq.s32.totalorder %s18, 0
      %p85 = por %p83, %p84
      %p86 = scmp.ne.s32.totalorder %s75, %s78
      %p87 = scmp.eq.s32.totalorder %s23, 7
      %p88 = por %p86, %p87
      %p89 = scmp.ne.s32.totalorder %s78, %s79
      %p90 = scmp.eq.s32.totalorder %s23, 0
      %p91 = por %p89, %p90
      %p92 = scmp.ne.s32.totalorder %s78, %s79
      %p93 = scmp.eq.s32.totalorder %s24, 7
      %p94 = por %p92, %p93
      %p96 = scmp.ne.s32.totalorder %s79, %s95
      %p97 = scmp.eq.s32.totalorder %s24, 0
      %p98 = por %p96, %p97
      %s100 = sadd.s32 %s99, 1
      %p103 = scmp.eq.s32.totalorder %s18, 7
      %p104 = scmp.ne.s32.totalorder %s99, %s101
      %p105 = scmp.eq.s32.totalorder %s18, 0
      %p106 = por %p104, %p105
      %p107 = scmp.ne.s32.totalorder %s99, %s101
      %p108 = scmp.eq.s32.totalorder %s23, 7
      %p109 = por %p107, %p108
      %p110 = scmp.ne.s32.totalorder %s101, %s102
      %p111 = scmp.eq.s32.totalorder %s23, 0
      %p112 = por %p110, %p111
      %p113 = scmp.ne.s32.totalorder %s101, %s102
      %p114 = scmp.eq.s32.totalorder %s24, 7
      %p115 = por %p113, %p114
      %p117 = scmp.ne.s32.totalorder %s102, %s116
      %p118 = scmp.eq.s32.totalorder %s24, 0
      %p119 = por %p117, %p118
      %s121 = sadd.s32 %s120, 1
      %p124 = scmp.eq.s32.totalorder %s18, 7
      %p125 = scmp.ne.s32.totalorder %s120, %s122
      %p126 = scmp.eq.s32.totalorder %s18, 0
      %p127 = por %p125, %p126
      %p128 = scmp.ne.s32.totalorder %s120, %s122
      %p129 = scmp.eq.s32.totalorder %s23, 7
      %p130 = por %p128, %p129
      %p131 = scmp.ne.s32.totalorder %s122, %s123
      %p132 = scmp.eq.s32.totalorder %s23, 0
      %p133 = por %p131, %p132
      %p134 = scmp.ne.s32.totalorder %s122, %s123
      %p135 = scmp.eq.s32.totalorder %s24, 7
      %p136 = por %p134, %p135
      %p138 = scmp.ne.s32.totalorder %s123, %s137
      %p139 = scmp.eq.s32.totalorder %s24, 0
      %p140 = por %p138, %p139
      %s142 = sadd.s32 %s141, 1
      %p145 = scmp.eq.s32.totalorder %s18, 7
      %p146 = scmp.ne.s32.totalorder %s141, %s143
      %p147 = scmp.eq.s32.totalorder %s18, 0
      %p148 = por %p146, %p147
      %p149 = scmp.ne.s32.totalorder %s141, %s143
      %p150 = scmp.eq.s32.totalorder %s23, 7
      %p151 = por %p149, %p150
      %p152 = scmp.ne.s32.totalorder %s143, %s144
      %p153 = scmp.eq.s32.totalorder %s23, 0
      %p154 = por %p152, %p153
      %p155 = scmp.ne.s32.totalorder %s143, %s144
      %p156 = scmp.eq.s32.totalorder %s24, 7
      %p157 = por %p155, %p156
      %p159 = scmp.ne.s32.totalorder %s144, %s158
      %p160 = scmp.eq.s32.totalorder %s24, 0
      %p161 = por %p159, %p160
      %s163 = sadd.s32 %s162, 1
      %p166 = scmp.eq.s32.totalorder %s18, 7
      %p167 = scmp.ne.s32.totalorder %s162, %s164
      %p168 = scmp.eq.s32.totalorder %s18, 0
      %p169 = por %p167, %p168
      %p170 = scmp.ne.s32.totalorder %s162, %s164
      %p171 = scmp.eq.s32.totalorder %s23, 7
      %p172 = por %p170, %p171
      %p173 = scmp.ne.s32.totalorder %s164, %s165
      %p174 = scmp.eq.s32.totalorder %s23, 0
      %p175 = por %p173, %p174
      %p176 = scmp.ne.s32.totalorder %s164, %s165
      %p177 = scmp.eq.s32.totalorder %s24, 7
      %p178 = por %p176, %p177
      %p180 = scmp.ne.s32.totalorder %s165, %s179
      %p181 = scmp.eq.s32.totalorder %s24, 0
      %p182 = por %p180, %p181
      %s183 = ssub.s32 %s18, %s25
      %p184 = scmp.eq.s32.totalorder %s183, 0
      %s186 = sadd.s32 %s185, 1
      %s187 = scalar_select %p184, %s185, %s186
      %p190 = pneg %p184
      %p191 = scmp.eq.s32.totalorder %s18, 7
      %p192 = por %p190, %p191
      %p193 = scmp.ne.s32.totalorder %s185, %s188
      %p194 = scmp.eq.s32.totalorder %s18, 0
      %p195 = por %p193, %p194
      %p196 = scmp.ne.s32.totalorder %s185, %s188
      %p197 = scmp.eq.s32.totalorder %s23, 7
      %p198 = por %p196, %p197
      %p199 = scmp.ne.s32.totalorder %s188, %s189
      %p200 = scmp.eq.s32.totalorder %s23, 0
      %p201 = por %p199, %p200
      %p202 = scmp.ne.s32.totalorder %s188, %s189
      %p203 = scmp.eq.s32.totalorder %s24, 7
      %p204 = por %p202, %p203
      %p206 = scmp.ne.s32.totalorder %s189, %s205
      %p207 = scmp.eq.s32.totalorder %s24, 0
      %p208 = por %p206, %p207
      %s210 = sadd.s32 %s209, 1
      %p213 = scmp.eq.s32.totalorder %s18, 7
      %p214 = scmp.ne.s32.totalorder %s209, %s211
      %p215 = scmp.eq.s32.totalorder %s18, 0
      %p216 = por %p214, %p215
      %p217 = scmp.ne.s32.totalorder %s209, %s211
      %p218 = scmp.eq.s32.totalorder %s23, 7
      %p219 = por %p217, %p218
      %p220 = scmp.ne.s32.totalorder %s211, %s212
      %p221 = scmp.eq.s32.totalorder %s23, 0
      %p222 = por %p220, %p221
      %p223 = scmp.ne.s32.totalorder %s211, %s212
      %p224 = scmp.eq.s32.totalorder %s24, 7
      %p225 = por %p223, %p224
      %p227 = scmp.ne.s32.totalorder %s212, %s226
      %p228 = scmp.eq.s32.totalorder %s24, 0
      %p229 = por %p227, %p228
      %s231 = sadd.s32 %s230, 1
      %p234 = scmp.eq.s32.totalorder %s18, 7
      %p235 = scmp.ne.s32.totalorder %s230, %s232
      %p236 = scmp.eq.s32.totalorder %s18, 0
      %p237 = por %p235, %p236
      %p238 = scmp.ne.s32.totalorder %s230, %s232
      %p239 = scmp.eq.s32.totalorder %s23, 7
      %p240 = por %p238, %p239
      %p241 = scmp.ne.s32.totalorder %s232, %s233
      %p242 = scmp.eq.s32.totalorder %s23, 0
      %p243 = por %p241, %p242
      %p244 = scmp.ne.s32.totalorder %s232, %s233
      %p245 = scmp.eq.s32.totalorder %s24, 7
      %p246 = por %p244, %p245
      %p248 = scmp.ne.s32.totalorder %s233, %s247
      %p249 = scmp.eq.s32.totalorder %s24, 0
      %p250 = por %p248, %p249
      %p251 = scmp.le.s32.totalorder 1, %s18
      %p252 = scmp.lt.s32.totalorder %s18, 9
      %p253 = pnand %p251, %p252
      %p254 = pneg %p253
      // Predicated region
      $region9: #{fwd.3} parent=5 // pred_check
        _
      $region10: #{fwd.3} parent=5 // pred_check_branch
        %256 = sbr.rel (%p253) target = $region12
      $region11: #{fwd.3} parent=5 // pred_region
        %s257 = ssub.s32 %s18, 1
        // Predicated region
        $region13: #{fwd.3} parent=11 // pred_check
          %p258 = pneg %p65
        $region14: #{fwd.3} parent=11 // pred_check_branch
          %260 = sbr.rel (%p258) target = $region16
        $region15: #{fwd.3} parent=11 // pred_region
          _
        $region16: #{fwd.3} parent=11 // pred_fallthru
          _
        // Predicated region
        $region17: #{fwd.3} parent=11 // pred_check
          %p261 = pneg %p112
        $region18: #{fwd.3} parent=11 // pred_check_branch
          %263 = sbr.rel (%p261) target = $region20
        $region19: #{fwd.3} parent=11 // pred_region
          _
        $region20: #{fwd.3} parent=11 // pred_fallthru
          _
        // Predicated region
        $region21: #{fwd.3} parent=11 // pred_check
          %p264 = pneg %p133
        $region22: #{fwd.3} parent=11 // pred_check_branch
          %266 = sbr.rel (%p264) target = $region24
        $region23: #{fwd.3} parent=11 // pred_region
          _
        $region24: #{fwd.3} parent=11 // pred_fallthru
          _
        // Predicated region
        $region25: #{fwd.3} parent=11 // pred_check
          %p267 = pneg %p154
        $region26: #{fwd.3} parent=11 // pred_check_branch
          %269 = sbr.rel (%p267) target = $region28
        $region27: #{fwd.3} parent=11 // pred_region
          _
        $region28: #{fwd.3} parent=11 // pred_fallthru
          _
        // Predicated region
        $region29: #{fwd.3} parent=11 // pred_check
          %p270 = pneg %p175
        $region30: #{fwd.3} parent=11 // pred_check_branch
          %272 = sbr.rel (%p270) target = $region32
        $region31: #{fwd.3} parent=11 // pred_region
          _
        $region32: #{fwd.3} parent=11 // pred_fallthru
          _
      $region12: #{fwd.3} parent=5 // pred_fallthru
        _
      %p273 = scmp.lt.s32.totalorder %s18, 8
      // Predicated region
      $region33: #{fwd.3} parent=5 // pred_check
        %p274 = pneg %p273
      $region34: #{fwd.3} parent=5 // pred_check_branch
        %276 = sbr.rel (%p274) target = $region36
      $region35: #{fwd.3} parent=5 // pred_region
        // Predicated region
        $region37: #{fwd.3} parent=35 // pred_check
          %p277 = pneg %p38
        $region38: #{fwd.3} parent=35 // pred_check_branch
          %279 = sbr.rel (%p277) target = $region40
        $region39: #{fwd.3} parent=35 // pred_region
          %p280 = scmp.lt.s32.totalorder %s18, 7
          %s281 = scalar_select %p280, %s18, 7
          %s282 = smul.addr %s281, 64
          %s283 = smul.addr %s282, 4
          %s284 = scalar_lea.vmem %s0, %s283
        $region40: #{fwd.3} parent=35 // pred_fallthru
          _
        // Predicated region
        $region41: #{fwd.3} parent=35 // pred_check
          %p285 = pneg %p85
        $region42: #{fwd.3} parent=35 // pred_check_branch
          %287 = sbr.rel (%p285) target = $region44
        $region43: #{fwd.3} parent=35 // pred_region
          %p288 = scmp.lt.s32.totalorder %s18, 7
          %s289 = scalar_select %p288, %s18, 7
          %s290 = smul.addr %s289, 64
          %s291 = smul.addr %s290, 8
          %s292 = scalar_lea.vmem %s2, %s291
        $region44: #{fwd.3} parent=35 // pred_fallthru
          _
      $region36: #{fwd.3} parent=5 // pred_fallthru
        _
      %p293 = scmp.le.s32.totalorder 1, %s18
      %p294 = scmp.lt.s32.totalorder %s18, 9
      %p295 = pnand %p293, %p294
      %p296 = pneg %p295
      // Predicated region
      $region45: #{fwd.3} parent=5 // pred_check
        _
      $region46: #{fwd.3} parent=5 // pred_check_branch
        %298 = sbr.rel (%p295) target = $region48
      $region47: #{fwd.3} parent=5 // pred_region
        %s299 = ssub.s32 %s18, 1
        %p300 = scmp.lt.s32.totalorder %s23, 7
        %s301 = scalar_select %p300, %s23, 7
        %s302 = smul.addr %s301, 64
        %s303 = smul.addr %s302, 4
        %s304 = scalar_lea.vmem %s0, %s303
        %p305 = pneg %p44
        %p306 = pneg %p41
        %p307 = pneg %p65
        %p308 = pneg %p62
        %p309 = scmp.lt.s32.totalorder %s23, 7
        %s310 = scalar_select %p309, %s23, 7
        %s311 = smul.addr %s310, 64
        %s312 = smul.addr %s311, 8
        %s313 = scalar_lea.vmem %s2, %s312
        %p314 = pneg %p91
        %p315 = pneg %p88
        %p316 = pneg %p112
        %p317 = pneg %p109
        %p318 = pneg %p133
        %p319 = pneg %p130
        %p320 = pneg %p154
        %p321 = pneg %p151
        %p322 = pneg %p175
        %p323 = pneg %p172
        %p324 = pneg %p201
        %p325 = pneg %p198
        %p326 = scmp.lt.s32.totalorder %s23, 7
        %s327 = scalar_select %p326, %s23, 7
        %s328 = smul.addr %s327, 64
        %s329 = smul.addr %s328, 4
        %s330 = scalar_lea.vmem %s7, %s329
        %p331 = pneg %p222
        %p332 = pneg %p219
        %p333 = pneg %p243
        %p334 = pneg %p240
        %p335 = scmp.lt.s32.totalorder %s23, 7
        %s336 = scalar_select %p335, %s23, 7
        %s337 = smul.addr %s336, 64
        %s338 = smul.addr %s337, 4
        %s339 = scalar_lea.vmem %s0, %s338
        %p340 = scmp.lt.s32.totalorder %s23, 7
        %s341 = scalar_select %p340, %s23, 7
        %s342 = smul.addr %s341, 64
        %s343 = smul.addr %s342, 8
        %s344 = scalar_lea.vmem %s2, %s343
        %p345 = scmp.lt.s32.totalorder %s23, 7
        %s346 = scalar_select %p345, %s23, 7
        %s347 = smul.addr %s346, 64
        %s348 = smul.addr %s347, 4
        %s349 = scalar_lea.vmem %s7, %s348
        %p351 = scmp.eq.s32.totalorder %s23, 0
        // Predicated region
        $region49: #{fwd.3} parent=47 // pred_check
          %p352 = pneg %p351
        $region50: #{fwd.3} parent=47 // pred_check_branch
          %354 = sbr.rel (%p352) target = $region52
        $region51: #{fwd.3} parent=47 // pred_region
          %355 = vst [vmem:[#allocation2] sm:$0xff] 0.0
          %356 = vst [vmem:[#allocation2 + $0x8] sm:$0xff] 0.0
          %357 = vst [vmem:[#allocation2 + $0x10] sm:$0xff] 0.0
          %358 = vst [vmem:[#allocation2 + $0x18] sm:$0xff] 0.0
          %359 = vst [vmem:[#allocation2 + $0x20] sm:$0xff] 0.0
          %360 = vst [vmem:[#allocation2 + $0x28] sm:$0xff] 0.0
          %361 = vst [vmem:[#allocation2 + $0x30] sm:$0xff] 0.0
          %362 = vst [vmem:[#allocation2 + $0x38] sm:$0xff] 0.0
          %363 = vst [vmem:[#allocation2 + $0x40] sm:$0xff] 0.0
          %364 = vst [vmem:[#allocation2 + $0x48] sm:$0xff] 0.0
          %365 = vst [vmem:[#allocation2 + $0x50] sm:$0xff] 0.0
          %366 = vst [vmem:[#allocation2 + $0x58] sm:$0xff] 0.0
          %367 = vst [vmem:[#allocation2 + $0x60] sm:$0xff] 0.0
          %368 = vst [vmem:[#allocation2 + $0x68] sm:$0xff] 0.0
          %369 = vst [vmem:[#allocation2 + $0x70] sm:$0xff] 0.0
          %370 = vst [vmem:[#allocation2 + $0x78] sm:$0xff] 0.0
          %371 = vst [vmem:[#allocation2 + $0x80] sm:$0xff] 0.0
          %372 = vst [vmem:[#allocation2 + $0x88] sm:$0xff] 0.0
          %373 = vst [vmem:[#allocation2 + $0x90] sm:$0xff] 0.0
          %374 = vst [vmem:[#allocation2 + $0x98] sm:$0xff] 0.0
          %375 = vst [vmem:[#allocation2 + $0xa0] sm:$0xff] 0.0
          %376 = vst [vmem:[#allocation2 + $0xa8] sm:$0xff] 0.0
          %377 = vst [vmem:[#allocation2 + $0xb0] sm:$0xff] 0.0
          %378 = vst [vmem:[#allocation2 + $0xb8] sm:$0xff] 0.0
          %379 = vst [vmem:[#allocation2 + $0xc0] sm:$0xff] 0.0
          %380 = vst [vmem:[#allocation2 + $0xc8] sm:$0xff] 0.0
          %381 = vst [vmem:[#allocation2 + $0xd0] sm:$0xff] 0.0
          %382 = vst [vmem:[#allocation2 + $0xd8] sm:$0xff] 0.0
          %383 = vst [vmem:[#allocation2 + $0xe0] sm:$0xff] 0.0
          %384 = vst [vmem:[#allocation2 + $0xe8] sm:$0xff] 0.0
          %385 = vst [vmem:[#allocation2 + $0xf0] sm:$0xff] 0.0
          %386 = vst [vmem:[#allocation2 + $0xf8] sm:$0xff] 0.0
          %387 = vst [vmem:[#allocation2 + $0x100] sm:$0xff] 0.0
          %388 = vst [vmem:[#allocation2 + $0x108] sm:$0xff] 0.0
          %389 = vst [vmem:[#allocation2 + $0x110] sm:$0xff] 0.0
          %390 = vst [vmem:[#allocation2 + $0x118] sm:$0xff] 0.0
          %391 = vst [vmem:[#allocation2 + $0x120] sm:$0xff] 0.0
          %392 = vst [vmem:[#allocation2 + $0x128] sm:$0xff] 0.0
          %393 = vst [vmem:[#allocation2 + $0x130] sm:$0xff] 0.0
          %394 = vst [vmem:[#allocation2 + $0x138] sm:$0xff] 0.0
          %395 = vst [vmem:[#allocation2 + $0x140] sm:$0xff] 0.0
          %396 = vst [vmem:[#allocation2 + $0x148] sm:$0xff] 0.0
          %397 = vst [vmem:[#allocation2 + $0x150] sm:$0xff] 0.0
          %398 = vst [vmem:[#allocation2 + $0x158] sm:$0xff] 0.0
          %399 = vst [vmem:[#allocation2 + $0x160] sm:$0xff] 0.0
          %400 = vst [vmem:[#allocation2 + $0x168] sm:$0xff] 0.0
          %401 = vst [vmem:[#allocation2 + $0x170] sm:$0xff] 0.0
          %402 = vst [vmem:[#allocation2 + $0x178] sm:$0xff] 0.0
          %403 = vst [vmem:[#allocation2 + $0x180] sm:$0xff] 0.0
          %404 = vst [vmem:[#allocation2 + $0x188] sm:$0xff] 0.0
          %405 = vst [vmem:[#allocation2 + $0x190] sm:$0xff] 0.0
          %406 = vst [vmem:[#allocation2 + $0x198] sm:$0xff] 0.0
          %407 = vst [vmem:[#allocation2 + $0x1a0] sm:$0xff] 0.0
          %408 = vst [vmem:[#allocation2 + $0x1a8] sm:$0xff] 0.0
          %409 = vst [vmem:[#allocation2 + $0x1b0] sm:$0xff] 0.0
          %410 = vst [vmem:[#allocation2 + $0x1b8] sm:$0xff] 0.0
          %411 = vst [vmem:[#allocation2 + $0x1c0] sm:$0xff] 0.0
          %412 = vst [vmem:[#allocation2 + $0x1c8] sm:$0xff] 0.0
          %413 = vst [vmem:[#allocation2 + $0x1d0] sm:$0xff] 0.0
          %414 = vst [vmem:[#allocation2 + $0x1d8] sm:$0xff] 0.0
          %415 = vst [vmem:[#allocation2 + $0x1e0] sm:$0xff] 0.0
          %416 = vst [vmem:[#allocation2 + $0x1e8] sm:$0xff] 0.0
          %417 = vst [vmem:[#allocation2 + $0x1f0] sm:$0xff] 0.0
          %418 = vst [vmem:[#allocation2 + $0x1f8] sm:$0xff] 0.0
          %419 = vst [vmem:[#allocation4] sm:$0xff] 0.0
          %420 = vst [vmem:[#allocation4 + $0x8] sm:$0xff] 0.0
          %421 = vst [vmem:[#allocation4 + $0x10] sm:$0xff] 0.0
          %422 = vst [vmem:[#allocation4 + $0x18] sm:$0xff] 0.0
          %423 = vst [vmem:[#allocation4 + $0x20] sm:$0xff] 0.0
          %424 = vst [vmem:[#allocation4 + $0x28] sm:$0xff] 0.0
          %425 = vst [vmem:[#allocation4 + $0x30] sm:$0xff] 0.0
          %426 = vst [vmem:[#allocation4 + $0x38] sm:$0xff] 0.0
          %427 = vst [vmem:[#allocation4 + $0x40] sm:$0xff] 0.0
          %428 = vst [vmem:[#allocation4 + $0x48] sm:$0xff] 0.0
          %429 = vst [vmem:[#allocation4 + $0x50] sm:$0xff] 0.0
          %430 = vst [vmem:[#allocation4 + $0x58] sm:$0xff] 0.0
          %431 = vst [vmem:[#allocation4 + $0x60] sm:$0xff] 0.0
          %432 = vst [vmem:[#allocation4 + $0x68] sm:$0xff] 0.0
          %433 = vst [vmem:[#allocation4 + $0x70] sm:$0xff] 0.0
          %434 = vst [vmem:[#allocation4 + $0x78] sm:$0xff] 0.0
          %435 = vst [vmem:[#allocation4 + $0x80] sm:$0xff] 0.0
          %436 = vst [vmem:[#allocation4 + $0x88] sm:$0xff] 0.0
          %437 = vst [vmem:[#allocation4 + $0x90] sm:$0xff] 0.0
          %438 = vst [vmem:[#allocation4 + $0x98] sm:$0xff] 0.0
          %439 = vst [vmem:[#allocation4 + $0xa0] sm:$0xff] 0.0
          %440 = vst [vmem:[#allocation4 + $0xa8] sm:$0xff] 0.0
          %441 = vst [vmem:[#allocation4 + $0xb0] sm:$0xff] 0.0
          %442 = vst [vmem:[#allocation4 + $0xb8] sm:$0xff] 0.0
          %443 = vst [vmem:[#allocation4 + $0xc0] sm:$0xff] 0.0
          %444 = vst [vmem:[#allocation4 + $0xc8] sm:$0xff] 0.0
          %445 = vst [vmem:[#allocation4 + $0xd0] sm:$0xff] 0.0
          %446 = vst [vmem:[#allocation4 + $0xd8] sm:$0xff] 0.0
          %447 = vst [vmem:[#allocation4 + $0xe0] sm:$0xff] 0.0
          %448 = vst [vmem:[#allocation4 + $0xe8] sm:$0xff] 0.0
          %449 = vst [vmem:[#allocation4 + $0xf0] sm:$0xff] 0.0
          %450 = vst [vmem:[#allocation4 + $0xf8] sm:$0xff] 0.0
          %451 = vst [vmem:[#allocation4 + $0x100] sm:$0xff] 0.0
          %452 = vst [vmem:[#allocation4 + $0x108] sm:$0xff] 0.0
          %453 = vst [vmem:[#allocation4 + $0x110] sm:$0xff] 0.0
          %454 = vst [vmem:[#allocation4 + $0x118] sm:$0xff] 0.0
          %455 = vst [vmem:[#allocation4 + $0x120] sm:$0xff] 0.0
          %456 = vst [vmem:[#allocation4 + $0x128] sm:$0xff] 0.0
          %457 = vst [vmem:[#allocation4 + $0x130] sm:$0xff] 0.0
          %458 = vst [vmem:[#allocation4 + $0x138] sm:$0xff] 0.0
          %459 = vst [vmem:[#allocation4 + $0x140] sm:$0xff] 0.0
          %460 = vst [vmem:[#allocation4 + $0x148] sm:$0xff] 0.0
          %461 = vst [vmem:[#allocation4 + $0x150] sm:$0xff] 0.0
          %462 = vst [vmem:[#allocation4 + $0x158] sm:$0xff] 0.0
          %463 = vst [vmem:[#allocation4 + $0x160] sm:$0xff] 0.0
          %464 = vst [vmem:[#allocation4 + $0x168] sm:$0xff] 0.0
          %465 = vst [vmem:[#allocation4 + $0x170] sm:$0xff] 0.0
          %466 = vst [vmem:[#allocation4 + $0x178] sm:$0xff] 0.0
          %467 = vst [vmem:[#allocation4 + $0x180] sm:$0xff] 0.0
          %468 = vst [vmem:[#allocation4 + $0x188] sm:$0xff] 0.0
          %469 = vst [vmem:[#allocation4 + $0x190] sm:$0xff] 0.0
          %470 = vst [vmem:[#allocation4 + $0x198] sm:$0xff] 0.0
          %471 = vst [vmem:[#allocation4 + $0x1a0] sm:$0xff] 0.0
          %472 = vst [vmem:[#allocation4 + $0x1a8] sm:$0xff] 0.0
          %473 = vst [vmem:[#allocation4 + $0x1b0] sm:$0xff] 0.0
          %474 = vst [vmem:[#allocation4 + $0x1b8] sm:$0xff] 0.0
          %475 = vst [vmem:[#allocation4 + $0x1c0] sm:$0xff] 0.0
          %476 = vst [vmem:[#allocation4 + $0x1c8] sm:$0xff] 0.0
          %477 = vst [vmem:[#allocation4 + $0x1d0] sm:$0xff] 0.0
          %478 = vst [vmem:[#allocation4 + $0x1d8] sm:$0xff] 0.0
          %479 = vst [vmem:[#allocation4 + $0x1e0] sm:$0xff] 0.0
          %480 = vst [vmem:[#allocation4 + $0x1e8] sm:$0xff] 0.0
          %481 = vst [vmem:[#allocation4 + $0x1f0] sm:$0xff] 0.0
          %482 = vst [vmem:[#allocation4 + $0x1f8] sm:$0xff] 0.0
        $region52: #{fwd.3} parent=47 // pred_fallthru
          _
        %v483 = vld [vmem:[%s339] sm:$0xf]
        %v484 = vld [vmem:[%s339 + $0x4] sm:$0xf]
        %v485 = vld [vmem:[%s339 + $0x8] sm:$0xf]
        %v486 = vld [vmem:[%s339 + $0xc] sm:$0xf]
        %v487 = vld [vmem:[%s339 + $0x10] sm:$0xf]
        %v488 = vld [vmem:[%s339 + $0x14] sm:$0xf]
        %v489 = vld [vmem:[%s339 + $0x18] sm:$0xf]
        %v490 = vld [vmem:[%s339 + $0x1c] sm:$0xf]
        %v491 = vld [vmem:[%s339 + $0x20] sm:$0xf]
        %v492 = vld [vmem:[%s339 + $0x24] sm:$0xf]
        %v493 = vld [vmem:[%s339 + $0x28] sm:$0xf]
        %v494 = vld [vmem:[%s339 + $0x2c] sm:$0xf]
        %v495 = vld [vmem:[%s339 + $0x30] sm:$0xf]
        %v496 = vld [vmem:[%s339 + $0x34] sm:$0xf]
        %v497 = vld [vmem:[%s339 + $0x38] sm:$0xf]
        %v498 = vld [vmem:[%s339 + $0x3c] sm:$0xf]
        %v499 = vld [vmem:[%s339 + $0x40] sm:$0xf]
        %v500 = vld [vmem:[%s339 + $0x44] sm:$0xf]
        %v501 = vld [vmem:[%s339 + $0x48] sm:$0xf]
        %v502 = vld [vmem:[%s339 + $0x4c] sm:$0xf]
        %v503 = vld [vmem:[%s339 + $0x50] sm:$0xf]
        %v504 = vld [vmem:[%s339 + $0x54] sm:$0xf]
        %v505 = vld [vmem:[%s339 + $0x58] sm:$0xf]
        %v506 = vld [vmem:[%s339 + $0x5c] sm:$0xf]
        %v507 = vld [vmem:[%s339 + $0x60] sm:$0xf]
        %v508 = vld [vmem:[%s339 + $0x64] sm:$0xf]
        %v509 = vld [vmem:[%s339 + $0x68] sm:$0xf]
        %v510 = vld [vmem:[%s339 + $0x6c] sm:$0xf]
        %v511 = vld [vmem:[%s339 + $0x70] sm:$0xf]
        %v512 = vld [vmem:[%s339 + $0x74] sm:$0xf]
        %v513 = vld [vmem:[%s339 + $0x78] sm:$0xf]
        %v514 = vld [vmem:[%s339 + $0x7c] sm:$0xf]
        %v515 = vld [vmem:[%s339 + $0x80] sm:$0xf]
        %v516 = vld [vmem:[%s339 + $0x84] sm:$0xf]
        %v517 = vld [vmem:[%s339 + $0x88] sm:$0xf]
        %v518 = vld [vmem:[%s339 + $0x8c] sm:$0xf]
        %v519 = vld [vmem:[%s339 + $0x90] sm:$0xf]
        %v520 = vld [vmem:[%s339 + $0x94] sm:$0xf]
        %v521 = vld [vmem:[%s339 + $0x98] sm:$0xf]
        %v522 = vld [vmem:[%s339 + $0x9c] sm:$0xf]
        %v523 = vld [vmem:[%s339 + $0xa0] sm:$0xf]
        %v524 = vld [vmem:[%s339 + $0xa4] sm:$0xf]
        %v525 = vld [vmem:[%s339 + $0xa8] sm:$0xf]
        %v526 = vld [vmem:[%s339 + $0xac] sm:$0xf]
        %v527 = vld [vmem:[%s339 + $0xb0] sm:$0xf]
        %v528 = vld [vmem:[%s339 + $0xb4] sm:$0xf]
        %v529 = vld [vmem:[%s339 + $0xb8] sm:$0xf]
        %v530 = vld [vmem:[%s339 + $0xbc] sm:$0xf]
        %v531 = vld [vmem:[%s339 + $0xc0] sm:$0xf]
        %v532 = vld [vmem:[%s339 + $0xc4] sm:$0xf]
        %v533 = vld [vmem:[%s339 + $0xc8] sm:$0xf]
        %v534 = vld [vmem:[%s339 + $0xcc] sm:$0xf]
        %v535 = vld [vmem:[%s339 + $0xd0] sm:$0xf]
        %v536 = vld [vmem:[%s339 + $0xd4] sm:$0xf]
        %v537 = vld [vmem:[%s339 + $0xd8] sm:$0xf]
        %v538 = vld [vmem:[%s339 + $0xdc] sm:$0xf]
        %v539 = vld [vmem:[%s339 + $0xe0] sm:$0xf]
        %v540 = vld [vmem:[%s339 + $0xe4] sm:$0xf]
        %v541 = vld [vmem:[%s339 + $0xe8] sm:$0xf]
        %v542 = vld [vmem:[%s339 + $0xec] sm:$0xf]
        %v543 = vld [vmem:[%s339 + $0xf0] sm:$0xf]
        %v544 = vld [vmem:[%s339 + $0xf4] sm:$0xf]
        %v545 = vld [vmem:[%s339 + $0xf8] sm:$0xf]
        %v546 = vld [vmem:[%s339 + $0xfc] sm:$0xf]
        %v547 = vld [vmem:[%s1] sm:$0xf]
        %v548 = vld [vmem:[%s1 + $0x4] sm:$0xf]
        %v549 = vld [vmem:[%s1 + $0x8] sm:$0xf]
        %v550 = vld [vmem:[%s1 + $0xc] sm:$0xf]
        %v551 = vld [vmem:[%s1 + $0x10] sm:$0xf]
        %v552 = vld [vmem:[%s1 + $0x14] sm:$0xf]
        %v553 = vld [vmem:[%s1 + $0x18] sm:$0xf]
        %v554 = vld [vmem:[%s1 + $0x1c] sm:$0xf]
        %v555 = vld [vmem:[%s1 + $0x20] sm:$0xf]
        %v556 = vld [vmem:[%s1 + $0x24] sm:$0xf]
        %v557 = vld [vmem:[%s1 + $0x28] sm:$0xf]
        %v558 = vld [vmem:[%s1 + $0x2c] sm:$0xf]
        %v559 = vld [vmem:[%s1 + $0x30] sm:$0xf]
        %v560 = vld [vmem:[%s1 + $0x34] sm:$0xf]
        %v561 = vld [vmem:[%s1 + $0x38] sm:$0xf]
        %v562 = vld [vmem:[%s1 + $0x3c] sm:$0xf]
        %v627 = vunpack.c.l.b16 %v483
        %v628 = vunpack.c.l.b16 %v484
        %v629 = vunpack.c.l.b16 %v485
        %v630 = vunpack.c.l.b16 %v486
        %v631 = vunpack.c.l.b16 %v487
        %v632 = vunpack.c.l.b16 %v488
        %v633 = vunpack.c.l.b16 %v489
        %v634 = vunpack.c.l.b16 %v490
        %v635 = vunpack.c.l.b16 %v491
        %v636 = vunpack.c.l.b16 %v492
        %v637 = vunpack.c.l.b16 %v493
        %v638 = vunpack.c.l.b16 %v494
        %v639 = vunpack.c.l.b16 %v495
        %v640 = vunpack.c.l.b16 %v496
        %v641 = vunpack.c.l.b16 %v497
        %v642 = vunpack.c.l.b16 %v498
        %v643 = vunpack.c.l.b16 %v499
        %v644 = vunpack.c.l.b16 %v500
        %v645 = vunpack.c.l.b16 %v501
        %v646 = vunpack.c.l.b16 %v502
        %v647 = vunpack.c.l.b16 %v503
        %v648 = vunpack.c.l.b16 %v504
        %v649 = vunpack.c.l.b16 %v505
        %v650 = vunpack.c.l.b16 %v506
        %v651 = vunpack.c.l.b16 %v507
        %v652 = vunpack.c.l.b16 %v508
        %v653 = vunpack.c.l.b16 %v509
        %v654 = vunpack.c.l.b16 %v510
        %v655 = vunpack.c.l.b16 %v511
        %v656 = vunpack.c.l.b16 %v512
        %v657 = vunpack.c.l.b16 %v513
        %v658 = vunpack.c.l.b16 %v514
        %v659 = vunpack.c.l.b16 %v515
        %v660 = vunpack.c.l.b16 %v516
        %v661 = vunpack.c.l.b16 %v517
        %v662 = vunpack.c.l.b16 %v518
        %v663 = vunpack.c.l.b16 %v519
        %v664 = vunpack.c.l.b16 %v520
        %v665 = vunpack.c.l.b16 %v521
        %v666 = vunpack.c.l.b16 %v522
        %v667 = vunpack.c.l.b16 %v523
        %v668 = vunpack.c.l.b16 %v524
        %v669 = vunpack.c.l.b16 %v525
        %v670 = vunpack.c.l.b16 %v526
        %v671 = vunpack.c.l.b16 %v527
        %v672 = vunpack.c.l.b16 %v528
        %v673 = vunpack.c.l.b16 %v529
        %v674 = vunpack.c.l.b16 %v530
        %v675 = vunpack.c.l.b16 %v531
        %v676 = vunpack.c.l.b16 %v532
        %v677 = vunpack.c.l.b16 %v533
        %v678 = vunpack.c.l.b16 %v534
        %v679 = vunpack.c.l.b16 %v535
        %v680 = vunpack.c.l.b16 %v536
        %v681 = vunpack.c.l.b16 %v537
        %v682 = vunpack.c.l.b16 %v538
        %v683 = vunpack.c.l.b16 %v539
        %v684 = vunpack.c.l.b16 %v540
        %v685 = vunpack.c.l.b16 %v541
        %v686 = vunpack.c.l.b16 %v542
        %v687 = vunpack.c.l.b16 %v543
        %v688 = vunpack.c.l.b16 %v544
        %v689 = vunpack.c.l.b16 %v545
        %v690 = vunpack.c.l.b16 %v546
        %v691 = vpack.c.b16 %v628, %v627
        %v692 = vpack.c.b16 %v630, %v629
        %v693 = vpack.c.b16 %v632, %v631
        %v694 = vpack.c.b16 %v634, %v633
        %v695 = vpack.c.b16 %v636, %v635
        %v696 = vpack.c.b16 %v638, %v637
        %v697 = vpack.c.b16 %v640, %v639
        %v698 = vpack.c.b16 %v642, %v641
        %v699 = vpack.c.b16 %v644, %v643
        %v700 = vpack.c.b16 %v646, %v645
        %v701 = vpack.c.b16 %v648, %v647
        %v702 = vpack.c.b16 %v650, %v649
        %v703 = vpack.c.b16 %v652, %v651
        %v704 = vpack.c.b16 %v654, %v653
        %v705 = vpack.c.b16 %v656, %v655
        %v706 = vpack.c.b16 %v658, %v657
        %v707 = vpack.c.b16 %v660, %v659
        %v708 = vpack.c.b16 %v662, %v661
        %v709 = vpack.c.b16 %v664, %v663
        %v710 = vpack.c.b16 %v666, %v665
        %v711 = vpack.c.b16 %v668, %v667
        %v712 = vpack.c.b16 %v670, %v669
        %v713 = vpack.c.b16 %v672, %v671
        %v714 = vpack.c.b16 %v674, %v673
        %v715 = vpack.c.b16 %v676, %v675
        %v716 = vpack.c.b16 %v678, %v677
        %v717 = vpack.c.b16 %v680, %v679
        %v718 = vpack.c.b16 %v682, %v681
        %v719 = vpack.c.b16 %v684, %v683
        %v720 = vpack.c.b16 %v686, %v685
        %v721 = vpack.c.b16 %v688, %v687
        %v722 = vpack.c.b16 %v690, %v689
        %v771 = vunpack.c.l.b16 %v547
        %v772 = vunpack.c.l.b16 %v548
        %v773 = vunpack.c.l.b16 %v549
        %v774 = vunpack.c.l.b16 %v550
        %v775 = vunpack.c.l.b16 %v551
        %v776 = vunpack.c.l.b16 %v552
        %v777 = vunpack.c.l.b16 %v553
        %v778 = vunpack.c.l.b16 %v554
        %v779 = vunpack.c.l.b16 %v555
        %v780 = vunpack.c.l.b16 %v556
        %v781 = vunpack.c.l.b16 %v557
        %v782 = vunpack.c.l.b16 %v558
        %v783 = vunpack.c.l.b16 %v559
        %v784 = vunpack.c.l.b16 %v560
        %v785 = vunpack.c.l.b16 %v561
        %v786 = vunpack.c.l.b16 %v562
        %v787 = vpack.c.b16 %v772, %v771
        %v788 = vpack.c.b16 %v774, %v773
        %v789 = vpack.c.b16 %v776, %v775
        %v790 = vpack.c.b16 %v778, %v777
        %v791 = vpack.c.b16 %v780, %v779
        %v792 = vpack.c.b16 %v782, %v781
        %v793 = vpack.c.b16 %v784, %v783
        %v794 = vpack.c.b16 %v786, %v785
        %803 = vmatprep.subr.bf16.mxu0 0
        %804 = vmatpush1.bf16.msra.mxu0 %v794
        %805 = vmatprep.subr.bf16.mxu0 0
        %806 = vmatpush1.bf16.msra.mxu0 %v793
        %807 = vmatprep.subr.bf16.mxu0 0
        %808 = vmatpush1.bf16.msra.mxu0 %v792
        %809 = vmatprep.subr.bf16.mxu0 0
        %810 = vmatpush1.bf16.msra.mxu0 %v791
        %811 = vmatprep.subr.bf16.mxu0 0
        %812 = vmatpush1.bf16.msra.mxu0 %v790
        %813 = vmatprep.subr.bf16.mxu0 0
        %814 = vmatpush1.bf16.msra.mxu0 %v789
        %815 = vmatprep.subr.bf16.mxu0 0
        %816 = vmatpush1.bf16.msra.mxu0 %v788
        %817 = vmatprep.subr.bf16.mxu0 0
        %818 = vmatpush1.bf16.msra.mxu0 %v787
        %819 = vmatprep.subr.bf16.mxu0 0
        %820 = vmatpush2.bf16.msra.mxu0 0
        %821 = vmatprep.subr.bf16.mxu0 0
        %822 = vmatpush2.bf16.msra.mxu0 0
        %823 = vmatprep.subr.bf16.mxu0 0
        %824 = vmatpush2.bf16.msra.mxu0 0
        %825 = vmatprep.subr.bf16.mxu0 0
        %826 = vmatpush2.bf16.msra.mxu0 0
        %827 = vmatprep.subr.bf16.mxu0 0
        %828 = vmatpush2.bf16.msra.mxu0 0
        %829 = vmatprep.subr.bf16.mxu0 0
        %830 = vmatpush2.bf16.msra.mxu0 0
        %831 = vmatprep.subr.bf16.mxu0 0
        %832 = vmatpush2.bf16.msra.mxu0 0
        %833 = vmatprep.subr.bf16.mxu0 0
        %834 = vmatpush2.bf16.msra.mxu0 0
        %835 = vmatprep.mubr.bf16.mxu0 0
        %836 = vmatmul.mubr.bf16.gmra.mxu0 %v691
        %v837 = vpop.f32.mrf.mxu0
        %v838 = vadd.f32 0.0, %v837
        %v839 = vpop.f32.mrf.mxu0
        %v840 = vpop.f32.mrf.mxu0
        %v841 = vadd.f32 0.0, %v840
        %v842 = vpop.f32.mrf.mxu0
        %843 = vmatprep.mubr.bf16.mxu0 0
        %844 = vmatmul.mubr.bf16.gmra.mxu0 %v692
        %v845 = vpop.f32.mrf.mxu0
        %v846 = vadd.f32 0.0, %v845
        %v847 = vpop.f32.mrf.mxu0
        %v848 = vpop.f32.mrf.mxu0
        %v849 = vadd.f32 0.0, %v848
        %v850 = vpop.f32.mrf.mxu0
        %851 = vmatprep.mubr.bf16.mxu0 0
        %852 = vmatmul.mubr.bf16.gmra.mxu0 %v693
        %v853 = vpop.f32.mrf.mxu0
        %v854 = vadd.f32 0.0, %v853
        %v855 = vpop.f32.mrf.mxu0
        %v856 = vpop.f32.mrf.mxu0
        %v857 = vadd.f32 0.0, %v856
        %v858 = vpop.f32.mrf.mxu0
        %859 = vmatprep.mubr.bf16.mxu0 0
        %860 = vmatmul.mubr.bf16.gmra.mxu0 %v694
        %v861 = vpop.f32.mrf.mxu0
        %v862 = vadd.f32 0.0, %v861
        %v863 = vpop.f32.mrf.mxu0
        %v864 = vpop.f32.mrf.mxu0
        %v865 = vadd.f32 0.0, %v864
        %v866 = vpop.f32.mrf.mxu0
        %867 = vmatprep.mubr.bf16.mxu0 0
        %868 = vmatmul.mubr.bf16.gmra.mxu0 %v695
        %v869 = vpop.f32.mrf.mxu0
        %v870 = vadd.f32 0.0, %v869
        %v871 = vpop.f32.mrf.mxu0
        %v872 = vpop.f32.mrf.mxu0
        %v873 = vadd.f32 0.0, %v872
        %v874 = vpop.f32.mrf.mxu0
        %875 = vmatprep.mubr.bf16.mxu0 0
        %876 = vmatmul.mubr.bf16.gmra.mxu0 %v696
        %v877 = vpop.f32.mrf.mxu0
        %v878 = vadd.f32 0.0, %v877
        %v879 = vpop.f32.mrf.mxu0
        %v880 = vpop.f32.mrf.mxu0
        %v881 = vadd.f32 0.0, %v880
        %v882 = vpop.f32.mrf.mxu0
        %883 = vmatprep.mubr.bf16.mxu0 0
        %884 = vmatmul.mubr.bf16.gmra.mxu0 %v697
        %v885 = vpop.f32.mrf.mxu0
        %v886 = vadd.f32 0.0, %v885
        %v887 = vpop.f32.mrf.mxu0
        %v888 = vpop.f32.mrf.mxu0
        %v889 = vadd.f32 0.0, %v888
        %v890 = vpop.f32.mrf.mxu0
        %891 = vmatprep.mubr.bf16.mxu0 0
        %892 = vmatmul.mubr.bf16.gmra.mxu0 %v698
        %v893 = vpop.f32.mrf.mxu0
        %v894 = vadd.f32 0.0, %v893
        %v895 = vpop.f32.mrf.mxu0
        %v896 = vpop.f32.mrf.mxu0
        %v897 = vadd.f32 0.0, %v896
        %v898 = vpop.f32.mrf.mxu0
        %899 = vmatprep.mubr.bf16.mxu0 0
        %900 = vmatmul.mubr.bf16.gmra.mxu0 %v699
        %v901 = vpop.f32.mrf.mxu0
        %v902 = vadd.f32 0.0, %v901
        %v903 = vpop.f32.mrf.mxu0
        %v904 = vpop.f32.mrf.mxu0
        %v905 = vadd.f32 0.0, %v904
        %v906 = vpop.f32.mrf.mxu0
        %907 = vmatprep.mubr.bf16.mxu0 0
        %908 = vmatmul.mubr.bf16.gmra.mxu0 %v700
        %v909 = vpop.f32.mrf.mxu0
        %v910 = vadd.f32 0.0, %v909
        %v911 = vpop.f32.mrf.mxu0
        %v912 = vpop.f32.mrf.mxu0
        %v913 = vadd.f32 0.0, %v912
        %v914 = vpop.f32.mrf.mxu0
        %915 = vmatprep.mubr.bf16.mxu0 0
        %916 = vmatmul.mubr.bf16.gmra.mxu0 %v701
        %v917 = vpop.f32.mrf.mxu0
        %v918 = vadd.f32 0.0, %v917
        %v919 = vpop.f32.mrf.mxu0
        %v920 = vpop.f32.mrf.mxu0
        %v921 = vadd.f32 0.0, %v920
        %v922 = vpop.f32.mrf.mxu0
        %923 = vmatprep.mubr.bf16.mxu0 0
        %924 = vmatmul.mubr.bf16.gmra.mxu0 %v702
        %v925 = vpop.f32.mrf.mxu0
        %v926 = vadd.f32 0.0, %v925
        %v927 = vpop.f32.mrf.mxu0
        %v928 = vpop.f32.mrf.mxu0
        %v929 = vadd.f32 0.0, %v928
        %v930 = vpop.f32.mrf.mxu0
        %931 = vmatprep.mubr.bf16.mxu0 0
        %932 = vmatmul.mubr.bf16.gmra.mxu0 %v703
        %v933 = vpop.f32.mrf.mxu0
        %v934 = vadd.f32 0.0, %v933
        %v935 = vpop.f32.mrf.mxu0
        %v936 = vpop.f32.mrf.mxu0
        %v937 = vadd.f32 0.0, %v936
        %v938 = vpop.f32.mrf.mxu0
        %939 = vmatprep.mubr.bf16.mxu0 0
        %940 = vmatmul.mubr.bf16.gmra.mxu0 %v704
        %v941 = vpop.f32.mrf.mxu0
        %v942 = vadd.f32 0.0, %v941
        %v943 = vpop.f32.mrf.mxu0
        %v944 = vpop.f32.mrf.mxu0
        %v945 = vadd.f32 0.0, %v944
        %v946 = vpop.f32.mrf.mxu0
        %947 = vmatprep.mubr.bf16.mxu0 0
        %948 = vmatmul.mubr.bf16.gmra.mxu0 %v705
        %v949 = vpop.f32.mrf.mxu0
        %v950 = vadd.f32 0.0, %v949
        %v951 = vpop.f32.mrf.mxu0
        %v952 = vpop.f32.mrf.mxu0
        %v953 = vadd.f32 0.0, %v952
        %v954 = vpop.f32.mrf.mxu0
        %955 = vmatprep.mubr.bf16.mxu0 0
        %956 = vmatmul.mubr.bf16.gmra.mxu0 %v706
        %v957 = vpop.f32.mrf.mxu0
        %v958 = vadd.f32 0.0, %v957
        %v959 = vpop.f32.mrf.mxu0
        %v960 = vpop.f32.mrf.mxu0
        %v961 = vadd.f32 0.0, %v960
        %v962 = vpop.f32.mrf.mxu0
        %963 = vmatprep.mubr.bf16.mxu0 0
        %964 = vmatmul.mubr.bf16.gmra.mxu0 %v707
        %v965 = vpop.f32.mrf.mxu0
        %v966 = vadd.f32 0.0, %v965
        %v967 = vpop.f32.mrf.mxu0
        %v968 = vpop.f32.mrf.mxu0
        %v969 = vadd.f32 0.0, %v968
        %v970 = vpop.f32.mrf.mxu0
        %971 = vmatprep.mubr.bf16.mxu0 0
        %972 = vmatmul.mubr.bf16.gmra.mxu0 %v708
        %v973 = vpop.f32.mrf.mxu0
        %v974 = vadd.f32 0.0, %v973
        %v975 = vpop.f32.mrf.mxu0
        %v976 = vpop.f32.mrf.mxu0
        %v977 = vadd.f32 0.0, %v976
        %v978 = vpop.f32.mrf.mxu0
        %979 = vmatprep.mubr.bf16.mxu0 0
        %980 = vmatmul.mubr.bf16.gmra.mxu0 %v709
        %v981 = vpop.f32.mrf.mxu0
        %v982 = vadd.f32 0.0, %v981
        %v983 = vpop.f32.mrf.mxu0
        %v984 = vpop.f32.mrf.mxu0
        %v985 = vadd.f32 0.0, %v984
        %v986 = vpop.f32.mrf.mxu0
        %987 = vmatprep.mubr.bf16.mxu0 0
        %988 = vmatmul.mubr.bf16.gmra.mxu0 %v710
        %v989 = vpop.f32.mrf.mxu0
        %v990 = vadd.f32 0.0, %v989
        %v991 = vpop.f32.mrf.mxu0
        %v992 = vpop.f32.mrf.mxu0
        %v993 = vadd.f32 0.0, %v992
        %v994 = vpop.f32.mrf.mxu0
        %995 = vmatprep.mubr.bf16.mxu0 0
        %996 = vmatmul.mubr.bf16.gmra.mxu0 %v711
        %v997 = vpop.f32.mrf.mxu0
        %v998 = vadd.f32 0.0, %v997
        %v999 = vpop.f32.mrf.mxu0
        %v1000 = vpop.f32.mrf.mxu0
        %v1001 = vadd.f32 0.0, %v1000
        %v1002 = vpop.f32.mrf.mxu0
        %1003 = vmatprep.mubr.bf16.mxu0 0
        %1004 = vmatmul.mubr.bf16.gmra.mxu0 %v712
        %v1005 = vpop.f32.mrf.mxu0
        %v1006 = vadd.f32 0.0, %v1005
        %v1007 = vpop.f32.mrf.mxu0
        %v1008 = vpop.f32.mrf.mxu0
        %v1009 = vadd.f32 0.0, %v1008
        %v1010 = vpop.f32.mrf.mxu0
        %1011 = vmatprep.mubr.bf16.mxu0 0
        %1012 = vmatmul.mubr.bf16.gmra.mxu0 %v713
        %v1013 = vpop.f32.mrf.mxu0
        %v1014 = vadd.f32 0.0, %v1013
        %v1015 = vpop.f32.mrf.mxu0
        %v1016 = vpop.f32.mrf.mxu0
        %v1017 = vadd.f32 0.0, %v1016
        %v1018 = vpop.f32.mrf.mxu0
        %1019 = vmatprep.mubr.bf16.mxu0 0
        %1020 = vmatmul.mubr.bf16.gmra.mxu0 %v714
        %v1021 = vpop.f32.mrf.mxu0
        %v1022 = vadd.f32 0.0, %v1021
        %v1023 = vpop.f32.mrf.mxu0
        %v1024 = vpop.f32.mrf.mxu0
        %v1025 = vadd.f32 0.0, %v1024
        %v1026 = vpop.f32.mrf.mxu0
        %1027 = vmatprep.mubr.bf16.mxu0 0
        %1028 = vmatmul.mubr.bf16.gmra.mxu0 %v715
        %v1029 = vpop.f32.mrf.mxu0
        %v1030 = vadd.f32 0.0, %v1029
        %v1031 = vpop.f32.mrf.mxu0
        %v1032 = vpop.f32.mrf.mxu0
        %v1033 = vadd.f32 0.0, %v1032
        %v1034 = vpop.f32.mrf.mxu0
        %1035 = vmatprep.mubr.bf16.mxu0 0
        %1036 = vmatmul.mubr.bf16.gmra.mxu0 %v716
        %v1037 = vpop.f32.mrf.mxu0
        %v1038 = vadd.f32 0.0, %v1037
        %v1039 = vpop.f32.mrf.mxu0
        %v1040 = vpop.f32.mrf.mxu0
        %v1041 = vadd.f32 0.0, %v1040
        %v1042 = vpop.f32.mrf.mxu0
        %1043 = vmatprep.mubr.bf16.mxu0 0
        %1044 = vmatmul.mubr.bf16.gmra.mxu0 %v717
        %v1045 = vpop.f32.mrf.mxu0
        %v1046 = vadd.f32 0.0, %v1045
        %v1047 = vpop.f32.mrf.mxu0
        %v1048 = vpop.f32.mrf.mxu0
        %v1049 = vadd.f32 0.0, %v1048
        %v1050 = vpop.f32.mrf.mxu0
        %1051 = vmatprep.mubr.bf16.mxu0 0
        %1052 = vmatmul.mubr.bf16.gmra.mxu0 %v718
        %v1053 = vpop.f32.mrf.mxu0
        %v1054 = vadd.f32 0.0, %v1053
        %v1055 = vpop.f32.mrf.mxu0
        %v1056 = vpop.f32.mrf.mxu0
        %v1057 = vadd.f32 0.0, %v1056
        %v1058 = vpop.f32.mrf.mxu0
        %1059 = vmatprep.mubr.bf16.mxu0 0
        %1060 = vmatmul.mubr.bf16.gmra.mxu0 %v719
        %v1061 = vpop.f32.mrf.mxu0
        %v1062 = vadd.f32 0.0, %v1061
        %v1063 = vpop.f32.mrf.mxu0
        %v1064 = vpop.f32.mrf.mxu0
        %v1065 = vadd.f32 0.0, %v1064
        %v1066 = vpop.f32.mrf.mxu0
        %1067 = vmatprep.mubr.bf16.mxu0 0
        %1068 = vmatmul.mubr.bf16.gmra.mxu0 %v720
        %v1069 = vpop.f32.mrf.mxu0
        %v1070 = vadd.f32 0.0, %v1069
        %v1071 = vpop.f32.mrf.mxu0
        %v1072 = vpop.f32.mrf.mxu0
        %v1073 = vadd.f32 0.0, %v1072
        %v1074 = vpop.f32.mrf.mxu0
        %1075 = vmatprep.mubr.bf16.mxu0 0
        %1076 = vmatmul.mubr.bf16.gmra.mxu0 %v721
        %v1077 = vpop.f32.mrf.mxu0
        %v1078 = vadd.f32 0.0, %v1077
        %v1079 = vpop.f32.mrf.mxu0
        %v1080 = vpop.f32.mrf.mxu0
        %v1081 = vadd.f32 0.0, %v1080
        %v1082 = vpop.f32.mrf.mxu0
        %1083 = vmatprep.mubr.bf16.mxu0 0
        %1084 = vmatmul.mubr.bf16.gmra.mxu0 %v722
        %v1085 = vpop.f32.mrf.mxu0
        %v1086 = vadd.f32 0.0, %v1085
        %v1087 = vpop.f32.mrf.mxu0
        %v1088 = vpop.f32.mrf.mxu0
        %v1089 = vadd.f32 0.0, %v1088
        %v1090 = vpop.f32.mrf.mxu0
        %1091 = vdwg.mxu0
        %v1092 = vadd.f32 %v838, %v841
        %v1093 = vadd.f32 %v1092, %v846
        %v1094 = vadd.f32 %v1093, %v849
        %v1095 = vadd.f32 %v1094, %v854
        %v1096 = vadd.f32 %v1095, %v857
        %v1097 = vadd.f32 %v1096, %v862
        %v1098 = vadd.f32 %v1097, %v865
        %v1099 = vadd.f32 %v1098, %v870
        %v1100 = vadd.f32 %v1099, %v873
        %v1101 = vadd.f32 %v1100, %v878
        %v1102 = vadd.f32 %v1101, %v881
        %v1103 = vadd.f32 %v1102, %v886
        %v1104 = vadd.f32 %v1103, %v889
        %v1105 = vadd.f32 %v1104, %v894
        %v1106 = vadd.f32 %v1105, %v897
        %v1107 = vadd.f32 %v1106, %v902
        %v1108 = vadd.f32 %v1107, %v905
        %v1109 = vadd.f32 %v1108, %v910
        %v1110 = vadd.f32 %v1109, %v913
        %v1111 = vadd.f32 %v1110, %v918
        %v1112 = vadd.f32 %v1111, %v921
        %v1113 = vadd.f32 %v1112, %v926
        %v1114 = vadd.f32 %v1113, %v929
        %v1115 = vadd.f32 %v1114, %v934
        %v1116 = vadd.f32 %v1115, %v937
        %v1117 = vadd.f32 %v1116, %v942
        %v1118 = vadd.f32 %v1117, %v945
        %v1119 = vadd.f32 %v1118, %v950
        %v1120 = vadd.f32 %v1119, %v953
        %v1121 = vadd.f32 %v1120, %v958
        %v1122 = vadd.f32 %v1121, %v961
        %v1123 = vadd.f32 %v1122, %v966
        %v1124 = vadd.f32 %v1123, %v969
        %v1125 = vadd.f32 %v1124, %v974
        %v1126 = vadd.f32 %v1125, %v977
        %v1127 = vadd.f32 %v1126, %v982
        %v1128 = vadd.f32 %v1127, %v985
        %v1129 = vadd.f32 %v1128, %v990
        %v1130 = vadd.f32 %v1129, %v993
        %v1131 = vadd.f32 %v1130, %v998
        %v1132 = vadd.f32 %v1131, %v1001
        %v1133 = vadd.f32 %v1132, %v1006
        %v1134 = vadd.f32 %v1133, %v1009
        %v1135 = vadd.f32 %v1134, %v1014
        %v1136 = vadd.f32 %v1135, %v1017
        %v1137 = vadd.f32 %v1136, %v1022
        %v1138 = vadd.f32 %v1137, %v1025
        %v1139 = vadd.f32 %v1138, %v1030
        %v1140 = vadd.f32 %v1139, %v1033
        %v1141 = vadd.f32 %v1140, %v1038
        %v1142 = vadd.f32 %v1141, %v1041
        %v1143 = vadd.f32 %v1142, %v1046
        %v1144 = vadd.f32 %v1143, %v1049
        %v1145 = vadd.f32 %v1144, %v1054
        %v1146 = vadd.f32 %v1145, %v1057
        %v1147 = vadd.f32 %v1146, %v1062
        %v1148 = vadd.f32 %v1147, %v1065
        %v1149 = vadd.f32 %v1148, %v1070
        %v1150 = vadd.f32 %v1149, %v1073
        %v1151 = vadd.f32 %v1150, %v1078
        %v1152 = vadd.f32 %v1151, %v1081
        %v1153 = vadd.f32 %v1152, %v1086
        %v1154 = vadd.f32 %v1153, %v1089
        %v1155 = vrot.slane %v1154, 4
        %v1156 = vadd.f32 %v1154, %v1155
        %v1157 = vrot.slane %v1156, 2
        %v1158 = vadd.f32 %v1156, %v1157
        %v1159 = vrot.slane %v1158, 1
        %v1160 = vadd.f32 %v1158, %v1159
        %v1161 = vrcp.pop 512.0
        %v1162 = vmul.f32 %v1160, %v1161
        %v1163 = vsub.f32 %v838, %v1162
        %v1164 = vsub.f32 %v841, %v1162
        %v1165 = vsub.f32 %v846, %v1162
        %v1166 = vsub.f32 %v849, %v1162
        %v1167 = vsub.f32 %v854, %v1162
        %v1168 = vsub.f32 %v857, %v1162
        %v1169 = vsub.f32 %v862, %v1162
        %v1170 = vsub.f32 %v865, %v1162
        %v1171 = vsub.f32 %v870, %v1162
        %v1172 = vsub.f32 %v873, %v1162
        %v1173 = vsub.f32 %v878, %v1162
        %v1174 = vsub.f32 %v881, %v1162
        %v1175 = vsub.f32 %v886, %v1162
        %v1176 = vsub.f32 %v889, %v1162
        %v1177 = vsub.f32 %v894, %v1162
        %v1178 = vsub.f32 %v897, %v1162
        %v1179 = vsub.f32 %v902, %v1162
        %v1180 = vsub.f32 %v905, %v1162
        %v1181 = vsub.f32 %v910, %v1162
        %v1182 = vsub.f32 %v913, %v1162
        %v1183 = vsub.f32 %v918, %v1162
        %v1184 = vsub.f32 %v921, %v1162
        %v1185 = vsub.f32 %v926, %v1162
        %v1186 = vsub.f32 %v929, %v1162
        %v1187 = vsub.f32 %v934, %v1162
        %v1188 = vsub.f32 %v937, %v1162
        %v1189 = vsub.f32 %v942, %v1162
        %v1190 = vsub.f32 %v945, %v1162
        %v1191 = vsub.f32 %v950, %v1162
        %v1192 = vsub.f32 %v953, %v1162
        %v1193 = vsub.f32 %v958, %v1162
        %v1194 = vsub.f32 %v961, %v1162
        %v1195 = vsub.f32 %v966, %v1162
        %v1196 = vsub.f32 %v969, %v1162
        %v1197 = vsub.f32 %v974, %v1162
        %v1198 = vsub.f32 %v977, %v1162
        %v1199 = vsub.f32 %v982, %v1162
        %v1200 = vsub.f32 %v985, %v1162
        %v1201 = vsub.f32 %v990, %v1162
        %v1202 = vsub.f32 %v993, %v1162
        %v1203 = vsub.f32 %v998, %v1162
        %v1204 = vsub.f32 %v1001, %v1162
        %v1205 = vsub.f32 %v1006, %v1162
        %v1206 = vsub.f32 %v1009, %v1162
        %v1207 = vsub.f32 %v1014, %v1162
        %v1208 = vsub.f32 %v1017, %v1162
        %v1209 = vsub.f32 %v1022, %v1162
        %v1210 = vsub.f32 %v1025, %v1162
        %v1211 = vsub.f32 %v1030, %v1162
        %v1212 = vsub.f32 %v1033, %v1162
        %v1213 = vsub.f32 %v1038, %v1162
        %v1214 = vsub.f32 %v1041, %v1162
        %v1215 = vsub.f32 %v1046, %v1162
        %v1216 = vsub.f32 %v1049, %v1162
        %v1217 = vsub.f32 %v1054, %v1162
        %v1218 = vsub.f32 %v1057, %v1162
        %v1219 = vsub.f32 %v1062, %v1162
        %v1220 = vsub.f32 %v1065, %v1162
        %v1221 = vsub.f32 %v1070, %v1162
        %v1222 = vsub.f32 %v1073, %v1162
        %v1223 = vsub.f32 %v1078, %v1162
        %v1224 = vsub.f32 %v1081, %v1162
        %v1225 = vsub.f32 %v1086, %v1162
        %v1226 = vsub.f32 %v1089, %v1162
        %v1227 = vmul.f32 %v1163, %v1163
        %v1228 = vmul.f32 %v1164, %v1164
        %v1229 = vmul.f32 %v1165, %v1165
        %v1230 = vmul.f32 %v1166, %v1166
        %v1231 = vmul.f32 %v1167, %v1167
        %v1232 = vmul.f32 %v1168, %v1168
        %v1233 = vmul.f32 %v1169, %v1169
        %v1234 = vmul.f32 %v1170, %v1170
        %v1235 = vmul.f32 %v1171, %v1171
        %v1236 = vmul.f32 %v1172, %v1172
        %v1237 = vmul.f32 %v1173, %v1173
        %v1238 = vmul.f32 %v1174, %v1174
        %v1239 = vmul.f32 %v1175, %v1175
        %v1240 = vmul.f32 %v1176, %v1176
        %v1241 = vmul.f32 %v1177, %v1177
        %v1242 = vmul.f32 %v1178, %v1178
        %v1243 = vmul.f32 %v1179, %v1179
        %v1244 = vmul.f32 %v1180, %v1180
        %v1245 = vmul.f32 %v1181, %v1181
        %v1246 = vmul.f32 %v1182, %v1182
        %v1247 = vmul.f32 %v1183, %v1183
        %v1248 = vmul.f32 %v1184, %v1184
        %v1249 = vmul.f32 %v1185, %v1185
        %v1250 = vmul.f32 %v1186, %v1186
        %v1251 = vmul.f32 %v1187, %v1187
        %v1252 = vmul.f32 %v1188, %v1188
        %v1253 = vmul.f32 %v1189, %v1189
        %v1254 = vmul.f32 %v1190, %v1190
        %v1255 = vmul.f32 %v1191, %v1191
        %v1256 = vmul.f32 %v1192, %v1192
        %v1257 = vmul.f32 %v1193, %v1193
        %v1258 = vmul.f32 %v1194, %v1194
        %v1259 = vmul.f32 %v1195, %v1195
        %v1260 = vmul.f32 %v1196, %v1196
        %v1261 = vmul.f32 %v1197, %v1197
        %v1262 = vmul.f32 %v1198, %v1198
        %v1263 = vmul.f32 %v1199, %v1199
        %v1264 = vmul.f32 %v1200, %v1200
        %v1265 = vmul.f32 %v1201, %v1201
        %v1266 = vmul.f32 %v1202, %v1202
        %v1267 = vmul.f32 %v1203, %v1203
        %v1268 = vmul.f32 %v1204, %v1204
        %v1269 = vmul.f32 %v1205, %v1205
        %v1270 = vmul.f32 %v1206, %v1206
        %v1271 = vmul.f32 %v1207, %v1207
        %v1272 = vmul.f32 %v1208, %v1208
        %v1273 = vmul.f32 %v1209, %v1209
        %v1274 = vmul.f32 %v1210, %v1210
        %v1275 = vmul.f32 %v1211, %v1211
        %v1276 = vmul.f32 %v1212, %v1212
        %v1277 = vmul.f32 %v1213, %v1213
        %v1278 = vmul.f32 %v1214, %v1214
        %v1279 = vmul.f32 %v1215, %v1215
        %v1280 = vmul.f32 %v1216, %v1216
        %v1281 = vmul.f32 %v1217, %v1217
        %v1282 = vmul.f32 %v1218, %v1218
        %v1283 = vmul.f32 %v1219, %v1219
        %v1284 = vmul.f32 %v1220, %v1220
        %v1285 = vmul.f32 %v1221, %v1221
        %v1286 = vmul.f32 %v1222, %v1222
        %v1287 = vmul.f32 %v1223, %v1223
        %v1288 = vmul.f32 %v1224, %v1224
        %v1289 = vmul.f32 %v1225, %v1225
        %v1290 = vmul.f32 %v1226, %v1226
        %v1291 = vadd.f32 %v1227, %v1228
        %v1292 = vadd.f32 %v1291, %v1229
        %v1293 = vadd.f32 %v1292, %v1230
        %v1294 = vadd.f32 %v1293, %v1231
        %v1295 = vadd.f32 %v1294, %v1232
        %v1296 = vadd.f32 %v1295, %v1233
        %v1297 = vadd.f32 %v1296, %v1234
        %v1298 = vadd.f32 %v1297, %v1235
        %v1299 = vadd.f32 %v1298, %v1236
        %v1300 = vadd.f32 %v1299, %v1237
        %v1301 = vadd.f32 %v1300, %v1238
        %v1302 = vadd.f32 %v1301, %v1239
        %v1303 = vadd.f32 %v1302, %v1240
        %v1304 = vadd.f32 %v1303, %v1241
        %v1305 = vadd.f32 %v1304, %v1242
        %v1306 = vadd.f32 %v1305, %v1243
        %v1307 = vadd.f32 %v1306, %v1244
        %v1308 = vadd.f32 %v1307, %v1245
        %v1309 = vadd.f32 %v1308, %v1246
        %v1310 = vadd.f32 %v1309, %v1247
        %v1311 = vadd.f32 %v1310, %v1248
        %v1312 = vadd.f32 %v1311, %v1249
        %v1313 = vadd.f32 %v1312, %v1250
        %v1314 = vadd.f32 %v1313, %v1251
        %v1315 = vadd.f32 %v1314, %v1252
        %v1316 = vadd.f32 %v1315, %v1253
        %v1317 = vadd.f32 %v1316, %v1254
        %v1318 = vadd.f32 %v1317, %v1255
        %v1319 = vadd.f32 %v1318, %v1256
        %v1320 = vadd.f32 %v1319, %v1257
        %v1321 = vadd.f32 %v1320, %v1258
        %v1322 = vadd.f32 %v1321, %v1259
        %v1323 = vadd.f32 %v1322, %v1260
        %v1324 = vadd.f32 %v1323, %v1261
        %v1325 = vadd.f32 %v1324, %v1262
        %v1326 = vadd.f32 %v1325, %v1263
        %v1327 = vadd.f32 %v1326, %v1264
        %v1328 = vadd.f32 %v1327, %v1265
        %v1329 = vadd.f32 %v1328, %v1266
        %v1330 = vadd.f32 %v1329, %v1267
        %v1331 = vadd.f32 %v1330, %v1268
        %v1332 = vadd.f32 %v1331, %v1269
        %v1333 = vadd.f32 %v1332, %v1270
        %v1334 = vadd.f32 %v1333, %v1271
        %v1335 = vadd.f32 %v1334, %v1272
        %v1336 = vadd.f32 %v1335, %v1273
        %v1337 = vadd.f32 %v1336, %v1274
        %v1338 = vadd.f32 %v1337, %v1275
        %v1339 = vadd.f32 %v1338, %v1276
        %v1340 = vadd.f32 %v1339, %v1277
        %v1341 = vadd.f32 %v1340, %v1278
        %v1342 = vadd.f32 %v1341, %v1279
        %v1343 = vadd.f32 %v1342, %v1280
        %v1344 = vadd.f32 %v1343, %v1281
        %v1345 = vadd.f32 %v1344, %v1282
        %v1346 = vadd.f32 %v1345, %v1283
        %v1347 = vadd.f32 %v1346, %v1284
        %v1348 = vadd.f32 %v1347, %v1285
        %v1349 = vadd.f32 %v1348, %v1286
        %v1350 = vadd.f32 %v1349, %v1287
        %v1351 = vadd.f32 %v1350, %v1288
        %v1352 = vadd.f32 %v1351, %v1289
        %v1353 = vadd.f32 %v1352, %v1290
        %v1354 = vrot.slane %v1353, 4
        %v1355 = vadd.f32 %v1353, %v1354
        %v1356 = vrot.slane %v1355, 2
        %v1357 = vadd.f32 %v1355, %v1356
        %v1358 = vrot.slane %v1357, 1
        %v1359 = vadd.f32 %v1357, %v1358
        %v1360 = vmul.f32 %v1359, %v1161
        %v1361 = vadd.f32 %v1360, 1e-05
        %v1362 = vrsqrt.pop %v1361
        %v1363 = vmul.f32 %v1163, %v1362
        %v1364 = vmul.f32 %v1164, %v1362
        %v1365 = vmul.f32 %v1165, %v1362
        %v1366 = vmul.f32 %v1166, %v1362
        %v1367 = vmul.f32 %v1167, %v1362
        %v1368 = vmul.f32 %v1168, %v1362
        %v1369 = vmul.f32 %v1169, %v1362
        %v1370 = vmul.f32 %v1170, %v1362
        %v1371 = vmul.f32 %v1171, %v1362
        %v1372 = vmul.f32 %v1172, %v1362
        %v1373 = vmul.f32 %v1173, %v1362
        %v1374 = vmul.f32 %v1174, %v1362
        %v1375 = vmul.f32 %v1175, %v1362
        %v1376 = vmul.f32 %v1176, %v1362
        %v1377 = vmul.f32 %v1177, %v1362
        %v1378 = vmul.f32 %v1178, %v1362
        %v1379 = vmul.f32 %v1179, %v1362
        %v1380 = vmul.f32 %v1180, %v1362
        %v1381 = vmul.f32 %v1181, %v1362
        %v1382 = vmul.f32 %v1182, %v1362
        %v1383 = vmul.f32 %v1183, %v1362
        %v1384 = vmul.f32 %v1184, %v1362
        %v1385 = vmul.f32 %v1185, %v1362
        %v1386 = vmul.f32 %v1186, %v1362
        %v1387 = vmul.f32 %v1187, %v1362
        %v1388 = vmul.f32 %v1188, %v1362
        %v1389 = vmul.f32 %v1189, %v1362
        %v1390 = vmul.f32 %v1190, %v1362
        %v1391 = vmul.f32 %v1191, %v1362
        %v1392 = vmul.f32 %v1192, %v1362
        %v1393 = vmul.f32 %v1193, %v1362
        %v1394 = vmul.f32 %v1194, %v1362
        %v1395 = vmul.f32 %v1195, %v1362
        %v1396 = vmul.f32 %v1196, %v1362
        %v1397 = vmul.f32 %v1197, %v1362
        %v1398 = vmul.f32 %v1198, %v1362
        %v1399 = vmul.f32 %v1199, %v1362
        %v1400 = vmul.f32 %v1200, %v1362
        %v1401 = vmul.f32 %v1201, %v1362
        %v1402 = vmul.f32 %v1202, %v1362
        %v1403 = vmul.f32 %v1203, %v1362
        %v1404 = vmul.f32 %v1204, %v1362
        %v1405 = vmul.f32 %v1205, %v1362
        %v1406 = vmul.f32 %v1206, %v1362
        %v1407 = vmul.f32 %v1207, %v1362
        %v1408 = vmul.f32 %v1208, %v1362
        %v1409 = vmul.f32 %v1209, %v1362
        %v1410 = vmul.f32 %v1210, %v1362
        %v1411 = vmul.f32 %v1211, %v1362
        %v1412 = vmul.f32 %v1212, %v1362
        %v1413 = vmul.f32 %v1213, %v1362
        %v1414 = vmul.f32 %v1214, %v1362
        %v1415 = vmul.f32 %v1215, %v1362
        %v1416 = vmul.f32 %v1216, %v1362
        %v1417 = vmul.f32 %v1217, %v1362
        %v1418 = vmul.f32 %v1218, %v1362
        %v1419 = vmul.f32 %v1219, %v1362
        %v1420 = vmul.f32 %v1220, %v1362
        %v1421 = vmul.f32 %v1221, %v1362
        %v1422 = vmul.f32 %v1222, %v1362
        %v1423 = vmul.f32 %v1223, %v1362
        %v1424 = vmul.f32 %v1224, %v1362
        %v1425 = vmul.f32 %v1225, %v1362
        %v1426 = vmul.f32 %v1226, %v1362
        %v1427 = vld [vmem:[%s3] sm:$0x1]
        %v1429 = vlaneseq
        %v1430 = vshrl.u32 %v1429, 7
        %v1431 = vsub.s32 0, %v1430
        %v1432 = vrot.slane %v1427, %v1431
        %v1434 = vmul.f32 %v1363, %v1432
        %v1435 = vmul.f32 %v1364, %v1432
        %v1436 = vmul.f32 %v1365, %v1432
        %v1437 = vmul.f32 %v1366, %v1432
        %v1438 = vmul.f32 %v1367, %v1432
        %v1439 = vmul.f32 %v1368, %v1432
        %v1440 = vmul.f32 %v1369, %v1432
        %v1441 = vmul.f32 %v1370, %v1432
        %v1442 = vmul.f32 %v1371, %v1432
        %v1443 = vmul.f32 %v1372, %v1432
        %v1444 = vmul.f32 %v1373, %v1432
        %v1445 = vmul.f32 %v1374, %v1432
        %v1446 = vmul.f32 %v1375, %v1432
        %v1447 = vmul.f32 %v1376, %v1432
        %v1448 = vmul.f32 %v1377, %v1432
        %v1449 = vmul.f32 %v1378, %v1432
        %v1450 = vmul.f32 %v1379, %v1432
        %v1451 = vmul.f32 %v1380, %v1432
        %v1452 = vmul.f32 %v1381, %v1432
        %v1453 = vmul.f32 %v1382, %v1432
        %v1454 = vmul.f32 %v1383, %v1432
        %v1455 = vmul.f32 %v1384, %v1432
        %v1456 = vmul.f32 %v1385, %v1432
        %v1457 = vmul.f32 %v1386, %v1432
        %v1458 = vmul.f32 %v1387, %v1432
        %v1459 = vmul.f32 %v1388, %v1432
        %v1460 = vmul.f32 %v1389, %v1432
        %v1461 = vmul.f32 %v1390, %v1432
        %v1462 = vmul.f32 %v1391, %v1432
        %v1463 = vmul.f32 %v1392, %v1432
        %v1464 = vmul.f32 %v1393, %v1432
        %v1465 = vmul.f32 %v1394, %v1432
        %v1466 = vmul.f32 %v1395, %v1432
        %v1467 = vmul.f32 %v1396, %v1432
        %v1468 = vmul.f32 %v1397, %v1432
        %v1469 = vmul.f32 %v1398, %v1432
        %v1470 = vmul.f32 %v1399, %v1432
        %v1471 = vmul.f32 %v1400, %v1432
        %v1472 = vmul.f32 %v1401, %v1432
        %v1473 = vmul.f32 %v1402, %v1432
        %v1474 = vmul.f32 %v1403, %v1432
        %v1475 = vmul.f32 %v1404, %v1432
        %v1476 = vmul.f32 %v1405, %v1432
        %v1477 = vmul.f32 %v1406, %v1432
        %v1478 = vmul.f32 %v1407, %v1432
        %v1479 = vmul.f32 %v1408, %v1432
        %v1480 = vmul.f32 %v1409, %v1432
        %v1481 = vmul.f32 %v1410, %v1432
        %v1482 = vmul.f32 %v1411, %v1432
        %v1483 = vmul.f32 %v1412, %v1432
        %v1484 = vmul.f32 %v1413, %v1432
        %v1485 = vmul.f32 %v1414, %v1432
        %v1486 = vmul.f32 %v1415, %v1432
        %v1487 = vmul.f32 %v1416, %v1432
        %v1488 = vmul.f32 %v1417, %v1432
        %v1489 = vmul.f32 %v1418, %v1432
        %v1490 = vmul.f32 %v1419, %v1432
        %v1491 = vmul.f32 %v1420, %v1432
        %v1492 = vmul.f32 %v1421, %v1432
        %v1493 = vmul.f32 %v1422, %v1432
        %v1494 = vmul.f32 %v1423, %v1432
        %v1495 = vmul.f32 %v1424, %v1432
        %v1496 = vmul.f32 %v1425, %v1432
        %v1497 = vmul.f32 %v1426, %v1432
        %v1498 = vld [vmem:[%s344] sm:$0xff]
        %v1499 = vld [vmem:[%s344 + $0x8] sm:$0xff]
        %v1500 = vld [vmem:[%s344 + $0x10] sm:$0xff]
        %v1501 = vld [vmem:[%s344 + $0x18] sm:$0xff]
        %v1502 = vld [vmem:[%s344 + $0x20] sm:$0xff]
        %v1503 = vld [vmem:[%s344 + $0x28] sm:$0xff]
        %v1504 = vld [vmem:[%s344 + $0x30] sm:$0xff]
        %v1505 = vld [vmem:[%s344 + $0x38] sm:$0xff]
        %v1506 = vld [vmem:[%s344 + $0x40] sm:$0xff]
        %v1507 = vld [vmem:[%s344 + $0x48] sm:$0xff]
        %v1508 = vld [vmem:[%s344 + $0x50] sm:$0xff]
        %v1509 = vld [vmem:[%s344 + $0x58] sm:$0xff]
        %v1510 = vld [vmem:[%s344 + $0x60] sm:$0xff]
        %v1511 = vld [vmem:[%s344 + $0x68] sm:$0xff]
        %v1512 = vld [vmem:[%s344 + $0x70] sm:$0xff]
        %v1513 = vld [vmem:[%s344 + $0x78] sm:$0xff]
        %v1514 = vld [vmem:[%s344 + $0x80] sm:$0xff]
        %v1515 = vld [vmem:[%s344 + $0x88] sm:$0xff]
        %v1516 = vld [vmem:[%s344 + $0x90] sm:$0xff]
        %v1517 = vld [vmem:[%s344 + $0x98] sm:$0xff]
        %v1518 = vld [vmem:[%s344 + $0xa0] sm:$0xff]
        %v1519 = vld [vmem:[%s344 + $0xa8] sm:$0xff]
        %v1520 = vld [vmem:[%s344 + $0xb0] sm:$0xff]
        %v1521 = vld [vmem:[%s344 + $0xb8] sm:$0xff]
        %v1522 = vld [vmem:[%s344 + $0xc0] sm:$0xff]
        %v1523 = vld [vmem:[%s344 + $0xc8] sm:$0xff]
        %v1524 = vld [vmem:[%s344 + $0xd0] sm:$0xff]
        %v1525 = vld [vmem:[%s344 + $0xd8] sm:$0xff]
        %v1526 = vld [vmem:[%s344 + $0xe0] sm:$0xff]
        %v1527 = vld [vmem:[%s344 + $0xe8] sm:$0xff]
        %v1528 = vld [vmem:[%s344 + $0xf0] sm:$0xff]
        %v1529 = vld [vmem:[%s344 + $0xf8] sm:$0xff]
        %v1530 = vld [vmem:[%s344 + $0x100] sm:$0xff]
        %v1531 = vld [vmem:[%s344 + $0x108] sm:$0xff]
        %v1532 = vld [vmem:[%s344 + $0x110] sm:$0xff]
        %v1533 = vld [vmem:[%s344 + $0x118] sm:$0xff]
        %v1534 = vld [vmem:[%s344 + $0x120] sm:$0xff]
        %v1535 = vld [vmem:[%s344 + $0x128] sm:$0xff]
        %v1536 = vld [vmem:[%s344 + $0x130] sm:$0xff]
        %v1537 = vld [vmem:[%s344 + $0x138] sm:$0xff]
        %v1538 = vld [vmem:[%s344 + $0x140] sm:$0xff]
        %v1539 = vld [vmem:[%s344 + $0x148] sm:$0xff]
        %v1540 = vld [vmem:[%s344 + $0x150] sm:$0xff]
        %v1541 = vld [vmem:[%s344 + $0x158] sm:$0xff]
        %v1542 = vld [vmem:[%s344 + $0x160] sm:$0xff]
        %v1543 = vld [vmem:[%s344 + $0x168] sm:$0xff]
        %v1544 = vld [vmem:[%s344 + $0x170] sm:$0xff]
        %v1545 = vld [vmem:[%s344 + $0x178] sm:$0xff]
        %v1546 = vld [vmem:[%s344 + $0x180] sm:$0xff]
        %v1547 = vld [vmem:[%s344 + $0x188] sm:$0xff]
        %v1548 = vld [vmem:[%s344 + $0x190] sm:$0xff]
        %v1549 = vld [vmem:[%s344 + $0x198] sm:$0xff]
        %v1550 = vld [vmem:[%s344 + $0x1a0] sm:$0xff]
        %v1551 = vld [vmem:[%s344 + $0x1a8] sm:$0xff]
        %v1552 = vld [vmem:[%s344 + $0x1b0] sm:$0xff]
        %v1553 = vld [vmem:[%s344 + $0x1b8] sm:$0xff]
        %v1554 = vld [vmem:[%s344 + $0x1c0] sm:$0xff]
        %v1555 = vld [vmem:[%s344 + $0x1c8] sm:$0xff]
        %v1556 = vld [vmem:[%s344 + $0x1d0] sm:$0xff]
        %v1557 = vld [vmem:[%s344 + $0x1d8] sm:$0xff]
        %v1558 = vld [vmem:[%s344 + $0x1e0] sm:$0xff]
        %v1559 = vld [vmem:[%s344 + $0x1e8] sm:$0xff]
        %v1560 = vld [vmem:[%s344 + $0x1f0] sm:$0xff]
        %v1561 = vld [vmem:[%s344 + $0x1f8] sm:$0xff]
        %v1562 = vadd.f32 %v1498, %v1499
        %v1563 = vadd.f32 %v1562, %v1500
        %v1564 = vadd.f32 %v1563, %v1501
        %v1565 = vadd.f32 %v1564, %v1502
        %v1566 = vadd.f32 %v1565, %v1503
        %v1567 = vadd.f32 %v1566, %v1504
        %v1568 = vadd.f32 %v1567, %v1505
        %v1569 = vadd.f32 %v1568, %v1506
        %v1570 = vadd.f32 %v1569, %v1507
        %v1571 = vadd.f32 %v1570, %v1508
        %v1572 = vadd.f32 %v1571, %v1509
        %v1573 = vadd.f32 %v1572, %v1510
        %v1574 = vadd.f32 %v1573, %v1511
        %v1575 = vadd.f32 %v1574, %v1512
        %v1576 = vadd.f32 %v1575, %v1513
        %v1577 = vadd.f32 %v1576, %v1514
        %v1578 = vadd.f32 %v1577, %v1515
        %v1579 = vadd.f32 %v1578, %v1516
        %v1580 = vadd.f32 %v1579, %v1517
        %v1581 = vadd.f32 %v1580, %v1518
        %v1582 = vadd.f32 %v1581, %v1519
        %v1583 = vadd.f32 %v1582, %v1520
        %v1584 = vadd.f32 %v1583, %v1521
        %v1585 = vadd.f32 %v1584, %v1522
        %v1586 = vadd.f32 %v1585, %v1523
        %v1587 = vadd.f32 %v1586, %v1524
        %v1588 = vadd.f32 %v1587, %v1525
        %v1589 = vadd.f32 %v1588, %v1526
        %v1590 = vadd.f32 %v1589, %v1527
        %v1591 = vadd.f32 %v1590, %v1528
        %v1592 = vadd.f32 %v1591, %v1529
        %v1593 = vadd.f32 %v1592, %v1530
        %v1594 = vadd.f32 %v1593, %v1531
        %v1595 = vadd.f32 %v1594, %v1532
        %v1596 = vadd.f32 %v1595, %v1533
        %v1597 = vadd.f32 %v1596, %v1534
        %v1598 = vadd.f32 %v1597, %v1535
        %v1599 = vadd.f32 %v1598, %v1536
        %v1600 = vadd.f32 %v1599, %v1537
        %v1601 = vadd.f32 %v1600, %v1538
        %v1602 = vadd.f32 %v1601, %v1539
        %v1603 = vadd.f32 %v1602, %v1540
        %v1604 = vadd.f32 %v1603, %v1541
        %v1605 = vadd.f32 %v1604, %v1542
        %v1606 = vadd.f32 %v1605, %v1543
        %v1607 = vadd.f32 %v1606, %v1544
        %v1608 = vadd.f32 %v1607, %v1545
        %v1609 = vadd.f32 %v1608, %v1546
        %v1610 = vadd.f32 %v1609, %v1547
        %v1611 = vadd.f32 %v1610, %v1548
        %v1612 = vadd.f32 %v1611, %v1549
        %v1613 = vadd.f32 %v1612, %v1550
        %v1614 = vadd.f32 %v1613, %v1551
        %v1615 = vadd.f32 %v1614, %v1552
        %v1616 = vadd.f32 %v1615, %v1553
        %v1617 = vadd.f32 %v1616, %v1554
        %v1618 = vadd.f32 %v1617, %v1555
        %v1619 = vadd.f32 %v1618, %v1556
        %v1620 = vadd.f32 %v1619, %v1557
        %v1621 = vadd.f32 %v1620, %v1558
        %v1622 = vadd.f32 %v1621, %v1559
        %v1623 = vadd.f32 %v1622, %v1560
        %v1624 = vadd.f32 %v1623, %v1561
        %v1625 = vrot.slane %v1624, 4
        %v1626 = vadd.f32 %v1624, %v1625
        %v1627 = vrot.slane %v1626, 2
        %v1628 = vadd.f32 %v1626, %v1627
        %v1629 = vrot.slane %v1628, 1
        %v1630 = vadd.f32 %v1628, %v1629
        %v1631 = vmul.f32 %v1630, %v1161
        %v1632 = vsub.f32 %v1498, %v1631
        %v1633 = vsub.f32 %v1499, %v1631
        %v1634 = vsub.f32 %v1500, %v1631
        %v1635 = vsub.f32 %v1501, %v1631
        %v1636 = vsub.f32 %v1502, %v1631
        %v1637 = vsub.f32 %v1503, %v1631
        %v1638 = vsub.f32 %v1504, %v1631
        %v1639 = vsub.f32 %v1505, %v1631
        %v1640 = vsub.f32 %v1506, %v1631
        %v1641 = vsub.f32 %v1507, %v1631
        %v1642 = vsub.f32 %v1508, %v1631
        %v1643 = vsub.f32 %v1509, %v1631
        %v1644 = vsub.f32 %v1510, %v1631
        %v1645 = vsub.f32 %v1511, %v1631
        %v1646 = vsub.f32 %v1512, %v1631
        %v1647 = vsub.f32 %v1513, %v1631
        %v1648 = vsub.f32 %v1514, %v1631
        %v1649 = vsub.f32 %v1515, %v1631
        %v1650 = vsub.f32 %v1516, %v1631
        %v1651 = vsub.f32 %v1517, %v1631
        %v1652 = vsub.f32 %v1518, %v1631
        %v1653 = vsub.f32 %v1519, %v1631
        %v1654 = vsub.f32 %v1520, %v1631
        %v1655 = vsub.f32 %v1521, %v1631
        %v1656 = vsub.f32 %v1522, %v1631
        %v1657 = vsub.f32 %v1523, %v1631
        %v1658 = vsub.f32 %v1524, %v1631
        %v1659 = vsub.f32 %v1525, %v1631
        %v1660 = vsub.f32 %v1526, %v1631
        %v1661 = vsub.f32 %v1527, %v1631
        %v1662 = vsub.f32 %v1528, %v1631
        %v1663 = vsub.f32 %v1529, %v1631
        %v1664 = vsub.f32 %v1530, %v1631
        %v1665 = vsub.f32 %v1531, %v1631
        %v1666 = vsub.f32 %v1532, %v1631
        %v1667 = vsub.f32 %v1533, %v1631
        %v1668 = vsub.f32 %v1534, %v1631
        %v1669 = vsub.f32 %v1535, %v1631
        %v1670 = vsub.f32 %v1536, %v1631
        %v1671 = vsub.f32 %v1537, %v1631
        %v1672 = vsub.f32 %v1538, %v1631
        %v1673 = vsub.f32 %v1539, %v1631
        %v1674 = vsub.f32 %v1540, %v1631
        %v1675 = vsub.f32 %v1541, %v1631
        %v1676 = vsub.f32 %v1542, %v1631
        %v1677 = vsub.f32 %v1543, %v1631
        %v1678 = vsub.f32 %v1544, %v1631
        %v1679 = vsub.f32 %v1545, %v1631
        %v1680 = vsub.f32 %v1546, %v1631
        %v1681 = vsub.f32 %v1547, %v1631
        %v1682 = vsub.f32 %v1548, %v1631
        %v1683 = vsub.f32 %v1549, %v1631
        %v1684 = vsub.f32 %v1550, %v1631
        %v1685 = vsub.f32 %v1551, %v1631
        %v1686 = vsub.f32 %v1552, %v1631
        %v1687 = vsub.f32 %v1553, %v1631
        %v1688 = vsub.f32 %v1554, %v1631
        %v1689 = vsub.f32 %v1555, %v1631
        %v1690 = vsub.f32 %v1556, %v1631
        %v1691 = vsub.f32 %v1557, %v1631
        %v1692 = vsub.f32 %v1558, %v1631
        %v1693 = vsub.f32 %v1559, %v1631
        %v1694 = vsub.f32 %v1560, %v1631
        %v1695 = vsub.f32 %v1561, %v1631
        %v1696 = vmul.f32 %v1632, %v1632
        %v1697 = vmul.f32 %v1633, %v1633
        %v1698 = vmul.f32 %v1634, %v1634
        %v1699 = vmul.f32 %v1635, %v1635
        %v1700 = vmul.f32 %v1636, %v1636
        %v1701 = vmul.f32 %v1637, %v1637
        %v1702 = vmul.f32 %v1638, %v1638
        %v1703 = vmul.f32 %v1639, %v1639
        %v1704 = vmul.f32 %v1640, %v1640
        %v1705 = vmul.f32 %v1641, %v1641
        %v1706 = vmul.f32 %v1642, %v1642
        %v1707 = vmul.f32 %v1643, %v1643
        %v1708 = vmul.f32 %v1644, %v1644
        %v1709 = vmul.f32 %v1645, %v1645
        %v1710 = vmul.f32 %v1646, %v1646
        %v1711 = vmul.f32 %v1647, %v1647
        %v1712 = vmul.f32 %v1648, %v1648
        %v1713 = vmul.f32 %v1649, %v1649
        %v1714 = vmul.f32 %v1650, %v1650
        %v1715 = vmul.f32 %v1651, %v1651
        %v1716 = vmul.f32 %v1652, %v1652
        %v1717 = vmul.f32 %v1653, %v1653
        %v1718 = vmul.f32 %v1654, %v1654
        %v1719 = vmul.f32 %v1655, %v1655
        %v1720 = vmul.f32 %v1656, %v1656
        %v1721 = vmul.f32 %v1657, %v1657
        %v1722 = vmul.f32 %v1658, %v1658
        %v1723 = vmul.f32 %v1659, %v1659
        %v1724 = vmul.f32 %v1660, %v1660
        %v1725 = vmul.f32 %v1661, %v1661
        %v1726 = vmul.f32 %v1662, %v1662
        %v1727 = vmul.f32 %v1663, %v1663
        %v1728 = vmul.f32 %v1664, %v1664
        %v1729 = vmul.f32 %v1665, %v1665
        %v1730 = vmul.f32 %v1666, %v1666
        %v1731 = vmul.f32 %v1667, %v1667
        %v1732 = vmul.f32 %v1668, %v1668
        %v1733 = vmul.f32 %v1669, %v1669
        %v1734 = vmul.f32 %v1670, %v1670
        %v1735 = vmul.f32 %v1671, %v1671
        %v1736 = vmul.f32 %v1672, %v1672
        %v1737 = vmul.f32 %v1673, %v1673
        %v1738 = vmul.f32 %v1674, %v1674
        %v1739 = vmul.f32 %v1675, %v1675
        %v1740 = vmul.f32 %v1676, %v1676
        %v1741 = vmul.f32 %v1677, %v1677
        %v1742 = vmul.f32 %v1678, %v1678
        %v1743 = vmul.f32 %v1679, %v1679
        %v1744 = vmul.f32 %v1680, %v1680
        %v1745 = vmul.f32 %v1681, %v1681
        %v1746 = vmul.f32 %v1682, %v1682
        %v1747 = vmul.f32 %v1683, %v1683
        %v1748 = vmul.f32 %v1684, %v1684
        %v1749 = vmul.f32 %v1685, %v1685
        %v1750 = vmul.f32 %v1686, %v1686
        %v1751 = vmul.f32 %v1687, %v1687
        %v1752 = vmul.f32 %v1688, %v1688
        %v1753 = vmul.f32 %v1689, %v1689
        %v1754 = vmul.f32 %v1690, %v1690
        %v1755 = vmul.f32 %v1691, %v1691
        %v1756 = vmul.f32 %v1692, %v1692
        %v1757 = vmul.f32 %v1693, %v1693
        %v1758 = vmul.f32 %v1694, %v1694
        %v1759 = vmul.f32 %v1695, %v1695
        %v1760 = vadd.f32 %v1696, %v1697
        %v1761 = vadd.f32 %v1760, %v1698
        %v1762 = vadd.f32 %v1761, %v1699
        %v1763 = vadd.f32 %v1762, %v1700
        %v1764 = vadd.f32 %v1763, %v1701
        %v1765 = vadd.f32 %v1764, %v1702
        %v1766 = vadd.f32 %v1765, %v1703
        %v1767 = vadd.f32 %v1766, %v1704
        %v1768 = vadd.f32 %v1767, %v1705
        %v1769 = vadd.f32 %v1768, %v1706
        %v1770 = vadd.f32 %v1769, %v1707
        %v1771 = vadd.f32 %v1770, %v1708
        %v1772 = vadd.f32 %v1771, %v1709
        %v1773 = vadd.f32 %v1772, %v1710
        %v1774 = vadd.f32 %v1773, %v1711
        %v1775 = vadd.f32 %v1774, %v1712
        %v1776 = vadd.f32 %v1775, %v1713
        %v1777 = vadd.f32 %v1776, %v1714
        %v1778 = vadd.f32 %v1777, %v1715
        %v1779 = vadd.f32 %v1778, %v1716
        %v1780 = vadd.f32 %v1779, %v1717
        %v1781 = vadd.f32 %v1780, %v1718
        %v1782 = vadd.f32 %v1781, %v1719
        %v1783 = vadd.f32 %v1782, %v1720
        %v1784 = vadd.f32 %v1783, %v1721
        %v1785 = vadd.f32 %v1784, %v1722
        %v1786 = vadd.f32 %v1785, %v1723
        %v1787 = vadd.f32 %v1786, %v1724
        %v1788 = vadd.f32 %v1787, %v1725
        %v1789 = vadd.f32 %v1788, %v1726
        %v1790 = vadd.f32 %v1789, %v1727
        %v1791 = vadd.f32 %v1790, %v1728
        %v1792 = vadd.f32 %v1791, %v1729
        %v1793 = vadd.f32 %v1792, %v1730
        %v1794 = vadd.f32 %v1793, %v1731
        %v1795 = vadd.f32 %v1794, %v1732
        %v1796 = vadd.f32 %v1795, %v1733
        %v1797 = vadd.f32 %v1796, %v1734
        %v1798 = vadd.f32 %v1797, %v1735
        %v1799 = vadd.f32 %v1798, %v1736
        %v1800 = vadd.f32 %v1799, %v1737
        %v1801 = vadd.f32 %v1800, %v1738
        %v1802 = vadd.f32 %v1801, %v1739
        %v1803 = vadd.f32 %v1802, %v1740
        %v1804 = vadd.f32 %v1803, %v1741
        %v1805 = vadd.f32 %v1804, %v1742
        %v1806 = vadd.f32 %v1805, %v1743
        %v1807 = vadd.f32 %v1806, %v1744
        %v1808 = vadd.f32 %v1807, %v1745
        %v1809 = vadd.f32 %v1808, %v1746
        %v1810 = vadd.f32 %v1809, %v1747
        %v1811 = vadd.f32 %v1810, %v1748
        %v1812 = vadd.f32 %v1811, %v1749
        %v1813 = vadd.f32 %v1812, %v1750
        %v1814 = vadd.f32 %v1813, %v1751
        %v1815 = vadd.f32 %v1814, %v1752
        %v1816 = vadd.f32 %v1815, %v1753
        %v1817 = vadd.f32 %v1816, %v1754
        %v1818 = vadd.f32 %v1817, %v1755
        %v1819 = vadd.f32 %v1818, %v1756
        %v1820 = vadd.f32 %v1819, %v1757
        %v1821 = vadd.f32 %v1820, %v1758
        %v1822 = vadd.f32 %v1821, %v1759
        %v1823 = vrot.slane %v1822, 4
        %v1824 = vadd.f32 %v1822, %v1823
        %v1825 = vrot.slane %v1824, 2
        %v1826 = vadd.f32 %v1824, %v1825
        %v1827 = vrot.slane %v1826, 1
        %v1828 = vadd.f32 %v1826, %v1827
        %v1829 = vmul.f32 %v1828, %v1161
        %v1830 = vadd.f32 %v1829, 1e-05
        %v1831 = vrsqrt.pop %v1830
        %v1832 = vmul.f32 %v1632, %v1831
        %v1833 = vmul.f32 %v1633, %v1831
        %v1834 = vmul.f32 %v1634, %v1831
        %v1835 = vmul.f32 %v1635, %v1831
        %v1836 = vmul.f32 %v1636, %v1831
        %v1837 = vmul.f32 %v1637, %v1831
        %v1838 = vmul.f32 %v1638, %v1831
        %v1839 = vmul.f32 %v1639, %v1831
        %v1840 = vmul.f32 %v1640, %v1831
        %v1841 = vmul.f32 %v1641, %v1831
        %v1842 = vmul.f32 %v1642, %v1831
        %v1843 = vmul.f32 %v1643, %v1831
        %v1844 = vmul.f32 %v1644, %v1831
        %v1845 = vmul.f32 %v1645, %v1831
        %v1846 = vmul.f32 %v1646, %v1831
        %v1847 = vmul.f32 %v1647, %v1831
        %v1848 = vmul.f32 %v1648, %v1831
        %v1849 = vmul.f32 %v1649, %v1831
        %v1850 = vmul.f32 %v1650, %v1831
        %v1851 = vmul.f32 %v1651, %v1831
        %v1852 = vmul.f32 %v1652, %v1831
        %v1853 = vmul.f32 %v1653, %v1831
        %v1854 = vmul.f32 %v1654, %v1831
        %v1855 = vmul.f32 %v1655, %v1831
        %v1856 = vmul.f32 %v1656, %v1831
        %v1857 = vmul.f32 %v1657, %v1831
        %v1858 = vmul.f32 %v1658, %v1831
        %v1859 = vmul.f32 %v1659, %v1831
        %v1860 = vmul.f32 %v1660, %v1831
        %v1861 = vmul.f32 %v1661, %v1831
        %v1862 = vmul.f32 %v1662, %v1831
        %v1863 = vmul.f32 %v1663, %v1831
        %v1864 = vmul.f32 %v1664, %v1831
        %v1865 = vmul.f32 %v1665, %v1831
        %v1866 = vmul.f32 %v1666, %v1831
        %v1867 = vmul.f32 %v1667, %v1831
        %v1868 = vmul.f32 %v1668, %v1831
        %v1869 = vmul.f32 %v1669, %v1831
        %v1870 = vmul.f32 %v1670, %v1831
        %v1871 = vmul.f32 %v1671, %v1831
        %v1872 = vmul.f32 %v1672, %v1831
        %v1873 = vmul.f32 %v1673, %v1831
        %v1874 = vmul.f32 %v1674, %v1831
        %v1875 = vmul.f32 %v1675, %v1831
        %v1876 = vmul.f32 %v1676, %v1831
        %v1877 = vmul.f32 %v1677, %v1831
        %v1878 = vmul.f32 %v1678, %v1831
        %v1879 = vmul.f32 %v1679, %v1831
        %v1880 = vmul.f32 %v1680, %v1831
        %v1881 = vmul.f32 %v1681, %v1831
        %v1882 = vmul.f32 %v1682, %v1831
        %v1883 = vmul.f32 %v1683, %v1831
        %v1884 = vmul.f32 %v1684, %v1831
        %v1885 = vmul.f32 %v1685, %v1831
        %v1886 = vmul.f32 %v1686, %v1831
        %v1887 = vmul.f32 %v1687, %v1831
        %v1888 = vmul.f32 %v1688, %v1831
        %v1889 = vmul.f32 %v1689, %v1831
        %v1890 = vmul.f32 %v1690, %v1831
        %v1891 = vmul.f32 %v1691, %v1831
        %v1892 = vmul.f32 %v1692, %v1831
        %v1893 = vmul.f32 %v1693, %v1831
        %v1894 = vmul.f32 %v1694, %v1831
        %v1895 = vmul.f32 %v1695, %v1831
        %v1896 = vld [vmem:[%s4] sm:$0x1]
        %v1898 = vlaneseq
        %v1899 = vshrl.u32 %v1898, 7
        %v1900 = vsub.s32 0, %v1899
        %v1901 = vrot.slane %v1896, %v1900
        %v1903 = vmul.f32 %v1832, %v1901
        %v1904 = vmul.f32 %v1833, %v1901
        %v1905 = vmul.f32 %v1834, %v1901
        %v1906 = vmul.f32 %v1835, %v1901
        %v1907 = vmul.f32 %v1836, %v1901
        %v1908 = vmul.f32 %v1837, %v1901
        %v1909 = vmul.f32 %v1838, %v1901
        %v1910 = vmul.f32 %v1839, %v1901
        %v1911 = vmul.f32 %v1840, %v1901
        %v1912 = vmul.f32 %v1841, %v1901
        %v1913 = vmul.f32 %v1842, %v1901
        %v1914 = vmul.f32 %v1843, %v1901
        %v1915 = vmul.f32 %v1844, %v1901
        %v1916 = vmul.f32 %v1845, %v1901
        %v1917 = vmul.f32 %v1846, %v1901
        %v1918 = vmul.f32 %v1847, %v1901
        %v1919 = vmul.f32 %v1848, %v1901
        %v1920 = vmul.f32 %v1849, %v1901
        %v1921 = vmul.f32 %v1850, %v1901
        %v1922 = vmul.f32 %v1851, %v1901
        %v1923 = vmul.f32 %v1852, %v1901
        %v1924 = vmul.f32 %v1853, %v1901
        %v1925 = vmul.f32 %v1854, %v1901
        %v1926 = vmul.f32 %v1855, %v1901
        %v1927 = vmul.f32 %v1856, %v1901
        %v1928 = vmul.f32 %v1857, %v1901
        %v1929 = vmul.f32 %v1858, %v1901
        %v1930 = vmul.f32 %v1859, %v1901
        %v1931 = vmul.f32 %v1860, %v1901
        %v1932 = vmul.f32 %v1861, %v1901
        %v1933 = vmul.f32 %v1862, %v1901
        %v1934 = vmul.f32 %v1863, %v1901
        %v1935 = vmul.f32 %v1864, %v1901
        %v1936 = vmul.f32 %v1865, %v1901
        %v1937 = vmul.f32 %v1866, %v1901
        %v1938 = vmul.f32 %v1867, %v1901
        %v1939 = vmul.f32 %v1868, %v1901
        %v1940 = vmul.f32 %v1869, %v1901
        %v1941 = vmul.f32 %v1870, %v1901
        %v1942 = vmul.f32 %v1871, %v1901
        %v1943 = vmul.f32 %v1872, %v1901
        %v1944 = vmul.f32 %v1873, %v1901
        %v1945 = vmul.f32 %v1874, %v1901
        %v1946 = vmul.f32 %v1875, %v1901
        %v1947 = vmul.f32 %v1876, %v1901
        %v1948 = vmul.f32 %v1877, %v1901
        %v1949 = vmul.f32 %v1878, %v1901
        %v1950 = vmul.f32 %v1879, %v1901
        %v1951 = vmul.f32 %v1880, %v1901
        %v1952 = vmul.f32 %v1881, %v1901
        %v1953 = vmul.f32 %v1882, %v1901
        %v1954 = vmul.f32 %v1883, %v1901
        %v1955 = vmul.f32 %v1884, %v1901
        %v1956 = vmul.f32 %v1885, %v1901
        %v1957 = vmul.f32 %v1886, %v1901
        %v1958 = vmul.f32 %v1887, %v1901
        %v1959 = vmul.f32 %v1888, %v1901
        %v1960 = vmul.f32 %v1889, %v1901
        %v1961 = vmul.f32 %v1890, %v1901
        %v1962 = vmul.f32 %v1891, %v1901
        %v1963 = vmul.f32 %v1892, %v1901
        %v1964 = vmul.f32 %v1893, %v1901
        %v1965 = vmul.f32 %v1894, %v1901
        %v1966 = vmul.f32 %v1895, %v1901
        %v1967 = vadd.f32 %v1434, %v1903
        %v1968 = vadd.f32 %v1435, %v1904
        %v1969 = vadd.f32 %v1436, %v1905
        %v1970 = vadd.f32 %v1437, %v1906
        %v1971 = vadd.f32 %v1438, %v1907
        %v1972 = vadd.f32 %v1439, %v1908
        %v1973 = vadd.f32 %v1440, %v1909
        %v1974 = vadd.f32 %v1441, %v1910
        %v1975 = vadd.f32 %v1442, %v1911
        %v1976 = vadd.f32 %v1443, %v1912
        %v1977 = vadd.f32 %v1444, %v1913
        %v1978 = vadd.f32 %v1445, %v1914
        %v1979 = vadd.f32 %v1446, %v1915
        %v1980 = vadd.f32 %v1447, %v1916
        %v1981 = vadd.f32 %v1448, %v1917
        %v1982 = vadd.f32 %v1449, %v1918
        %v1983 = vadd.f32 %v1450, %v1919
        %v1984 = vadd.f32 %v1451, %v1920
        %v1985 = vadd.f32 %v1452, %v1921
        %v1986 = vadd.f32 %v1453, %v1922
        %v1987 = vadd.f32 %v1454, %v1923
        %v1988 = vadd.f32 %v1455, %v1924
        %v1989 = vadd.f32 %v1456, %v1925
        %v1990 = vadd.f32 %v1457, %v1926
        %v1991 = vadd.f32 %v1458, %v1927
        %v1992 = vadd.f32 %v1459, %v1928
        %v1993 = vadd.f32 %v1460, %v1929
        %v1994 = vadd.f32 %v1461, %v1930
        %v1995 = vadd.f32 %v1462, %v1931
        %v1996 = vadd.f32 %v1463, %v1932
        %v1997 = vadd.f32 %v1464, %v1933
        %v1998 = vadd.f32 %v1465, %v1934
        %v1999 = vadd.f32 %v1466, %v1935
        %v2000 = vadd.f32 %v1467, %v1936
        %v2001 = vadd.f32 %v1468, %v1937
        %v2002 = vadd.f32 %v1469, %v1938
        %v2003 = vadd.f32 %v1470, %v1939
        %v2004 = vadd.f32 %v1471, %v1940
        %v2005 = vadd.f32 %v1472, %v1941
        %v2006 = vadd.f32 %v1473, %v1942
        %v2007 = vadd.f32 %v1474, %v1943
        %v2008 = vadd.f32 %v1475, %v1944
        %v2009 = vadd.f32 %v1476, %v1945
        %v2010 = vadd.f32 %v1477, %v1946
        %v2011 = vadd.f32 %v1478, %v1947
        %v2012 = vadd.f32 %v1479, %v1948
        %v2013 = vadd.f32 %v1480, %v1949
        %v2014 = vadd.f32 %v1481, %v1950
        %v2015 = vadd.f32 %v1482, %v1951
        %v2016 = vadd.f32 %v1483, %v1952
        %v2017 = vadd.f32 %v1484, %v1953
        %v2018 = vadd.f32 %v1485, %v1954
        %v2019 = vadd.f32 %v1486, %v1955
        %v2020 = vadd.f32 %v1487, %v1956
        %v2021 = vadd.f32 %v1488, %v1957
        %v2022 = vadd.f32 %v1489, %v1958
        %v2023 = vadd.f32 %v1490, %v1959
        %v2024 = vadd.f32 %v1491, %v1960
        %v2025 = vadd.f32 %v1492, %v1961
        %v2026 = vadd.f32 %v1493, %v1962
        %v2027 = vadd.f32 %v1494, %v1963
        %v2028 = vadd.f32 %v1495, %v1964
        %v2029 = vadd.f32 %v1496, %v1965
        %v2030 = vadd.f32 %v1497, %v1966
        %v2031 = vld [vmem:[#allocation2] sm:$0xff]
        %v2032 = vld [vmem:[#allocation2 + $0x8] sm:$0xff]
        %v2033 = vld [vmem:[#allocation2 + $0x10] sm:$0xff]
        %v2034 = vld [vmem:[#allocation2 + $0x18] sm:$0xff]
        %v2035 = vld [vmem:[#allocation2 + $0x20] sm:$0xff]
        %v2036 = vld [vmem:[#allocation2 + $0x28] sm:$0xff]
        %v2037 = vld [vmem:[#allocation2 + $0x30] sm:$0xff]
        %v2038 = vld [vmem:[#allocation2 + $0x38] sm:$0xff]
        %v2039 = vld [vmem:[#allocation2 + $0x40] sm:$0xff]
        %v2040 = vld [vmem:[#allocation2 + $0x48] sm:$0xff]
        %v2041 = vld [vmem:[#allocation2 + $0x50] sm:$0xff]
        %v2042 = vld [vmem:[#allocation2 + $0x58] sm:$0xff]
        %v2043 = vld [vmem:[#allocation2 + $0x60] sm:$0xff]
        %v2044 = vld [vmem:[#allocation2 + $0x68] sm:$0xff]
        %v2045 = vld [vmem:[#allocation2 + $0x70] sm:$0xff]
        %v2046 = vld [vmem:[#allocation2 + $0x78] sm:$0xff]
        %v2047 = vld [vmem:[#allocation2 + $0x80] sm:$0xff]
        %v2048 = vld [vmem:[#allocation2 + $0x88] sm:$0xff]
        %v2049 = vld [vmem:[#allocation2 + $0x90] sm:$0xff]
        %v2050 = vld [vmem:[#allocation2 + $0x98] sm:$0xff]
        %v2051 = vld [vmem:[#allocation2 + $0xa0] sm:$0xff]
        %v2052 = vld [vmem:[#allocation2 + $0xa8] sm:$0xff]
        %v2053 = vld [vmem:[#allocation2 + $0xb0] sm:$0xff]
        %v2054 = vld [vmem:[#allocation2 + $0xb8] sm:$0xff]
        %v2055 = vld [vmem:[#allocation2 + $0xc0] sm:$0xff]
        %v2056 = vld [vmem:[#allocation2 + $0xc8] sm:$0xff]
        %v2057 = vld [vmem:[#allocation2 + $0xd0] sm:$0xff]
        %v2058 = vld [vmem:[#allocation2 + $0xd8] sm:$0xff]
        %v2059 = vld [vmem:[#allocation2 + $0xe0] sm:$0xff]
        %v2060 = vld [vmem:[#allocation2 + $0xe8] sm:$0xff]
        %v2061 = vld [vmem:[#allocation2 + $0xf0] sm:$0xff]
        %v2062 = vld [vmem:[#allocation2 + $0xf8] sm:$0xff]
        %v2063 = vld [vmem:[#allocation2 + $0x100] sm:$0xff]
        %v2064 = vld [vmem:[#allocation2 + $0x108] sm:$0xff]
        %v2065 = vld [vmem:[#allocation2 + $0x110] sm:$0xff]
        %v2066 = vld [vmem:[#allocation2 + $0x118] sm:$0xff]
        %v2067 = vld [vmem:[#allocation2 + $0x120] sm:$0xff]
        %v2068 = vld [vmem:[#allocation2 + $0x128] sm:$0xff]
        %v2069 = vld [vmem:[#allocation2 + $0x130] sm:$0xff]
        %v2070 = vld [vmem:[#allocation2 + $0x138] sm:$0xff]
        %v2071 = vld [vmem:[#allocation2 + $0x140] sm:$0xff]
        %v2072 = vld [vmem:[#allocation2 + $0x148] sm:$0xff]
        %v2073 = vld [vmem:[#allocation2 + $0x150] sm:$0xff]
        %v2074 = vld [vmem:[#allocation2 + $0x158] sm:$0xff]
        %v2075 = vld [vmem:[#allocation2 + $0x160] sm:$0xff]
        %v2076 = vld [vmem:[#allocation2 + $0x168] sm:$0xff]
        %v2077 = vld [vmem:[#allocation2 + $0x170] sm:$0xff]
        %v2078 = vld [vmem:[#allocation2 + $0x178] sm:$0xff]
        %v2079 = vld [vmem:[#allocation2 + $0x180] sm:$0xff]
        %v2080 = vld [vmem:[#allocation2 + $0x188] sm:$0xff]
        %v2081 = vld [vmem:[#allocation2 + $0x190] sm:$0xff]
        %v2082 = vld [vmem:[#allocation2 + $0x198] sm:$0xff]
        %v2083 = vld [vmem:[#allocation2 + $0x1a0] sm:$0xff]
        %v2084 = vld [vmem:[#allocation2 + $0x1a8] sm:$0xff]
        %v2085 = vld [vmem:[#allocation2 + $0x1b0] sm:$0xff]
        %v2086 = vld [vmem:[#allocation2 + $0x1b8] sm:$0xff]
        %v2087 = vld [vmem:[#allocation2 + $0x1c0] sm:$0xff]
        %v2088 = vld [vmem:[#allocation2 + $0x1c8] sm:$0xff]
        %v2089 = vld [vmem:[#allocation2 + $0x1d0] sm:$0xff]
        %v2090 = vld [vmem:[#allocation2 + $0x1d8] sm:$0xff]
        %v2091 = vld [vmem:[#allocation2 + $0x1e0] sm:$0xff]
        %v2092 = vld [vmem:[#allocation2 + $0x1e8] sm:$0xff]
        %v2093 = vld [vmem:[#allocation2 + $0x1f0] sm:$0xff]
        %v2094 = vld [vmem:[#allocation2 + $0x1f8] sm:$0xff]
        %v2095 = vld [vmem:[#allocation4] sm:$0xff]
        %v2096 = vld [vmem:[#allocation4 + $0x8] sm:$0xff]
        %v2097 = vld [vmem:[#allocation4 + $0x10] sm:$0xff]
        %v2098 = vld [vmem:[#allocation4 + $0x18] sm:$0xff]
        %v2099 = vld [vmem:[#allocation4 + $0x20] sm:$0xff]
        %v2100 = vld [vmem:[#allocation4 + $0x28] sm:$0xff]
        %v2101 = vld [vmem:[#allocation4 + $0x30] sm:$0xff]
        %v2102 = vld [vmem:[#allocation4 + $0x38] sm:$0xff]
        %v2103 = vld [vmem:[#allocation4 + $0x40] sm:$0xff]
        %v2104 = vld [vmem:[#allocation4 + $0x48] sm:$0xff]
        %v2105 = vld [vmem:[#allocation4 + $0x50] sm:$0xff]
        %v2106 = vld [vmem:[#allocation4 + $0x58] sm:$0xff]
        %v2107 = vld [vmem:[#allocation4 + $0x60] sm:$0xff]
        %v2108 = vld [vmem:[#allocation4 + $0x68] sm:$0xff]
        %v2109 = vld [vmem:[#allocation4 + $0x70] sm:$0xff]
        %v2110 = vld [vmem:[#allocation4 + $0x78] sm:$0xff]
        %v2111 = vld [vmem:[#allocation4 + $0x80] sm:$0xff]
        %v2112 = vld [vmem:[#allocation4 + $0x88] sm:$0xff]
        %v2113 = vld [vmem:[#allocation4 + $0x90] sm:$0xff]
        %v2114 = vld [vmem:[#allocation4 + $0x98] sm:$0xff]
        %v2115 = vld [vmem:[#allocation4 + $0xa0] sm:$0xff]
        %v2116 = vld [vmem:[#allocation4 + $0xa8] sm:$0xff]
        %v2117 = vld [vmem:[#allocation4 + $0xb0] sm:$0xff]
        %v2118 = vld [vmem:[#allocation4 + $0xb8] sm:$0xff]
        %v2119 = vld [vmem:[#allocation4 + $0xc0] sm:$0xff]
        %v2120 = vld [vmem:[#allocation4 + $0xc8] sm:$0xff]
        %v2121 = vld [vmem:[#allocation4 + $0xd0] sm:$0xff]
        %v2122 = vld [vmem:[#allocation4 + $0xd8] sm:$0xff]
        %v2123 = vld [vmem:[#allocation4 + $0xe0] sm:$0xff]
        %v2124 = vld [vmem:[#allocation4 + $0xe8] sm:$0xff]
        %v2125 = vld [vmem:[#allocation4 + $0xf0] sm:$0xff]
        %v2126 = vld [vmem:[#allocation4 + $0xf8] sm:$0xff]
        %v2127 = vld [vmem:[#allocation4 + $0x100] sm:$0xff]
        %v2128 = vld [vmem:[#allocation4 + $0x108] sm:$0xff]
        %v2129 = vld [vmem:[#allocation4 + $0x110] sm:$0xff]
        %v2130 = vld [vmem:[#allocation4 + $0x118] sm:$0xff]
        %v2131 = vld [vmem:[#allocation4 + $0x120] sm:$0xff]
        %v2132 = vld [vmem:[#allocation4 + $0x128] sm:$0xff]
        %v2133 = vld [vmem:[#allocation4 + $0x130] sm:$0xff]
        %v2134 = vld [vmem:[#allocation4 + $0x138] sm:$0xff]
        %v2135 = vld [vmem:[#allocation4 + $0x140] sm:$0xff]
        %v2136 = vld [vmem:[#allocation4 + $0x148] sm:$0xff]
        %v2137 = vld [vmem:[#allocation4 + $0x150] sm:$0xff]
        %v2138 = vld [vmem:[#allocation4 + $0x158] sm:$0xff]
        %v2139 = vld [vmem:[#allocation4 + $0x160] sm:$0xff]
        %v2140 = vld [vmem:[#allocation4 + $0x168] sm:$0xff]
        %v2141 = vld [vmem:[#allocation4 + $0x170] sm:$0xff]
        %v2142 = vld [vmem:[#allocation4 + $0x178] sm:$0xff]
        %v2143 = vld [vmem:[#allocation4 + $0x180] sm:$0xff]
        %v2144 = vld [vmem:[#allocation4 + $0x188] sm:$0xff]
        %v2145 = vld [vmem:[#allocation4 + $0x190] sm:$0xff]
        %v2146 = vld [vmem:[#allocation4 + $0x198] sm:$0xff]
        %v2147 = vld [vmem:[#allocation4 + $0x1a0] sm:$0xff]
        %v2148 = vld [vmem:[#allocation4 + $0x1a8] sm:$0xff]
        %v2149 = vld [vmem:[#allocation4 + $0x1b0] sm:$0xff]
        %v2150 = vld [vmem:[#allocation4 + $0x1b8] sm:$0xff]
        %v2151 = vld [vmem:[#allocation4 + $0x1c0] sm:$0xff]
        %v2152 = vld [vmem:[#allocation4 + $0x1c8] sm:$0xff]
        %v2153 = vld [vmem:[#allocation4 + $0x1d0] sm:$0xff]
        %v2154 = vld [vmem:[#allocation4 + $0x1d8] sm:$0xff]
        %v2155 = vld [vmem:[#allocation4 + $0x1e0] sm:$0xff]
        %v2156 = vld [vmem:[#allocation4 + $0x1e8] sm:$0xff]
        %v2157 = vld [vmem:[#allocation4 + $0x1f0] sm:$0xff]
        %v2158 = vld [vmem:[#allocation4 + $0x1f8] sm:$0xff]
        %v2159 = vld [vmem:[%s6] sm:$0x1]
        %v2160 = vld [vmem:[%s5] sm:$0x1]
        %v2161 = vsub.f32 1.0, %v2095
        %v2162 = vsub.f32 1.0, %v2096
        %v2163 = vsub.f32 1.0, %v2097
        %v2164 = vsub.f32 1.0, %v2098
        %v2165 = vsub.f32 1.0, %v2099
        %v2166 = vsub.f32 1.0, %v2100
        %v2167 = vsub.f32 1.0, %v2101
        %v2168 = vsub.f32 1.0, %v2102
        %v2169 = vsub.f32 1.0, %v2103
        %v2170 = vsub.f32 1.0, %v2104
        %v2171 = vsub.f32 1.0, %v2105
        %v2172 = vsub.f32 1.0, %v2106
        %v2173 = vsub.f32 1.0, %v2107
        %v2174 = vsub.f32 1.0, %v2108
        %v2175 = vsub.f32 1.0, %v2109
        %v2176 = vsub.f32 1.0, %v2110
        %v2177 = vsub.f32 1.0, %v2111
        %v2178 = vsub.f32 1.0, %v2112
        %v2179 = vsub.f32 1.0, %v2113
        %v2180 = vsub.f32 1.0, %v2114
        %v2181 = vsub.f32 1.0, %v2115
        %v2182 = vsub.f32 1.0, %v2116
        %v2183 = vsub.f32 1.0, %v2117
        %v2184 = vsub.f32 1.0, %v2118
        %v2185 = vsub.f32 1.0, %v2119
        %v2186 = vsub.f32 1.0, %v2120
        %v2187 = vsub.f32 1.0, %v2121
        %v2188 = vsub.f32 1.0, %v2122
        %v2189 = vsub.f32 1.0, %v2123
        %v2190 = vsub.f32 1.0, %v2124
        %v2191 = vsub.f32 1.0, %v2125
        %v2192 = vsub.f32 1.0, %v2126
        %v2193 = vsub.f32 1.0, %v2127
        %v2194 = vsub.f32 1.0, %v2128
        %v2195 = vsub.f32 1.0, %v2129
        %v2196 = vsub.f32 1.0, %v2130
        %v2197 = vsub.f32 1.0, %v2131
        %v2198 = vsub.f32 1.0, %v2132
        %v2199 = vsub.f32 1.0, %v2133
        %v2200 = vsub.f32 1.0, %v2134
        %v2201 = vsub.f32 1.0, %v2135
        %v2202 = vsub.f32 1.0, %v2136
        %v2203 = vsub.f32 1.0, %v2137
        %v2204 = vsub.f32 1.0, %v2138
        %v2205 = vsub.f32 1.0, %v2139
        %v2206 = vsub.f32 1.0, %v2140
        %v2207 = vsub.f32 1.0, %v2141
        %v2208 = vsub.f32 1.0, %v2142
        %v2209 = vsub.f32 1.0, %v2143
        %v2210 = vsub.f32 1.0, %v2144
        %v2211 = vsub.f32 1.0, %v2145
        %v2212 = vsub.f32 1.0, %v2146
        %v2213 = vsub.f32 1.0, %v2147
        %v2214 = vsub.f32 1.0, %v2148
        %v2215 = vsub.f32 1.0, %v2149
        %v2216 = vsub.f32 1.0, %v2150
        %v2217 = vsub.f32 1.0, %v2151
        %v2218 = vsub.f32 1.0, %v2152
        %v2219 = vsub.f32 1.0, %v2153
        %v2220 = vsub.f32 1.0, %v2154
        %v2221 = vsub.f32 1.0, %v2155
        %v2222 = vsub.f32 1.0, %v2156
        %v2223 = vsub.f32 1.0, %v2157
        %v2224 = vsub.f32 1.0, %v2158
        %v2225 = vmul.f32 %v2031, %v2161
        %v2226 = vmul.f32 %v2032, %v2162
        %v2227 = vmul.f32 %v2033, %v2163
        %v2228 = vmul.f32 %v2034, %v2164
        %v2229 = vmul.f32 %v2035, %v2165
        %v2230 = vmul.f32 %v2036, %v2166
        %v2231 = vmul.f32 %v2037, %v2167
        %v2232 = vmul.f32 %v2038, %v2168
        %v2233 = vmul.f32 %v2039, %v2169
        %v2234 = vmul.f32 %v2040, %v2170
        %v2235 = vmul.f32 %v2041, %v2171
        %v2236 = vmul.f32 %v2042, %v2172
        %v2237 = vmul.f32 %v2043, %v2173
        %v2238 = vmul.f32 %v2044, %v2174
        %v2239 = vmul.f32 %v2045, %v2175
        %v2240 = vmul.f32 %v2046, %v2176
        %v2241 = vmul.f32 %v2047, %v2177
        %v2242 = vmul.f32 %v2048, %v2178
        %v2243 = vmul.f32 %v2049, %v2179
        %v2244 = vmul.f32 %v2050, %v2180
        %v2245 = vmul.f32 %v2051, %v2181
        %v2246 = vmul.f32 %v2052, %v2182
        %v2247 = vmul.f32 %v2053, %v2183
        %v2248 = vmul.f32 %v2054, %v2184
        %v2249 = vmul.f32 %v2055, %v2185
        %v2250 = vmul.f32 %v2056, %v2186
        %v2251 = vmul.f32 %v2057, %v2187
        %v2252 = vmul.f32 %v2058, %v2188
        %v2253 = vmul.f32 %v2059, %v2189
        %v2254 = vmul.f32 %v2060, %v2190
        %v2255 = vmul.f32 %v2061, %v2191
        %v2256 = vmul.f32 %v2062, %v2192
        %v2257 = vmul.f32 %v2063, %v2193
        %v2258 = vmul.f32 %v2064, %v2194
        %v2259 = vmul.f32 %v2065, %v2195
        %v2260 = vmul.f32 %v2066, %v2196
        %v2261 = vmul.f32 %v2067, %v2197
        %v2262 = vmul.f32 %v2068, %v2198
        %v2263 = vmul.f32 %v2069, %v2199
        %v2264 = vmul.f32 %v2070, %v2200
        %v2265 = vmul.f32 %v2071, %v2201
        %v2266 = vmul.f32 %v2072, %v2202
        %v2267 = vmul.f32 %v2073, %v2203
        %v2268 = vmul.f32 %v2074, %v2204
        %v2269 = vmul.f32 %v2075, %v2205
        %v2270 = vmul.f32 %v2076, %v2206
        %v2271 = vmul.f32 %v2077, %v2207
        %v2272 = vmul.f32 %v2078, %v2208
        %v2273 = vmul.f32 %v2079, %v2209
        %v2274 = vmul.f32 %v2080, %v2210
        %v2275 = vmul.f32 %v2081, %v2211
        %v2276 = vmul.f32 %v2082, %v2212
        %v2277 = vmul.f32 %v2083, %v2213
        %v2278 = vmul.f32 %v2084, %v2214
        %v2279 = vmul.f32 %v2085, %v2215
        %v2280 = vmul.f32 %v2086, %v2216
        %v2281 = vmul.f32 %v2087, %v2217
        %v2282 = vmul.f32 %v2088, %v2218
        %v2283 = vmul.f32 %v2089, %v2219
        %v2284 = vmul.f32 %v2090, %v2220
        %v2285 = vmul.f32 %v2091, %v2221
        %v2286 = vmul.f32 %v2092, %v2222
        %v2287 = vmul.f32 %v2093, %v2223
        %v2288 = vmul.f32 %v2094, %v2224
        %v2290 = vlaneseq
        %v2291 = vshrl.u32 %v2290, 7
        %v2292 = vsub.s32 0, %v2291
        %v2293 = vrot.slane %v2159, %v2292
        %v2295 = vmul.f32 %v2225, %v2293
        %v2296 = vmul.f32 %v2226, %v2293
        %v2297 = vmul.f32 %v2227, %v2293
        %v2298 = vmul.f32 %v2228, %v2293
        %v2299 = vmul.f32 %v2229, %v2293
        %v2300 = vmul.f32 %v2230, %v2293
        %v2301 = vmul.f32 %v2231, %v2293
        %v2302 = vmul.f32 %v2232, %v2293
        %v2303 = vmul.f32 %v2233, %v2293
        %v2304 = vmul.f32 %v2234, %v2293
        %v2305 = vmul.f32 %v2235, %v2293
        %v2306 = vmul.f32 %v2236, %v2293
        %v2307 = vmul.f32 %v2237, %v2293
        %v2308 = vmul.f32 %v2238, %v2293
        %v2309 = vmul.f32 %v2239, %v2293
        %v2310 = vmul.f32 %v2240, %v2293
        %v2311 = vmul.f32 %v2241, %v2293
        %v2312 = vmul.f32 %v2242, %v2293
        %v2313 = vmul.f32 %v2243, %v2293
        %v2314 = vmul.f32 %v2244, %v2293
        %v2315 = vmul.f32 %v2245, %v2293
        %v2316 = vmul.f32 %v2246, %v2293
        %v2317 = vmul.f32 %v2247, %v2293
        %v2318 = vmul.f32 %v2248, %v2293
        %v2319 = vmul.f32 %v2249, %v2293
        %v2320 = vmul.f32 %v2250, %v2293
        %v2321 = vmul.f32 %v2251, %v2293
        %v2322 = vmul.f32 %v2252, %v2293
        %v2323 = vmul.f32 %v2253, %v2293
        %v2324 = vmul.f32 %v2254, %v2293
        %v2325 = vmul.f32 %v2255, %v2293
        %v2326 = vmul.f32 %v2256, %v2293
        %v2327 = vmul.f32 %v2257, %v2293
        %v2328 = vmul.f32 %v2258, %v2293
        %v2329 = vmul.f32 %v2259, %v2293
        %v2330 = vmul.f32 %v2260, %v2293
        %v2331 = vmul.f32 %v2261, %v2293
        %v2332 = vmul.f32 %v2262, %v2293
        %v2333 = vmul.f32 %v2263, %v2293
        %v2334 = vmul.f32 %v2264, %v2293
        %v2335 = vmul.f32 %v2265, %v2293
        %v2336 = vmul.f32 %v2266, %v2293
        %v2337 = vmul.f32 %v2267, %v2293
        %v2338 = vmul.f32 %v2268, %v2293
        %v2339 = vmul.f32 %v2269, %v2293
        %v2340 = vmul.f32 %v2270, %v2293
        %v2341 = vmul.f32 %v2271, %v2293
        %v2342 = vmul.f32 %v2272, %v2293
        %v2343 = vmul.f32 %v2273, %v2293
        %v2344 = vmul.f32 %v2274, %v2293
        %v2345 = vmul.f32 %v2275, %v2293
        %v2346 = vmul.f32 %v2276, %v2293
        %v2347 = vmul.f32 %v2277, %v2293
        %v2348 = vmul.f32 %v2278, %v2293
        %v2349 = vmul.f32 %v2279, %v2293
        %v2350 = vmul.f32 %v2280, %v2293
        %v2351 = vmul.f32 %v2281, %v2293
        %v2352 = vmul.f32 %v2282, %v2293
        %v2353 = vmul.f32 %v2283, %v2293
        %v2354 = vmul.f32 %v2284, %v2293
        %v2355 = vmul.f32 %v2285, %v2293
        %v2356 = vmul.f32 %v2286, %v2293
        %v2357 = vmul.f32 %v2287, %v2293
        %v2358 = vmul.f32 %v2288, %v2293
        %v2359 = vadd.f32 %v2295, %v1967
        %v2360 = vadd.f32 %v2296, %v1968
        %v2361 = vadd.f32 %v2297, %v1969
        %v2362 = vadd.f32 %v2298, %v1970
        %v2363 = vadd.f32 %v2299, %v1971
        %v2364 = vadd.f32 %v2300, %v1972
        %v2365 = vadd.f32 %v2301, %v1973
        %v2366 = vadd.f32 %v2302, %v1974
        %v2367 = vadd.f32 %v2303, %v1975
        %v2368 = vadd.f32 %v2304, %v1976
        %v2369 = vadd.f32 %v2305, %v1977
        %v2370 = vadd.f32 %v2306, %v1978
        %v2371 = vadd.f32 %v2307, %v1979
        %v2372 = vadd.f32 %v2308, %v1980
        %v2373 = vadd.f32 %v2309, %v1981
        %v2374 = vadd.f32 %v2310, %v1982
        %v2375 = vadd.f32 %v2311, %v1983
        %v2376 = vadd.f32 %v2312, %v1984
        %v2377 = vadd.f32 %v2313, %v1985
        %v2378 = vadd.f32 %v2314, %v1986
        %v2379 = vadd.f32 %v2315, %v1987
        %v2380 = vadd.f32 %v2316, %v1988
        %v2381 = vadd.f32 %v2317, %v1989
        %v2382 = vadd.f32 %v2318, %v1990
        %v2383 = vadd.f32 %v2319, %v1991
        %v2384 = vadd.f32 %v2320, %v1992
        %v2385 = vadd.f32 %v2321, %v1993
        %v2386 = vadd.f32 %v2322, %v1994
        %v2387 = vadd.f32 %v2323, %v1995
        %v2388 = vadd.f32 %v2324, %v1996
        %v2389 = vadd.f32 %v2325, %v1997
        %v2390 = vadd.f32 %v2326, %v1998
        %v2391 = vadd.f32 %v2327, %v1999
        %v2392 = vadd.f32 %v2328, %v2000
        %v2393 = vadd.f32 %v2329, %v2001
        %v2394 = vadd.f32 %v2330, %v2002
        %v2395 = vadd.f32 %v2331, %v2003
        %v2396 = vadd.f32 %v2332, %v2004
        %v2397 = vadd.f32 %v2333, %v2005
        %v2398 = vadd.f32 %v2334, %v2006
        %v2399 = vadd.f32 %v2335, %v2007
        %v2400 = vadd.f32 %v2336, %v2008
        %v2401 = vadd.f32 %v2337, %v2009
        %v2402 = vadd.f32 %v2338, %v2010
        %v2403 = vadd.f32 %v2339, %v2011
        %v2404 = vadd.f32 %v2340, %v2012
        %v2405 = vadd.f32 %v2341, %v2013
        %v2406 = vadd.f32 %v2342, %v2014
        %v2407 = vadd.f32 %v2343, %v2015
        %v2408 = vadd.f32 %v2344, %v2016
        %v2409 = vadd.f32 %v2345, %v2017
        %v2410 = vadd.f32 %v2346, %v2018
        %v2411 = vadd.f32 %v2347, %v2019
        %v2412 = vadd.f32 %v2348, %v2020
        %v2413 = vadd.f32 %v2349, %v2021
        %v2414 = vadd.f32 %v2350, %v2022
        %v2415 = vadd.f32 %v2351, %v2023
        %v2416 = vadd.f32 %v2352, %v2024
        %v2417 = vadd.f32 %v2353, %v2025
        %v2418 = vadd.f32 %v2354, %v2026
        %v2419 = vadd.f32 %v2355, %v2027
        %v2420 = vadd.f32 %v2356, %v2028
        %v2421 = vadd.f32 %v2357, %v2029
        %v2422 = vadd.f32 %v2358, %v2030
        %v2424 = vlaneseq
        %v2425 = vshrl.u32 %v2424, 7
        %v2426 = vsub.s32 0, %v2425
        %v2427 = vrot.slane %v2160, %v2426
        %v2429 = vsub.f32 %v2359, %v2427
        %v2430 = vsub.f32 %v2360, %v2427
        %v2431 = vsub.f32 %v2361, %v2427
        %v2432 = vsub.f32 %v2362, %v2427
        %v2433 = vsub.f32 %v2363, %v2427
        %v2434 = vsub.f32 %v2364, %v2427
        %v2435 = vsub.f32 %v2365, %v2427
        %v2436 = vsub.f32 %v2366, %v2427
        %v2437 = vsub.f32 %v2367, %v2427
        %v2438 = vsub.f32 %v2368, %v2427
        %v2439 = vsub.f32 %v2369, %v2427
        %v2440 = vsub.f32 %v2370, %v2427
        %v2441 = vsub.f32 %v2371, %v2427
        %v2442 = vsub.f32 %v2372, %v2427
        %v2443 = vsub.f32 %v2373, %v2427
        %v2444 = vsub.f32 %v2374, %v2427
        %v2445 = vsub.f32 %v2375, %v2427
        %v2446 = vsub.f32 %v2376, %v2427
        %v2447 = vsub.f32 %v2377, %v2427
        %v2448 = vsub.f32 %v2378, %v2427
        %v2449 = vsub.f32 %v2379, %v2427
        %v2450 = vsub.f32 %v2380, %v2427
        %v2451 = vsub.f32 %v2381, %v2427
        %v2452 = vsub.f32 %v2382, %v2427
        %v2453 = vsub.f32 %v2383, %v2427
        %v2454 = vsub.f32 %v2384, %v2427
        %v2455 = vsub.f32 %v2385, %v2427
        %v2456 = vsub.f32 %v2386, %v2427
        %v2457 = vsub.f32 %v2387, %v2427
        %v2458 = vsub.f32 %v2388, %v2427
        %v2459 = vsub.f32 %v2389, %v2427
        %v2460 = vsub.f32 %v2390, %v2427
        %v2461 = vsub.f32 %v2391, %v2427
        %v2462 = vsub.f32 %v2392, %v2427
        %v2463 = vsub.f32 %v2393, %v2427
        %v2464 = vsub.f32 %v2394, %v2427
        %v2465 = vsub.f32 %v2395, %v2427
        %v2466 = vsub.f32 %v2396, %v2427
        %v2467 = vsub.f32 %v2397, %v2427
        %v2468 = vsub.f32 %v2398, %v2427
        %v2469 = vsub.f32 %v2399, %v2427
        %v2470 = vsub.f32 %v2400, %v2427
        %v2471 = vsub.f32 %v2401, %v2427
        %v2472 = vsub.f32 %v2402, %v2427
        %v2473 = vsub.f32 %v2403, %v2427
        %v2474 = vsub.f32 %v2404, %v2427
        %v2475 = vsub.f32 %v2405, %v2427
        %v2476 = vsub.f32 %v2406, %v2427
        %v2477 = vsub.f32 %v2407, %v2427
        %v2478 = vsub.f32 %v2408, %v2427
        %v2479 = vsub.f32 %v2409, %v2427
        %v2480 = vsub.f32 %v2410, %v2427
        %v2481 = vsub.f32 %v2411, %v2427
        %v2482 = vsub.f32 %v2412, %v2427
        %v2483 = vsub.f32 %v2413, %v2427
        %v2484 = vsub.f32 %v2414, %v2427
        %v2485 = vsub.f32 %v2415, %v2427
        %v2486 = vsub.f32 %v2416, %v2427
        %v2487 = vsub.f32 %v2417, %v2427
        %v2488 = vsub.f32 %v2418, %v2427
        %v2489 = vsub.f32 %v2419, %v2427
        %v2490 = vsub.f32 %v2420, %v2427
        %v2491 = vsub.f32 %v2421, %v2427
        %v2492 = vsub.f32 %v2422, %v2427
        %vm2493 = vcmp.gt.f32.partialorder %v2429, 0.0
        %vm2494 = vcmp.gt.f32.partialorder %v2430, 0.0
        %vm2495 = vcmp.gt.f32.partialorder %v2431, 0.0
        %vm2496 = vcmp.gt.f32.partialorder %v2432, 0.0
        %vm2497 = vcmp.gt.f32.partialorder %v2433, 0.0
        %vm2498 = vcmp.gt.f32.partialorder %v2434, 0.0
        %vm2499 = vcmp.gt.f32.partialorder %v2435, 0.0
        %vm2500 = vcmp.gt.f32.partialorder %v2436, 0.0
        %vm2501 = vcmp.gt.f32.partialorder %v2437, 0.0
        %vm2502 = vcmp.gt.f32.partialorder %v2438, 0.0
        %vm2503 = vcmp.gt.f32.partialorder %v2439, 0.0
        %vm2504 = vcmp.gt.f32.partialorder %v2440, 0.0
        %vm2505 = vcmp.gt.f32.partialorder %v2441, 0.0
        %vm2506 = vcmp.gt.f32.partialorder %v2442, 0.0
        %vm2507 = vcmp.gt.f32.partialorder %v2443, 0.0
        %vm2508 = vcmp.gt.f32.partialorder %v2444, 0.0
        %vm2509 = vcmp.gt.f32.partialorder %v2445, 0.0
        %vm2510 = vcmp.gt.f32.partialorder %v2446, 0.0
        %vm2511 = vcmp.gt.f32.partialorder %v2447, 0.0
        %vm2512 = vcmp.gt.f32.partialorder %v2448, 0.0
        %vm2513 = vcmp.gt.f32.partialorder %v2449, 0.0
        %vm2514 = vcmp.gt.f32.partialorder %v2450, 0.0
        %vm2515 = vcmp.gt.f32.partialorder %v2451, 0.0
        %vm2516 = vcmp.gt.f32.partialorder %v2452, 0.0
        %vm2517 = vcmp.gt.f32.partialorder %v2453, 0.0
        %vm2518 = vcmp.gt.f32.partialorder %v2454, 0.0
        %vm2519 = vcmp.gt.f32.partialorder %v2455, 0.0
        %vm2520 = vcmp.gt.f32.partialorder %v2456, 0.0
        %vm2521 = vcmp.gt.f32.partialorder %v2457, 0.0
        %vm2522 = vcmp.gt.f32.partialorder %v2458, 0.0
        %vm2523 = vcmp.gt.f32.partialorder %v2459, 0.0
        %vm2524 = vcmp.gt.f32.partialorder %v2460, 0.0
        %vm2525 = vcmp.gt.f32.partialorder %v2461, 0.0
        %vm2526 = vcmp.gt.f32.partialorder %v2462, 0.0
        %vm2527 = vcmp.gt.f32.partialorder %v2463, 0.0
        %vm2528 = vcmp.gt.f32.partialorder %v2464, 0.0
        %vm2529 = vcmp.gt.f32.partialorder %v2465, 0.0
        %vm2530 = vcmp.gt.f32.partialorder %v2466, 0.0
        %vm2531 = vcmp.gt.f32.partialorder %v2467, 0.0
        %vm2532 = vcmp.gt.f32.partialorder %v2468, 0.0
        %vm2533 = vcmp.gt.f32.partialorder %v2469, 0.0
        %vm2534 = vcmp.gt.f32.partialorder %v2470, 0.0
        %vm2535 = vcmp.gt.f32.partialorder %v2471, 0.0
        %vm2536 = vcmp.gt.f32.partialorder %v2472, 0.0
        %vm2537 = vcmp.gt.f32.partialorder %v2473, 0.0
        %vm2538 = vcmp.gt.f32.partialorder %v2474, 0.0
        %vm2539 = vcmp.gt.f32.partialorder %v2475, 0.0
        %vm2540 = vcmp.gt.f32.partialorder %v2476, 0.0
        %vm2541 = vcmp.gt.f32.partialorder %v2477, 0.0
        %vm2542 = vcmp.gt.f32.partialorder %v2478, 0.0
        %vm2543 = vcmp.gt.f32.partialorder %v2479, 0.0
        %vm2544 = vcmp.gt.f32.partialorder %v2480, 0.0
        %vm2545 = vcmp.gt.f32.partialorder %v2481, 0.0
        %vm2546 = vcmp.gt.f32.partialorder %v2482, 0.0
        %vm2547 = vcmp.gt.f32.partialorder %v2483, 0.0
        %vm2548 = vcmp.gt.f32.partialorder %v2484, 0.0
        %vm2549 = vcmp.gt.f32.partialorder %v2485, 0.0
        %vm2550 = vcmp.gt.f32.partialorder %v2486, 0.0
        %vm2551 = vcmp.gt.f32.partialorder %v2487, 0.0
        %vm2552 = vcmp.gt.f32.partialorder %v2488, 0.0
        %vm2553 = vcmp.gt.f32.partialorder %v2489, 0.0
        %vm2554 = vcmp.gt.f32.partialorder %v2490, 0.0
        %vm2555 = vcmp.gt.f32.partialorder %v2491, 0.0
        %vm2556 = vcmp.gt.f32.partialorder %v2492, 0.0
        %v2557 = vsel %vm2493, 1, 0
        %v2558 = vsel %vm2494, 1, 0
        %v2559 = vsel %vm2495, 1, 0
        %v2560 = vsel %vm2496, 1, 0
        %v2561 = vsel %vm2497, 1, 0
        %v2562 = vsel %vm2498, 1, 0
        %v2563 = vsel %vm2499, 1, 0
        %v2564 = vsel %vm2500, 1, 0
        %v2565 = vsel %vm2501, 1, 0
        %v2566 = vsel %vm2502, 1, 0
        %v2567 = vsel %vm2503, 1, 0
        %v2568 = vsel %vm2504, 1, 0
        %v2569 = vsel %vm2505, 1, 0
        %v2570 = vsel %vm2506, 1, 0
        %v2571 = vsel %vm2507, 1, 0
        %v2572 = vsel %vm2508, 1, 0
        %v2573 = vsel %vm2509, 1, 0
        %v2574 = vsel %vm2510, 1, 0
        %v2575 = vsel %vm2511, 1, 0
        %v2576 = vsel %vm2512, 1, 0
        %v2577 = vsel %vm2513, 1, 0
        %v2578 = vsel %vm2514, 1, 0
        %v2579 = vsel %vm2515, 1, 0
        %v2580 = vsel %vm2516, 1, 0
        %v2581 = vsel %vm2517, 1, 0
        %v2582 = vsel %vm2518, 1, 0
        %v2583 = vsel %vm2519, 1, 0
        %v2584 = vsel %vm2520, 1, 0
        %v2585 = vsel %vm2521, 1, 0
        %v2586 = vsel %vm2522, 1, 0
        %v2587 = vsel %vm2523, 1, 0
        %v2588 = vsel %vm2524, 1, 0
        %v2589 = vsel %vm2525, 1, 0
        %v2590 = vsel %vm2526, 1, 0
        %v2591 = vsel %vm2527, 1, 0
        %v2592 = vsel %vm2528, 1, 0
        %v2593 = vsel %vm2529, 1, 0
        %v2594 = vsel %vm2530, 1, 0
        %v2595 = vsel %vm2531, 1, 0
        %v2596 = vsel %vm2532, 1, 0
        %v2597 = vsel %vm2533, 1, 0
        %v2598 = vsel %vm2534, 1, 0
        %v2599 = vsel %vm2535, 1, 0
        %v2600 = vsel %vm2536, 1, 0
        %v2601 = vsel %vm2537, 1, 0
        %v2602 = vsel %vm2538, 1, 0
        %v2603 = vsel %vm2539, 1, 0
        %v2604 = vsel %vm2540, 1, 0
        %v2605 = vsel %vm2541, 1, 0
        %v2606 = vsel %vm2542, 1, 0
        %v2607 = vsel %vm2543, 1, 0
        %v2608 = vsel %vm2544, 1, 0
        %v2609 = vsel %vm2545, 1, 0
        %v2610 = vsel %vm2546, 1, 0
        %v2611 = vsel %vm2547, 1, 0
        %v2612 = vsel %vm2548, 1, 0
        %v2613 = vsel %vm2549, 1, 0
        %v2614 = vsel %vm2550, 1, 0
        %v2615 = vsel %vm2551, 1, 0
        %v2616 = vsel %vm2552, 1, 0
        %v2617 = vsel %vm2553, 1, 0
        %v2618 = vsel %vm2554, 1, 0
        %v2619 = vsel %vm2555, 1, 0
        %v2620 = vsel %vm2556, 1, 0
        %v2621 = vcvt.s32.f32 %v2557
        %v2622 = vcvt.s32.f32 %v2558
        %v2623 = vcvt.s32.f32 %v2559
        %v2624 = vcvt.s32.f32 %v2560
        %v2625 = vcvt.s32.f32 %v2561
        %v2626 = vcvt.s32.f32 %v2562
        %v2627 = vcvt.s32.f32 %v2563
        %v2628 = vcvt.s32.f32 %v2564
        %v2629 = vcvt.s32.f32 %v2565
        %v2630 = vcvt.s32.f32 %v2566
        %v2631 = vcvt.s32.f32 %v2567
        %v2632 = vcvt.s32.f32 %v2568
        %v2633 = vcvt.s32.f32 %v2569
        %v2634 = vcvt.s32.f32 %v2570
        %v2635 = vcvt.s32.f32 %v2571
        %v2636 = vcvt.s32.f32 %v2572
        %v2637 = vcvt.s32.f32 %v2573
        %v2638 = vcvt.s32.f32 %v2574
        %v2639 = vcvt.s32.f32 %v2575
        %v2640 = vcvt.s32.f32 %v2576
        %v2641 = vcvt.s32.f32 %v2577
        %v2642 = vcvt.s32.f32 %v2578
        %v2643 = vcvt.s32.f32 %v2579
        %v2644 = vcvt.s32.f32 %v2580
        %v2645 = vcvt.s32.f32 %v2581
        %v2646 = vcvt.s32.f32 %v2582
        %v2647 = vcvt.s32.f32 %v2583
        %v2648 = vcvt.s32.f32 %v2584
        %v2649 = vcvt.s32.f32 %v2585
        %v2650 = vcvt.s32.f32 %v2586
        %v2651 = vcvt.s32.f32 %v2587
        %v2652 = vcvt.s32.f32 %v2588
        %v2653 = vcvt.s32.f32 %v2589
        %v2654 = vcvt.s32.f32 %v2590
        %v2655 = vcvt.s32.f32 %v2591
        %v2656 = vcvt.s32.f32 %v2592
        %v2657 = vcvt.s32.f32 %v2593
        %v2658 = vcvt.s32.f32 %v2594
        %v2659 = vcvt.s32.f32 %v2595
        %v2660 = vcvt.s32.f32 %v2596
        %v2661 = vcvt.s32.f32 %v2597
        %v2662 = vcvt.s32.f32 %v2598
        %v2663 = vcvt.s32.f32 %v2599
        %v2664 = vcvt.s32.f32 %v2600
        %v2665 = vcvt.s32.f32 %v2601
        %v2666 = vcvt.s32.f32 %v2602
        %v2667 = vcvt.s32.f32 %v2603
        %v2668 = vcvt.s32.f32 %v2604
        %v2669 = vcvt.s32.f32 %v2605
        %v2670 = vcvt.s32.f32 %v2606
        %v2671 = vcvt.s32.f32 %v2607
        %v2672 = vcvt.s32.f32 %v2608
        %v2673 = vcvt.s32.f32 %v2609
        %v2674 = vcvt.s32.f32 %v2610
        %v2675 = vcvt.s32.f32 %v2611
        %v2676 = vcvt.s32.f32 %v2612
        %v2677 = vcvt.s32.f32 %v2613
        %v2678 = vcvt.s32.f32 %v2614
        %v2679 = vcvt.s32.f32 %v2615
        %v2680 = vcvt.s32.f32 %v2616
        %v2681 = vcvt.s32.f32 %v2617
        %v2682 = vcvt.s32.f32 %v2618
        %v2683 = vcvt.s32.f32 %v2619
        %v2684 = vcvt.s32.f32 %v2620
        %2685 = vst [vmem:[#allocation2] sm:$0xff] %v2359
        %2686 = vst [vmem:[#allocation2 + $0x8] sm:$0xff] %v2360
        %2687 = vst [vmem:[#allocation2 + $0x10] sm:$0xff] %v2361
        %2688 = vst [vmem:[#allocation2 + $0x18] sm:$0xff] %v2362
        %2689 = vst [vmem:[#allocation2 + $0x20] sm:$0xff] %v2363
        %2690 = vst [vmem:[#allocation2 + $0x28] sm:$0xff] %v2364
        %2691 = vst [vmem:[#allocation2 + $0x30] sm:$0xff] %v2365
        %2692 = vst [vmem:[#allocation2 + $0x38] sm:$0xff] %v2366
        %2693 = vst [vmem:[#allocation2 + $0x40] sm:$0xff] %v2367
        %2694 = vst [vmem:[#allocation2 + $0x48] sm:$0xff] %v2368
        %2695 = vst [vmem:[#allocation2 + $0x50] sm:$0xff] %v2369
        %2696 = vst [vmem:[#allocation2 + $0x58] sm:$0xff] %v2370
        %2697 = vst [vmem:[#allocation2 + $0x60] sm:$0xff] %v2371
        %2698 = vst [vmem:[#allocation2 + $0x68] sm:$0xff] %v2372
        %2699 = vst [vmem:[#allocation2 + $0x70] sm:$0xff] %v2373
        %2700 = vst [vmem:[#allocation2 + $0x78] sm:$0xff] %v2374
        %2701 = vst [vmem:[#allocation2 + $0x80] sm:$0xff] %v2375
        %2702 = vst [vmem:[#allocation2 + $0x88] sm:$0xff] %v2376
        %2703 = vst [vmem:[#allocation2 + $0x90] sm:$0xff] %v2377
        %2704 = vst [vmem:[#allocation2 + $0x98] sm:$0xff] %v2378
        %2705 = vst [vmem:[#allocation2 + $0xa0] sm:$0xff] %v2379
        %2706 = vst [vmem:[#allocation2 + $0xa8] sm:$0xff] %v2380
        %2707 = vst [vmem:[#allocation2 + $0xb0] sm:$0xff] %v2381
        %2708 = vst [vmem:[#allocation2 + $0xb8] sm:$0xff] %v2382
        %2709 = vst [vmem:[#allocation2 + $0xc0] sm:$0xff] %v2383
        %2710 = vst [vmem:[#allocation2 + $0xc8] sm:$0xff] %v2384
        %2711 = vst [vmem:[#allocation2 + $0xd0] sm:$0xff] %v2385
        %2712 = vst [vmem:[#allocation2 + $0xd8] sm:$0xff] %v2386
        %2713 = vst [vmem:[#allocation2 + $0xe0] sm:$0xff] %v2387
        %2714 = vst [vmem:[#allocation2 + $0xe8] sm:$0xff] %v2388
        %2715 = vst [vmem:[#allocation2 + $0xf0] sm:$0xff] %v2389
        %2716 = vst [vmem:[#allocation2 + $0xf8] sm:$0xff] %v2390
        %2717 = vst [vmem:[#allocation2 + $0x100] sm:$0xff] %v2391
        %2718 = vst [vmem:[#allocation2 + $0x108] sm:$0xff] %v2392
        %2719 = vst [vmem:[#allocation2 + $0x110] sm:$0xff] %v2393
        %2720 = vst [vmem:[#allocation2 + $0x118] sm:$0xff] %v2394
        %2721 = vst [vmem:[#allocation2 + $0x120] sm:$0xff] %v2395
        %2722 = vst [vmem:[#allocation2 + $0x128] sm:$0xff] %v2396
        %2723 = vst [vmem:[#allocation2 + $0x130] sm:$0xff] %v2397
        %2724 = vst [vmem:[#allocation2 + $0x138] sm:$0xff] %v2398
        %2725 = vst [vmem:[#allocation2 + $0x140] sm:$0xff] %v2399
        %2726 = vst [vmem:[#allocation2 + $0x148] sm:$0xff] %v2400
        %2727 = vst [vmem:[#allocation2 + $0x150] sm:$0xff] %v2401
        %2728 = vst [vmem:[#allocation2 + $0x158] sm:$0xff] %v2402
        %2729 = vst [vmem:[#allocation2 + $0x160] sm:$0xff] %v2403
        %2730 = vst [vmem:[#allocation2 + $0x168] sm:$0xff] %v2404
        %2731 = vst [vmem:[#allocation2 + $0x170] sm:$0xff] %v2405
        %2732 = vst [vmem:[#allocation2 + $0x178] sm:$0xff] %v2406
        %2733 = vst [vmem:[#allocation2 + $0x180] sm:$0xff] %v2407
        %2734 = vst [vmem:[#allocation2 + $0x188] sm:$0xff] %v2408
        %2735 = vst [vmem:[#allocation2 + $0x190] sm:$0xff] %v2409
        %2736 = vst [vmem:[#allocation2 + $0x198] sm:$0xff] %v2410
        %2737 = vst [vmem:[#allocation2 + $0x1a0] sm:$0xff] %v2411
        %2738 = vst [vmem:[#allocation2 + $0x1a8] sm:$0xff] %v2412
        %2739 = vst [vmem:[#allocation2 + $0x1b0] sm:$0xff] %v2413
        %2740 = vst [vmem:[#allocation2 + $0x1b8] sm:$0xff] %v2414
        %2741 = vst [vmem:[#allocation2 + $0x1c0] sm:$0xff] %v2415
        %2742 = vst [vmem:[#allocation2 + $0x1c8] sm:$0xff] %v2416
        %2743 = vst [vmem:[#allocation2 + $0x1d0] sm:$0xff] %v2417
        %2744 = vst [vmem:[#allocation2 + $0x1d8] sm:$0xff] %v2418
        %2745 = vst [vmem:[#allocation2 + $0x1e0] sm:$0xff] %v2419
        %2746 = vst [vmem:[#allocation2 + $0x1e8] sm:$0xff] %v2420
        %2747 = vst [vmem:[#allocation2 + $0x1f0] sm:$0xff] %v2421
        %2748 = vst [vmem:[#allocation2 + $0x1f8] sm:$0xff] %v2422
        %2749 = vst [vmem:[#allocation4] sm:$0xff] %v2621
        %2750 = vst [vmem:[#allocation4 + $0x8] sm:$0xff] %v2622
        %2751 = vst [vmem:[#allocation4 + $0x10] sm:$0xff] %v2623
        %2752 = vst [vmem:[#allocation4 + $0x18] sm:$0xff] %v2624
        %2753 = vst [vmem:[#allocation4 + $0x20] sm:$0xff] %v2625
        %2754 = vst [vmem:[#allocation4 + $0x28] sm:$0xff] %v2626
        %2755 = vst [vmem:[#allocation4 + $0x30] sm:$0xff] %v2627
        %2756 = vst [vmem:[#allocation4 + $0x38] sm:$0xff] %v2628
        %2757 = vst [vmem:[#allocation4 + $0x40] sm:$0xff] %v2629
        %2758 = vst [vmem:[#allocation4 + $0x48] sm:$0xff] %v2630
        %2759 = vst [vmem:[#allocation4 + $0x50] sm:$0xff] %v2631
        %2760 = vst [vmem:[#allocation4 + $0x58] sm:$0xff] %v2632
        %2761 = vst [vmem:[#allocation4 + $0x60] sm:$0xff] %v2633
        %2762 = vst [vmem:[#allocation4 + $0x68] sm:$0xff] %v2634
        %2763 = vst [vmem:[#allocation4 + $0x70] sm:$0xff] %v2635
        %2764 = vst [vmem:[#allocation4 + $0x78] sm:$0xff] %v2636
        %2765 = vst [vmem:[#allocation4 + $0x80] sm:$0xff] %v2637
        %2766 = vst [vmem:[#allocation4 + $0x88] sm:$0xff] %v2638
        %2767 = vst [vmem:[#allocation4 + $0x90] sm:$0xff] %v2639
        %2768 = vst [vmem:[#allocation4 + $0x98] sm:$0xff] %v2640
        %2769 = vst [vmem:[#allocation4 + $0xa0] sm:$0xff] %v2641
        %2770 = vst [vmem:[#allocation4 + $0xa8] sm:$0xff] %v2642
        %2771 = vst [vmem:[#allocation4 + $0xb0] sm:$0xff] %v2643
        %2772 = vst [vmem:[#allocation4 + $0xb8] sm:$0xff] %v2644
        %2773 = vst [vmem:[#allocation4 + $0xc0] sm:$0xff] %v2645
        %2774 = vst [vmem:[#allocation4 + $0xc8] sm:$0xff] %v2646
        %2775 = vst [vmem:[#allocation4 + $0xd0] sm:$0xff] %v2647
        %2776 = vst [vmem:[#allocation4 + $0xd8] sm:$0xff] %v2648
        %2777 = vst [vmem:[#allocation4 + $0xe0] sm:$0xff] %v2649
        %2778 = vst [vmem:[#allocation4 + $0xe8] sm:$0xff] %v2650
        %2779 = vst [vmem:[#allocation4 + $0xf0] sm:$0xff] %v2651
        %2780 = vst [vmem:[#allocation4 + $0xf8] sm:$0xff] %v2652
        %2781 = vst [vmem:[#allocation4 + $0x100] sm:$0xff] %v2653
        %2782 = vst [vmem:[#allocation4 + $0x108] sm:$0xff] %v2654
        %2783 = vst [vmem:[#allocation4 + $0x110] sm:$0xff] %v2655
        %2784 = vst [vmem:[#allocation4 + $0x118] sm:$0xff] %v2656
        %2785 = vst [vmem:[#allocation4 + $0x120] sm:$0xff] %v2657
        %2786 = vst [vmem:[#allocation4 + $0x128] sm:$0xff] %v2658
        %2787 = vst [vmem:[#allocation4 + $0x130] sm:$0xff] %v2659
        %2788 = vst [vmem:[#allocation4 + $0x138] sm:$0xff] %v2660
        %2789 = vst [vmem:[#allocation4 + $0x140] sm:$0xff] %v2661
        %2790 = vst [vmem:[#allocation4 + $0x148] sm:$0xff] %v2662
        %2791 = vst [vmem:[#allocation4 + $0x150] sm:$0xff] %v2663
        %2792 = vst [vmem:[#allocation4 + $0x158] sm:$0xff] %v2664
        %2793 = vst [vmem:[#allocation4 + $0x160] sm:$0xff] %v2665
        %2794 = vst [vmem:[#allocation4 + $0x168] sm:$0xff] %v2666
        %2795 = vst [vmem:[#allocation4 + $0x170] sm:$0xff] %v2667
        %2796 = vst [vmem:[#allocation4 + $0x178] sm:$0xff] %v2668
        %2797 = vst [vmem:[#allocation4 + $0x180] sm:$0xff] %v2669
        %2798 = vst [vmem:[#allocation4 + $0x188] sm:$0xff] %v2670
        %2799 = vst [vmem:[#allocation4 + $0x190] sm:$0xff] %v2671
        %2800 = vst [vmem:[#allocation4 + $0x198] sm:$0xff] %v2672
        %2801 = vst [vmem:[#allocation4 + $0x1a0] sm:$0xff] %v2673
        %2802 = vst [vmem:[#allocation4 + $0x1a8] sm:$0xff] %v2674
        %2803 = vst [vmem:[#allocation4 + $0x1b0] sm:$0xff] %v2675
        %2804 = vst [vmem:[#allocation4 + $0x1b8] sm:$0xff] %v2676
        %2805 = vst [vmem:[#allocation4 + $0x1c0] sm:$0xff] %v2677
        %2806 = vst [vmem:[#allocation4 + $0x1c8] sm:$0xff] %v2678
        %2807 = vst [vmem:[#allocation4 + $0x1d0] sm:$0xff] %v2679
        %2808 = vst [vmem:[#allocation4 + $0x1d8] sm:$0xff] %v2680
        %2809 = vst [vmem:[#allocation4 + $0x1e0] sm:$0xff] %v2681
        %2810 = vst [vmem:[#allocation4 + $0x1e8] sm:$0xff] %v2682
        %2811 = vst [vmem:[#allocation4 + $0x1f0] sm:$0xff] %v2683
        %2812 = vst [vmem:[#allocation4 + $0x1f8] sm:$0xff] %v2684
        %v2813 = vpack.c.bf16 %v2622, %v2621
        %v2814 = vpack.c.bf16 %v2624, %v2623
        %v2815 = vpack.c.bf16 %v2626, %v2625
        %v2816 = vpack.c.bf16 %v2628, %v2627
        %v2817 = vpack.c.bf16 %v2630, %v2629
        %v2818 = vpack.c.bf16 %v2632, %v2631
        %v2819 = vpack.c.bf16 %v2634, %v2633
        %v2820 = vpack.c.bf16 %v2636, %v2635
        %v2821 = vpack.c.bf16 %v2638, %v2637
        %v2822 = vpack.c.bf16 %v2640, %v2639
        %v2823 = vpack.c.bf16 %v2642, %v2641
        %v2824 = vpack.c.bf16 %v2644, %v2643
        %v2825 = vpack.c.bf16 %v2646, %v2645
        %v2826 = vpack.c.bf16 %v2648, %v2647
        %v2827 = vpack.c.bf16 %v2650, %v2649
        %v2828 = vpack.c.bf16 %v2652, %v2651
        %v2829 = vpack.c.bf16 %v2654, %v2653
        %v2830 = vpack.c.bf16 %v2656, %v2655
        %v2831 = vpack.c.bf16 %v2658, %v2657
        %v2832 = vpack.c.bf16 %v2660, %v2659
        %v2833 = vpack.c.bf16 %v2662, %v2661
        %v2834 = vpack.c.bf16 %v2664, %v2663
        %v2835 = vpack.c.bf16 %v2666, %v2665
        %v2836 = vpack.c.bf16 %v2668, %v2667
        %v2837 = vpack.c.bf16 %v2670, %v2669
        %v2838 = vpack.c.bf16 %v2672, %v2671
        %v2839 = vpack.c.bf16 %v2674, %v2673
        %v2840 = vpack.c.bf16 %v2676, %v2675
        %v2841 = vpack.c.bf16 %v2678, %v2677
        %v2842 = vpack.c.bf16 %v2680, %v2679
        %v2843 = vpack.c.bf16 %v2682, %v2681
        %v2844 = vpack.c.bf16 %v2684, %v2683
        %v2877 = vunpack.c.l.b16 %v2813
        %v2878 = vunpack.c.h.b16 %v2813
        %v2879 = vunpack.c.l.b16 %v2814
        %v2880 = vunpack.c.h.b16 %v2814
        %v2881 = vunpack.c.l.b16 %v2815
        %v2882 = vunpack.c.h.b16 %v2815
        %v2883 = vunpack.c.l.b16 %v2816
        %v2884 = vunpack.c.h.b16 %v2816
        %v2885 = vunpack.c.l.b16 %v2817
        %v2886 = vunpack.c.h.b16 %v2817
        %v2887 = vunpack.c.l.b16 %v2818
        %v2888 = vunpack.c.h.b16 %v2818
        %v2889 = vunpack.c.l.b16 %v2819
        %v2890 = vunpack.c.h.b16 %v2819
        %v2891 = vunpack.c.l.b16 %v2820
        %v2892 = vunpack.c.h.b16 %v2820
        %v2893 = vunpack.c.l.b16 %v2821
        %v2894 = vunpack.c.h.b16 %v2821
        %v2895 = vunpack.c.l.b16 %v2822
        %v2896 = vunpack.c.h.b16 %v2822
        %v2897 = vunpack.c.l.b16 %v2823
        %v2898 = vunpack.c.h.b16 %v2823
        %v2899 = vunpack.c.l.b16 %v2824
        %v2900 = vunpack.c.h.b16 %v2824
        %v2901 = vunpack.c.l.b16 %v2825
        %v2902 = vunpack.c.h.b16 %v2825
        %v2903 = vunpack.c.l.b16 %v2826
        %v2904 = vunpack.c.h.b16 %v2826
        %v2905 = vunpack.c.l.b16 %v2827
        %v2906 = vunpack.c.h.b16 %v2827
        %v2907 = vunpack.c.l.b16 %v2828
        %v2908 = vunpack.c.h.b16 %v2828
        %v2909 = vunpack.c.l.b16 %v2829
        %v2910 = vunpack.c.h.b16 %v2829
        %v2911 = vunpack.c.l.b16 %v2830
        %v2912 = vunpack.c.h.b16 %v2830
        %v2913 = vunpack.c.l.b16 %v2831
        %v2914 = vunpack.c.h.b16 %v2831
        %v2915 = vunpack.c.l.b16 %v2832
        %v2916 = vunpack.c.h.b16 %v2832
        %v2917 = vunpack.c.l.b16 %v2833
        %v2918 = vunpack.c.h.b16 %v2833
        %v2919 = vunpack.c.l.b16 %v2834
        %v2920 = vunpack.c.h.b16 %v2834
        %v2921 = vunpack.c.l.b16 %v2835
        %v2922 = vunpack.c.h.b16 %v2835
        %v2923 = vunpack.c.l.b16 %v2836
        %v2924 = vunpack.c.h.b16 %v2836
        %v2925 = vunpack.c.l.b16 %v2837
        %v2926 = vunpack.c.h.b16 %v2837
        %v2927 = vunpack.c.l.b16 %v2838
        %v2928 = vunpack.c.h.b16 %v2838
        %v2929 = vunpack.c.l.b16 %v2839
        %v2930 = vunpack.c.h.b16 %v2839
        %v2931 = vunpack.c.l.b16 %v2840
        %v2932 = vunpack.c.h.b16 %v2840
        %v2933 = vunpack.c.l.b16 %v2841
        %v2934 = vunpack.c.h.b16 %v2841
        %v2935 = vunpack.c.l.b16 %v2842
        %v2936 = vunpack.c.h.b16 %v2842
        %v2937 = vunpack.c.l.b16 %v2843
        %v2938 = vunpack.c.h.b16 %v2843
        %v2939 = vunpack.c.l.b16 %v2844
        %v2940 = vunpack.c.h.b16 %v2844
        %v2941 = vpack.c.b16 %v2877, %v2877
        %v2942 = vpack.c.b16 %v2878, %v2878
        %v2943 = vpack.c.b16 %v2879, %v2879
        %v2944 = vpack.c.b16 %v2880, %v2880
        %v2945 = vpack.c.b16 %v2881, %v2881
        %v2946 = vpack.c.b16 %v2882, %v2882
        %v2947 = vpack.c.b16 %v2883, %v2883
        %v2948 = vpack.c.b16 %v2884, %v2884
        %v2949 = vpack.c.b16 %v2885, %v2885
        %v2950 = vpack.c.b16 %v2886, %v2886
        %v2951 = vpack.c.b16 %v2887, %v2887
        %v2952 = vpack.c.b16 %v2888, %v2888
        %v2953 = vpack.c.b16 %v2889, %v2889
        %v2954 = vpack.c.b16 %v2890, %v2890
        %v2955 = vpack.c.b16 %v2891, %v2891
        %v2956 = vpack.c.b16 %v2892, %v2892
        %v2957 = vpack.c.b16 %v2893, %v2893
        %v2958 = vpack.c.b16 %v2894, %v2894
        %v2959 = vpack.c.b16 %v2895, %v2895
        %v2960 = vpack.c.b16 %v2896, %v2896
        %v2961 = vpack.c.b16 %v2897, %v2897
        %v2962 = vpack.c.b16 %v2898, %v2898
        %v2963 = vpack.c.b16 %v2899, %v2899
        %v2964 = vpack.c.b16 %v2900, %v2900
        %v2965 = vpack.c.b16 %v2901, %v2901
        %v2966 = vpack.c.b16 %v2902, %v2902
        %v2967 = vpack.c.b16 %v2903, %v2903
        %v2968 = vpack.c.b16 %v2904, %v2904
        %v2969 = vpack.c.b16 %v2905, %v2905
        %v2970 = vpack.c.b16 %v2906, %v2906
        %v2971 = vpack.c.b16 %v2907, %v2907
        %v2972 = vpack.c.b16 %v2908, %v2908
        %v2973 = vpack.c.b16 %v2909, %v2909
        %v2974 = vpack.c.b16 %v2910, %v2910
        %v2975 = vpack.c.b16 %v2911, %v2911
        %v2976 = vpack.c.b16 %v2912, %v2912
        %v2977 = vpack.c.b16 %v2913, %v2913
        %v2978 = vpack.c.b16 %v2914, %v2914
        %v2979 = vpack.c.b16 %v2915, %v2915
        %v2980 = vpack.c.b16 %v2916, %v2916
        %v2981 = vpack.c.b16 %v2917, %v2917
        %v2982 = vpack.c.b16 %v2918, %v2918
        %v2983 = vpack.c.b16 %v2919, %v2919
        %v2984 = vpack.c.b16 %v2920, %v2920
        %v2985 = vpack.c.b16 %v2921, %v2921
        %v2986 = vpack.c.b16 %v2922, %v2922
        %v2987 = vpack.c.b16 %v2923, %v2923
        %v2988 = vpack.c.b16 %v2924, %v2924
        %v2989 = vpack.c.b16 %v2925, %v2925
        %v2990 = vpack.c.b16 %v2926, %v2926
        %v2991 = vpack.c.b16 %v2927, %v2927
        %v2992 = vpack.c.b16 %v2928, %v2928
        %v2993 = vpack.c.b16 %v2929, %v2929
        %v2994 = vpack.c.b16 %v2930, %v2930
        %v2995 = vpack.c.b16 %v2931, %v2931
        %v2996 = vpack.c.b16 %v2932, %v2932
        %v2997 = vpack.c.b16 %v2933, %v2933
        %v2998 = vpack.c.b16 %v2934, %v2934
        %v2999 = vpack.c.b16 %v2935, %v2935
        %v3000 = vpack.c.b16 %v2936, %v2936
        %v3001 = vpack.c.b16 %v2937, %v2937
        %v3002 = vpack.c.b16 %v2938, %v2938
        %v3003 = vpack.c.b16 %v2939, %v2939
        %v3004 = vpack.c.b16 %v2940, %v2940
        %3069 = vst [vmem:[%s349] sm:$0xf] %v2941
        %3070 = vst [vmem:[%s349 + $0x4] sm:$0xf] %v2942
        %3071 = vst [vmem:[%s349 + $0x8] sm:$0xf] %v2943
        %3072 = vst [vmem:[%s349 + $0xc] sm:$0xf] %v2944
        %3073 = vst [vmem:[%s349 + $0x10] sm:$0xf] %v2945
        %3074 = vst [vmem:[%s349 + $0x14] sm:$0xf] %v2946
        %3075 = vst [vmem:[%s349 + $0x18] sm:$0xf] %v2947
        %3076 = vst [vmem:[%s349 + $0x1c] sm:$0xf] %v2948
        %3077 = vst [vmem:[%s349 + $0x20] sm:$0xf] %v2949
        %3078 = vst [vmem:[%s349 + $0x24] sm:$0xf] %v2950
        %3079 = vst [vmem:[%s349 + $0x28] sm:$0xf] %v2951
        %3080 = vst [vmem:[%s349 + $0x2c] sm:$0xf] %v2952
        %3081 = vst [vmem:[%s349 + $0x30] sm:$0xf] %v2953
        %3082 = vst [vmem:[%s349 + $0x34] sm:$0xf] %v2954
        %3083 = vst [vmem:[%s349 + $0x38] sm:$0xf] %v2955
        %3084 = vst [vmem:[%s349 + $0x3c] sm:$0xf] %v2956
        %3085 = vst [vmem:[%s349 + $0x40] sm:$0xf] %v2957
        %3086 = vst [vmem:[%s349 + $0x44] sm:$0xf] %v2958
        %3087 = vst [vmem:[%s349 + $0x48] sm:$0xf] %v2959
        %3088 = vst [vmem:[%s349 + $0x4c] sm:$0xf] %v2960
        %3089 = vst [vmem:[%s349 + $0x50] sm:$0xf] %v2961
        %3090 = vst [vmem:[%s349 + $0x54] sm:$0xf] %v2962
        %3091 = vst [vmem:[%s349 + $0x58] sm:$0xf] %v2963
        %3092 = vst [vmem:[%s349 + $0x5c] sm:$0xf] %v2964
        %3093 = vst [vmem:[%s349 + $0x60] sm:$0xf] %v2965
        %3094 = vst [vmem:[%s349 + $0x64] sm:$0xf] %v2966
        %3095 = vst [vmem:[%s349 + $0x68] sm:$0xf] %v2967
        %3096 = vst [vmem:[%s349 + $0x6c] sm:$0xf] %v2968
        %3097 = vst [vmem:[%s349 + $0x70] sm:$0xf] %v2969
        %3098 = vst [vmem:[%s349 + $0x74] sm:$0xf] %v2970
        %3099 = vst [vmem:[%s349 + $0x78] sm:$0xf] %v2971
        %3100 = vst [vmem:[%s349 + $0x7c] sm:$0xf] %v2972
        %3101 = vst [vmem:[%s349 + $0x80] sm:$0xf] %v2973
        %3102 = vst [vmem:[%s349 + $0x84] sm:$0xf] %v2974
        %3103 = vst [vmem:[%s349 + $0x88] sm:$0xf] %v2975
        %3104 = vst [vmem:[%s349 + $0x8c] sm:$0xf] %v2976
        %3105 = vst [vmem:[%s349 + $0x90] sm:$0xf] %v2977
        %3106 = vst [vmem:[%s349 + $0x94] sm:$0xf] %v2978
        %3107 = vst [vmem:[%s349 + $0x98] sm:$0xf] %v2979
        %3108 = vst [vmem:[%s349 + $0x9c] sm:$0xf] %v2980
        %3109 = vst [vmem:[%s349 + $0xa0] sm:$0xf] %v2981
        %3110 = vst [vmem:[%s349 + $0xa4] sm:$0xf] %v2982
        %3111 = vst [vmem:[%s349 + $0xa8] sm:$0xf] %v2983
        %3112 = vst [vmem:[%s349 + $0xac] sm:$0xf] %v2984
        %3113 = vst [vmem:[%s349 + $0xb0] sm:$0xf] %v2985
        %3114 = vst [vmem:[%s349 + $0xb4] sm:$0xf] %v2986
        %3115 = vst [vmem:[%s349 + $0xb8] sm:$0xf] %v2987
        %3116 = vst [vmem:[%s349 + $0xbc] sm:$0xf] %v2988
        %3117 = vst [vmem:[%s349 + $0xc0] sm:$0xf] %v2989
        %3118 = vst [vmem:[%s349 + $0xc4] sm:$0xf] %v2990
        %3119 = vst [vmem:[%s349 + $0xc8] sm:$0xf] %v2991
        %3120 = vst [vmem:[%s349 + $0xcc] sm:$0xf] %v2992
        %3121 = vst [vmem:[%s349 + $0xd0] sm:$0xf] %v2993
        %3122 = vst [vmem:[%s349 + $0xd4] sm:$0xf] %v2994
        %3123 = vst [vmem:[%s349 + $0xd8] sm:$0xf] %v2995
        %3124 = vst [vmem:[%s349 + $0xdc] sm:$0xf] %v2996
        %3125 = vst [vmem:[%s349 + $0xe0] sm:$0xf] %v2997
        %3126 = vst [vmem:[%s349 + $0xe4] sm:$0xf] %v2998
        %3127 = vst [vmem:[%s349 + $0xe8] sm:$0xf] %v2999
        %3128 = vst [vmem:[%s349 + $0xec] sm:$0xf] %v3000
        %3129 = vst [vmem:[%s349 + $0xf0] sm:$0xf] %v3001
        %3130 = vst [vmem:[%s349 + $0xf4] sm:$0xf] %v3002
        %3131 = vst [vmem:[%s349 + $0xf8] sm:$0xf] %v3003
        %3132 = vst [vmem:[%s349 + $0xfc] sm:$0xf] %v3004
        %p3133 = scmp.lt.s32.totalorder %s23, 7
        %s3134 = scalar_select %p3133, %s23, 7
        %s3135 = smul.addr %s3134, 64
        %s3136 = smul.addr %s3135, 4
        %s3137 = scalar_lea.vmem %s7, %s3136
        // Predicated region
        $region53: #{fwd.3} parent=47 // pred_check
          %p3138 = pneg %p198
        $region54: #{fwd.3} parent=47 // pred_check_branch
          %3140 = sbr.rel (%p3138) target = $region56
        $region55: #{fwd.3} parent=47 // pred_region
          _
        $region56: #{fwd.3} parent=47 // pred_fallthru
          _
        // Predicated region
        $region57: #{fwd.3} parent=47 // pred_check
          %p3141 = pneg %p219
        $region58: #{fwd.3} parent=47 // pred_check_branch
          %3143 = sbr.rel (%p3141) target = $region60
        $region59: #{fwd.3} parent=47 // pred_region
          %s3145 = ssub.s32 8192, 8192
          %3146 = vsyncadd [#allocation3], %s3145
          %s3147 = sshll.u32 [#allocation2], 4
          %s3148 = int_to_ptr.vmem [resolvable:$true] %s3147
          %3153 = dma.vmem_to_hbm [thread:$0]  %s3148, 8192, %s8, [#allocation3], 128, 128, 8
        $region60: #{fwd.3} parent=47 // pred_fallthru
          _
        // Predicated region
        $region61: #{fwd.3} parent=47 // pred_check
          %p3154 = pneg %p240
        $region62: #{fwd.3} parent=47 // pred_check_branch
          %3156 = sbr.rel (%p3154) target = $region64
        $region63: #{fwd.3} parent=47 // pred_region
          %s3158 = ssub.s32 8192, 8192
          %3159 = vsyncadd [#allocation5], %s3158
          %s3160 = sshll.u32 [#allocation4], 4
          %s3161 = int_to_ptr.vmem [resolvable:$true] %s3160
          %3166 = dma.vmem_to_hbm [thread:$0]  %s3161, 8192, %s9, [#allocation5], 128, 128, 8
        $region64: #{fwd.3} parent=47 // pred_fallthru
          _
        // Predicated region
        $region65: #{fwd.3} parent=47 // pred_check
          %p3167 = pneg %p219
        $region66: #{fwd.3} parent=47 // pred_check_branch
          %3169 = sbr.rel (%p3167) target = $region68
        $region67: #{fwd.3} parent=47 // pred_region
          %3170 = dma.done [#allocation3], 8192
        $region68: #{fwd.3} parent=47 // pred_fallthru
          _
        // Predicated region
        $region69: #{fwd.3} parent=47 // pred_check
          %p3171 = pneg %p240
        $region70: #{fwd.3} parent=47 // pred_check_branch
          %3173 = sbr.rel (%p3171) target = $region72
        $region71: #{fwd.3} parent=47 // pred_region
          %3174 = dma.done [#allocation5], 8192
        $region72: #{fwd.3} parent=47 // pred_fallthru
          _
      $region48: #{fwd.3} parent=5 // pred_fallthru
        _
      %p3175 = scmp.le.s32.totalorder 2, %s18
      // Predicated region
      $region73: #{fwd.3} parent=5 // pred_check
        %p3176 = pneg %p3175
      $region74: #{fwd.3} parent=5 // pred_check_branch
        %3178 = sbr.rel (%p3176) target = $region76
      $region75: #{fwd.3} parent=5 // pred_region
        %s3179 = ssub.s32 %s18, 2
        // Predicated region
        $region77: #{fwd.3} parent=75 // pred_check
          %p3180 = pneg %p204
        $region78: #{fwd.3} parent=75 // pred_check_branch
          %3182 = sbr.rel (%p3180) target = $region80
        $region79: #{fwd.3} parent=75 // pred_region
          %p3183 = scmp.lt.s32.totalorder %s24, 7
          %s3184 = scalar_select %p3183, %s24, 7
          %s3185 = smul.addr %s3184, 64
          %s3186 = smul.addr %s3185, 4
          %s3187 = scalar_lea.vmem %s7, %s3186
        $region80: #{fwd.3} parent=75 // pred_fallthru
          _
      $region76: #{fwd.3} parent=5 // pred_fallthru
        _
    $region6: #{fwd.3} parent=1 // loop_footer
      %s22 = sadd.s32 1, %s18
    $region7: #{fwd.3} parent=1 // loop_footer_branch
      %17 = sbr.rel target = $region3
    $region8: #{fwd.3} parent=1 // loop_exit
      _
    %3188 = vsyncpa [#allocation3], 1
    %s3189 = scalar_lea.sflag [#allocation3], 1
    %3190 = vsyncpa %s3189, 1
    %3191 = vsyncpa [#allocation5], 1

</llo_original>
